<compile_context>
chip_gen: v6e
topology: v6e:2x2x1
jax: 0.10.0
libtpu: 0.0.40
codegen_flags: <defaults>
</compile_context>

<pallas_src>
import functools

import jax
import jax.numpy as jnp
from jax.experimental import pallas as pl

# ---------------- model config (small, consistent with the module) ----------
IMAGE_SIZE = 16
PATCH_SIZE = 4
CHANNELS = 3
NUM_CLASSES = 10
DIM = 64
DEPTH = 2
HEADS = 2
DIM_HEAD = 32
MLP_DIM = 128
POOL = "cls"          # 'cls' or 'mean'
BATCH = 2

NUM_PATCHES = (IMAGE_SIZE // PATCH_SIZE) * (IMAGE_SIZE // PATCH_SIZE)
PATCH_DIM = CHANNELS * PATCH_SIZE * PATCH_SIZE
PATCH_DIM_PAD = 128          # lane-aligned contraction dim for the patch matmul
HEAD_PAD = 128               # lane-dense classification-head output width
SEQ = NUM_PATCHES + 1
INNER = HEADS * DIM_HEAD
SCALE = DIM_HEAD ** (-0.5)
LN_EPS = 1e-5

# refs per transformer layer: ln1g, ln1b, wq, wk, wvo, bo, w1, b1, w2, b2
_LAYER_NREFS = 10


# ---------------- fused ViT kernel -------------------------------------------
def _make_vit_kernel(use_exact_gelu):
    bf = jnp.bfloat16
    f32 = jnp.float32

    def gelu(x):
        if use_exact_gelu:
            # exact GELU (matches PyTorch nn.GELU default)
            return 0.5 * x * (1.0 + jax.lax.erf(x * (2.0 ** -0.5)))
        # TODO(synk): erf lowering unavailable on this Mosaic build; tanh-approx
        # GELU differs slightly from PyTorch's exact-erf nn.GELU.
        return jax.nn.gelu(x, approximate=True)

    def layernorm(x, g, b):
        mu = jnp.mean(x, axis=-1, keepdims=True)
        xc = x - mu
        var = jnp.mean(jnp.square(xc), axis=-1, keepdims=True)
        return xc * jax.lax.rsqrt(var + LN_EPS) * g + b

    def norm_no_affine(x):
        # affine (gamma/beta) of this LayerNorm is folded into the following
        # matmul's weights/bias in the wrapper.
        mu = jnp.mean(x, axis=-1, keepdims=True)
        xc = x - mu
        var = jnp.mean(jnp.square(xc), axis=-1, keepdims=True)
        return xc * jax.lax.rsqrt(var + LN_EPS)

    def kernel(*refs):
        x0_ref, wp_ref, add0_ref, bias_ref, pool_ref = refs[:5]
        pos = 5
        layer_refs = []
        for _ in range(DEPTH):
            layer_refs.append(refs[pos:pos + _LAYER_NREFS])
            pos += _LAYER_NREFS
        wh_ref, bh_ref = refs[pos:pos + 2]
        out_ref = refs[pos + 2]

        # --- patch embedding + cls token + positional embedding ---
        # add0 already folds in: patch bias, cls token and pos-embedding.
        x = jnp.dot(x0_ref[...], wp_ref[...],
                    preferred_element_type=f32) + add0_ref[...]          # (BS, DIM) f32
        attn_bias = bias_ref[...]                                         # (BS, BS) f32

        # --- DEPTH transformer blocks, statically unrolled ---
        for (ln1g, ln1b, wq, wk, wvo, bo, w1, b1, w2, b2) in layer_refs:
            # pre-LN multi-head attention with batch-block-diagonal bias.
            xn = layernorm(x, ln1g[...], ln1b[...]).astype(bf)            # (BS, DIM)
            attn_out = bo[...]                                            # (1, DIM) broadcasts
            for h in range(HEADS):
                # attention scale is pre-folded into wq.
                q = jnp.dot(xn, wq[h], preferred_element_type=f32).astype(bf)   # (BS, DH)
                k = jnp.dot(xn, wk[h], preferred_element_type=f32).astype(bf)   # (BS, DH)
                # fused V + output projection: vo = xn @ (Wv_h @ Wo_h)
                vo = jnp.dot(xn, wvo[h], preferred_element_type=f32).astype(bf)  # (BS, DIM)
                dots = jax.lax.dot_general(
                    q, k, (((1,), (1,)), ((), ())),
                    preferred_element_type=f32) + attn_bias               # (BS, BS)
                dots = dots - jnp.max(dots, axis=-1, keepdims=True)
                e = jnp.exp(dots)
                prob = e * pl.reciprocal(jnp.sum(e, axis=-1, keepdims=True),
                                         approx=True)
                attn_out = attn_out + jnp.dot(prob.astype(bf), vo,
                                              preferred_element_type=f32)
            x = x + attn_out                                              # residual

            # pre-LN MLP (LN2 affine folded into w1/b1 in the wrapper).
            xn2 = norm_no_affine(x).astype(bf)
            h1 = jnp.dot(xn2, w1[...], preferred_element_type=f32) + b1[...]
            h1 = gelu(h1)
            x = x + jnp.dot(h1.astype(bf), w2[...],
                            preferred_element_type=f32) + b2[...]         # residual

        # --- final LayerNorm (affine folded into head), pooling, head ---
        zf = norm_no_affine(x).astype(bf)                                 # (BS, DIM)
        pooled = jnp.dot(pool_ref[...], zf, preferred_element_type=f32)   # (B, DIM)
        logits = jnp.dot(pooled.astype(bf), wh_ref[...],
                         preferred_element_type=f32) + bh_ref[...]        # (B, 128)
        out_ref[...] = logits.astype(out_ref.dtype)

    return kernel


# ---------------- plain-JAX glue ---------------------------------------------
def patchify(img):
    # einops: 'b c (h p1) (w p2) -> b (h w) (p1 p2 c)'
    B, C, H, W = img.shape
    p = PATCH_SIZE
    x = img.reshape(B, C, H // p, p, W // p, p)
    x = x.transpose(0, 2, 4, 3, 5, 1)                 # B, h, w, p1, p2, c
    return x.reshape(B, (H // p) * (W // p), p * p * C)


def init_params(key):
    ks = jax.random.split(key, 4 + DEPTH)
    params = {
        "w_patch": jax.random.normal(ks[0], (PATCH_DIM, DIM), jnp.float32) * 0.02,
        "b_patch": jnp.zeros((DIM,), jnp.float32),
        "pos_emb": jax.random.normal(ks[1], (1, SEQ, DIM), jnp.float32) * 0.02,
        "cls_token": jax.random.normal(ks[2], (1, 1, DIM), jnp.float32) * 0.02,
        "norm_g": jnp.ones((DIM,), jnp.float32),
        "norm_b": jnp.zeros((DIM,), jnp.float32),
        "w_head": jax.random.normal(ks[3], (DIM, NUM_CLASSES), jnp.float32) * 0.02,
        "b_head": jnp.zeros((NUM_CLASSES,), jnp.float32),
        "layers": [],
    }
    for d in range(DEPTH):
        lk = jax.random.split(ks[4 + d], 4)
        params["layers"].append({
            "ln1_g": jnp.ones((DIM,), jnp.float32),
            "ln1_b": jnp.zeros((DIM,), jnp.float32),
            "w_qkv": jax.random.normal(lk[0], (DIM, 3 * INNER), jnp.float32) * 0.02,
            "w_o": jax.random.normal(lk[1], (INNER, DIM), jnp.float32) * 0.02,
            "b_o": jnp.zeros((DIM,), jnp.float32),
            "ln2_g": jnp.ones((DIM,), jnp.float32),
            "ln2_b": jnp.zeros((DIM,), jnp.float32),
            "w_1": jax.random.normal(lk[2], (DIM, MLP_DIM), jnp.float32) * 0.02,
            "b_1": jnp.zeros((MLP_DIM,), jnp.float32),
            "w_2": jax.random.normal(lk[3], (MLP_DIM, DIM), jnp.float32) * 0.02,
            "b_2": jnp.zeros((DIM,), jnp.float32),
        })
    return params


def prepare_params(p, batch=BATCH):
    """One-time conversion of module-style weights into kernel-ready form:
    lane-padded, per-head-split, algebraically fused, bf16-cast (trace-time)."""
    bf = jnp.bfloat16
    bs = batch * SEQ

    # patch-embedding weight, zero-padded along the contraction dim to 128
    w_patch = jnp.zeros((PATCH_DIM_PAD, DIM), jnp.float32)
    w_patch = w_patch.at[:PATCH_DIM].set(p["w_patch"]).astype(bf)

    # additive term after the patch matmul: cls-token / patch-bias + pos-emb
    pos = p["pos_emb"][0]                                           # (SEQ, DIM)
    add_seq = jnp.concatenate(
        [p["cls_token"][0] + pos[:1],                               # cls row
         pos[1:] + p["b_patch"][None, :]], axis=0)                  # patch rows
    add0 = jnp.tile(add_seq, (batch, 1))                            # (BS, DIM)

    # block-diagonal attention bias: 0 within an image, -1e30 across images
    seg = jnp.repeat(jnp.arange(batch), SEQ)
    attn_bias = jnp.where(seg[:, None] == seg[None, :],
                          0.0, -1e30).astype(jnp.float32)           # (BS, BS)

    # pooling as a (B, BS) matmul: cls-token selector or per-image mean
    member = jnp.arange(batch)[:, None] == seg[None, :]
    if POOL == "mean":
        pool_mat = jnp.where(member, 1.0 / SEQ, 0.0)
    else:
        pool_mat = jnp.zeros((batch, bs), jnp.float32)
        pool_mat = pool_mat.at[jnp.arange(batch),
                               jnp.arange(batch) * SEQ].set(1.0)
    pool_mat = pool_mat.astype(bf)

    layers = []
    for lp in p["layers"]:
        wqkv = lp["w_qkv"]
        wq_full = wqkv[:, :INNER] * SCALE            # fold attention scale into Wq
        wk_full = wqkv[:, INNER:2 * INNER]
        wv_full = wqkv[:, 2 * INNER:]
        wq = jnp.stack([wq_full[:, h * DIM_HEAD:(h + 1) * DIM_HEAD]
                        for h in range(HEADS)]).astype(bf)          # (H, DIM, DH)
        wk = jnp.stack([wk_full[:, h * DIM_HEAD:(h + 1) * DIM_HEAD]
                        for h in range(HEADS)]).astype(bf)          # (H, DIM, DH)
        # fuse V-projection with output-projection per head: Wvo_h = Wv_h @ Wo_h
        wvo = jnp.stack([
            wv_full[:, h * DIM_HEAD:(h + 1) * DIM_HEAD]
            @ lp["w_o"][h * DIM_HEAD:(h + 1) * DIM_HEAD, :]
            for h in range(HEADS)]).astype(bf)                      # (H, DIM, DIM)
        # fold the MLP pre-norm (LN2) affine into the first MLP matmul
        w1 = (lp["ln2_g"][:, None] * lp["w_1"]).astype(bf)
        b1 = (lp["ln2_b"] @ lp["w_1"] + lp["b_1"]).reshape(1, MLP_DIM)
        layers.append((
            lp["ln1_g"].reshape(1, DIM), lp["ln1_b"].reshape(1, DIM),
            wq, wk, wvo, lp["b_o"].reshape(1, DIM),
            w1, b1, lp["w_2"].astype(bf), lp["b_2"].reshape(1, DIM),
        ))

    # fold the final LayerNorm affine into the classification head, then make
    # it lane-dense (pad NUM_CLASSES -> 128 output lanes).
    # TODO(synk): source `mlp_head = nn.Sequential(dim, num_classes)` is invalid
    # PyTorch; implemented as the clearly-intended nn.Linear(dim, num_classes).
    w_head_f = p["norm_g"][:, None] * p["w_head"]                   # (DIM, NUM_CLASSES)
    b_head_f = p["norm_b"] @ p["w_head"] + p["b_head"]              # (NUM_CLASSES,)
    w_head = jnp.zeros((DIM, HEAD_PAD), jnp.float32)
    w_head = w_head.at[:, :NUM_CLASSES].set(w_head_f).astype(bf)
    b_head = jnp.zeros((1, HEAD_PAD), jnp.float32)
    b_head = b_head.at[:, :NUM_CLASSES].set(b_head_f)

    return {
        "w_patch": w_patch, "add0": add0, "attn_bias": attn_bias,
        "pool_mat": pool_mat, "layers": layers,
        "w_head": w_head, "b_head": b_head,
    }


def vit_forward(kp, img, use_exact_gelu=True):
    b = img.shape[0]
    bs = b * SEQ
    # patch extraction (Rearrange); dropout layers are no-ops at inference
    patches = patchify(img)                                         # (B, NP, PATCH_DIM)
    patches = jnp.pad(patches, ((0, 0), (0, 0), (0, PATCH_DIM_PAD - PATCH_DIM)))
    # a zero row per image in the cls-token slot; its embedding comes from add0
    x0 = jnp.concatenate(
        [jnp.zeros((b, 1, PATCH_DIM_PAD), patches.dtype), patches], axis=1)
    x0 = x0.reshape(bs, PATCH_DIM_PAD).astype(jnp.bfloat16)         # (BS, 128)

    inputs = [x0, kp["w_patch"], kp["add0"], kp["attn_bias"], kp["pool_mat"]]
    for layer in kp["layers"]:
        inputs.extend(layer)
    inputs += [kp["w_head"], kp["b_head"]]

    out = pl.pallas_call(
        _make_vit_kernel(use_exact_gelu),
        out_shape=jax.ShapeDtypeStruct((b, HEAD_PAD), jnp.float32),
    )(*inputs)
    return out[:, :NUM_CLASSES]


def _probe_erf():
    """Check whether lax.erf has a Mosaic lowering on this build."""
    try:
        def k(x_ref, o_ref):
            o_ref[...] = jax.lax.erf(x_ref[...])
        x = jnp.zeros((8, 128), jnp.float32)
        jax.block_until_ready(
            pl.pallas_call(k, out_shape=jax.ShapeDtypeStruct((8, 128), jnp.float32))(x))
        return True
    except Exception:
        return False


if __name__ == "__main__":
    use_exact_gelu = _probe_erf()

    key = jax.random.PRNGKey(0)
    k_param, k_img = jax.random.split(key)
    params = init_params(k_param)
    img = jax.random.normal(k_img, (BATCH, CHANNELS, IMAGE_SIZE, IMAGE_SIZE),
                            jnp.float32)

    kernel_params = prepare_params(params, BATCH)
    fwd = jax.jit(functools.partial(vit_forward, use_exact_gelu=use_exact_gelu))
    logits = fwd(kernel_params, img)
    jax.block_until_ready(logits)
    assert logits.shape == (BATCH, NUM_CLASSES)
    print("KERNEL_OK")
</pallas_src>

<mosaic_0001>
module attributes {stable_mosaic.version = 11 : i64} {
  func.func @k(%arg0: memref<8x128xf32, #tpu.memory_space<vmem>>, %arg1: memref<8x128xf32, #tpu.memory_space<vmem>>) attributes {dimension_semantics = [], scalar_prefetch = 0 : i64, scratch_operands = 0 : i64, tpu.core_type = #tpu.core_type<tc>} {
    %c0 = arith.constant 0 : index
    %c0_0 = arith.constant 0 : index
    %0 = vector.load %arg0[%c0, %c0_0] : memref<8x128xf32, #tpu.memory_space<vmem>>, vector<8x128xf32>
    %1 = math.erf %0 : vector<8x128xf32>
    %c0_1 = arith.constant 0 : index
    %c0_2 = arith.constant 0 : index
    %2 = vector.load %arg1[%c0_1, %c0_2] : memref<8x128xf32, #tpu.memory_space<vmem>>, vector<8x128xf32>
    tpu.vector_store %arg1[%c0_1, %c0_2], %1 {strides = array<i32>} : memref<8x128xf32, #tpu.memory_space<vmem>>, vector<8x128xf32>,
    return
  }
}

module attributes {stable_mosaic.version = 11 : i64} {
  func.func @kernel(%arg0: memref<34x128xbf16, #tpu.memory_space<vmem>>, %arg1: memref<128x64xbf16, #tpu.memory_space<vmem>>, %arg2: memref<34x64xf32, #tpu.memory_space<vmem>>, %arg3: memref<34x34xf32, #tpu.memory_space<vmem>>, %arg4: memref<2x34xbf16, #tpu.memory_space<vmem>>, %arg5: memref<1x64xf32, #tpu.memory_space<vmem>>, %arg6: memref<1x64xf32, #tpu.memory_space<vmem>>, %arg7: memref<2x64x32xbf16, #tpu.memory_space<vmem>>, %arg8: memref<2x64x32xbf16, #tpu.memory_space<vmem>>, %arg9: memref<2x64x64xbf16, #tpu.memory_space<vmem>>, %arg10: memref<1x64xf32, #tpu.memory_space<vmem>>, %arg11: memref<64x128xbf16, #tpu.memory_space<vmem>>, %arg12: memref<1x128xf32, #tpu.memory_space<vmem>>, %arg13: memref<128x64xbf16, #tpu.memory_space<vmem>>, %arg14: memref<1x64xf32, #tpu.memory_space<vmem>>, %arg15: memref<1x64xf32, #tpu.memory_space<vmem>>, %arg16: memref<1x64xf32, #tpu.memory_space<vmem>>, %arg17: memref<2x64x32xbf16, #tpu.memory_space<vmem>>, %arg18: memref<2x64x32xbf16, #tpu.memory_space<vmem>>, %arg19: memref<2x64x64xbf16, #tpu.memory_space<vmem>>, %arg20: memref<1x64xf32, #tpu.memory_space<vmem>>, %arg21: memref<64x128xbf16, #tpu.memory_space<vmem>>, %arg22: memref<1x128xf32, #tpu.memory_space<vmem>>, %arg23: memref<128x64xbf16, #tpu.memory_space<vmem>>, %arg24: memref<1x64xf32, #tpu.memory_space<vmem>>, %arg25: memref<64x128xbf16, #tpu.memory_space<vmem>>, %arg26: memref<1x128xf32, #tpu.memory_space<vmem>>, %arg27: memref<2x128xf32, #tpu.memory_space<vmem>>) attributes {dimension_semantics = [], scalar_prefetch = 0 : i64, scratch_operands = 0 : i64, tpu.core_type = #tpu.core_type<tc>} {
    %c0 = arith.constant 0 : index
    %c0_0 = arith.constant 0 : index
    %0 = vector.load %arg0[%c0, %c0_0] : memref<34x128xbf16, #tpu.memory_space<vmem>>, vector<34x128xbf16>
    %c0_1 = arith.constant 0 : index
    %c0_2 = arith.constant 0 : index
    %1 = vector.load %arg1[%c0_1, %c0_2] : memref<128x64xbf16, #tpu.memory_space<vmem>>, vector<128x64xbf16>
    %cst = arith.constant dense<0.000000e+00> : vector<34x64xf32>
    %2 = tpu.matmul %0, %1, %cst {dimension_numbers = #tpu.dot_dimension_numbers<[1], [0], [0], [1], [0, 0, 1, 1], [], []>} : vector<34x128xbf16>, vector<128x64xbf16>, vector<34x64xf32> -> vector<34x64xf32>
    %c0_3 = arith.constant 0 : index
    %c0_4 = arith.constant 0 : index
    %3 = vector.load %arg2[%c0_3, %c0_4] : memref<34x64xf32, #tpu.memory_space<vmem>>, vector<34x64xf32>
    %4 = arith.addf %2, %3 : vector<34x64xf32>
    %c0_5 = arith.constant 0 : index
    %c0_6 = arith.constant 0 : index
    %5 = vector.load %arg3[%c0_5, %c0_6] : memref<34x34xf32, #tpu.memory_space<vmem>>, vector<34x34xf32>
    %c0_7 = arith.constant 0 : index
    %c0_8 = arith.constant 0 : index
    %6 = vector.load %arg5[%c0_7, %c0_8] : memref<1x64xf32, #tpu.memory_space<vmem>>, vector<1x64xf32>
    %c0_9 = arith.constant 0 : index
    %c0_10 = arith.constant 0 : index
    %7 = vector.load %arg6[%c0_9, %c0_10] : memref<1x64xf32, #tpu.memory_space<vmem>>, vector<1x64xf32>
    %cst_11 = arith.constant dense<0.000000e+00> : vector<34xf32>
    %8 = vector.multi_reduction <add>, %4, %cst_11 [1] : vector<34x64xf32> to vector<34xf32>
    %9 = vector.shape_cast %8 : vector<34xf32> to vector<34x1xf32>
    %cst_12 = arith.constant 6.400000e+01 : f32
    %10 = vector.broadcast %cst_12 : f32 to vector<34x1xf32>
    %11 = arith.divf %9, %10 : vector<34x1xf32>
    %12 = vector.broadcast %11 : vector<34x1xf32> to vector<34x64xf32>
    %13 = arith.subf %4, %12 : vector<34x64xf32>
    %14 = arith.mulf %13, %13 : vector<34x64xf32>
    %cst_13 = arith.constant dense<0.000000e+00> : vector<34xf32>
    %15 = vector.multi_reduction <add>, %14, %cst_13 [1] : vector<34x64xf32> to vector<34xf32>
    %16 = vector.shape_cast %15 : vector<34xf32> to vector<34x1xf32>
    %cst_14 = arith.constant 6.400000e+01 : f32
    %17 = vector.broadcast %cst_14 : f32 to vector<34x1xf32>
    %18 = arith.divf %16, %17 : vector<34x1xf32>
    %cst_15 = arith.constant 9.99999974E-6 : f32
    %19 = vector.broadcast %cst_15 : f32 to vector<34x1xf32>
    %20 = arith.addf %18, %19 : vector<34x1xf32>
    %21 = math.rsqrt %20 : vector<34x1xf32>
    %22 = vector.broadcast %21 : vector<34x1xf32> to vector<34x64xf32>
    %23 = arith.mulf %13, %22 : vector<34x64xf32>
    %24 = vector.broadcast %6 : vector<1x64xf32> to vector<34x64xf32>
    %25 = arith.mulf %23, %24 : vector<34x64xf32>
    %26 = vector.broadcast %7 : vector<1x64xf32> to vector<34x64xf32>
    %27 = arith.addf %25, %26 : vector<34x64xf32>
    %28 = arith.truncf %27 : vector<34x64xf32> to vector<34x64xbf16>
    %c0_16 = arith.constant 0 : index
    %c0_17 = arith.constant 0 : index
    %29 = vector.load %arg10[%c0_16, %c0_17] : memref<1x64xf32, #tpu.memory_space<vmem>>, vector<1x64xf32>
    %c0_18 = arith.constant 0 : index
    %c0_19 = arith.constant 0 : index
    %c0_20 = arith.constant 0 : index
    %30 = vector.load %arg7[%c0_18, %c0_19, %c0_20] : memref<2x64x32xbf16, #tpu.memory_space<vmem>>, vector<1x64x32xbf16>
    %31 = vector.shape_cast %30 : vector<1x64x32xbf16> to vector<64x32xbf16>
    %cst_21 = arith.constant dense<0.000000e+00> : vector<34x32xf32>
    %32 = tpu.matmul %28, %31, %cst_21 {dimension_numbers = #tpu.dot_dimension_numbers<[1], [0], [0], [1], [0, 0, 1, 1], [], []>} : vector<34x64xbf16>, vector<64x32xbf16>, vector<34x32xf32> -> vector<34x32xf32>
    %33 = arith.truncf %32 : vector<34x32xf32> to vector<34x32xbf16>
    %c0_22 = arith.constant 0 : index
    %c0_23 = arith.constant 0 : index
    %c0_24 = arith.constant 0 : index
    %34 = vector.load %arg8[%c0_22, %c0_23, %c0_24] : memref<2x64x32xbf16, #tpu.memory_space<vmem>>, vector<1x64x32xbf16>
    %35 = vector.shape_cast %34 : vector<1x64x32xbf16> to vector<64x32xbf16>
    %cst_25 = arith.constant dense<0.000000e+00> : vector<34x32xf32>
    %36 = tpu.matmul %28, %35, %cst_25 {dimension_numbers = #tpu.dot_dimension_numbers<[1], [0], [0], [1], [0, 0, 1, 1], [], []>} : vector<34x64xbf16>, vector<64x32xbf16>, vector<34x32xf32> -> vector<34x32xf32>
    %37 = arith.truncf %36 : vector<34x32xf32> to vector<34x32xbf16>
    %c0_26 = arith.constant 0 : index
    %c0_27 = arith.constant 0 : index
    %c0_28 = arith.constant 0 : index
    %38 = vector.load %arg9[%c0_26, %c0_27, %c0_28] : memref<2x64x64xbf16, #tpu.memory_space<vmem>>, vector<1x64x64xbf16>
    %39 = vector.shape_cast %38 : vector<1x64x64xbf16> to vector<64x64xbf16>
    %cst_29 = arith.constant dense<0.000000e+00> : vector<34x64xf32>
    %40 = tpu.matmul %28, %39, %cst_29 {dimension_numbers = #tpu.dot_dimension_numbers<[1], [0], [0], [1], [0, 0, 1, 1], [], []>} : vector<34x64xbf16>, vector<64x64xbf16>, vector<34x64xf32> -> vector<34x64xf32>
    %41 = arith.truncf %40 : vector<34x64xf32> to vector<34x64xbf16>
    %cst_30 = arith.constant dense<0.000000e+00> : vector<34x34xf32>
    %42 = tpu.matmul %33, %37, %cst_30 {dimension_numbers = #tpu.dot_dimension_numbers<[1], [1], [0], [0], [0, 0, 1, 0], [], []>} : vector<34x32xbf16>, vector<34x32xbf16>, vector<34x34xf32> -> vector<34x34xf32>
    %43 = arith.addf %42, %5 : vector<34x34xf32>
    %cst_31 = arith.constant dense<0xFF800000> : vector<34xf32>
    %44 = vector.multi_reduction <maximumf>, %43, %cst_31 [1] : vector<34x34xf32> to vector<34xf32>
    %45 = vector.shape_cast %44 : vector<34xf32> to vector<34x1xf32>
    %46 = vector.broadcast %45 : vector<34x1xf32> to vector<34x34xf32>
    %47 = arith.subf %43, %46 : vector<34x34xf32>
    %48 = math.exp %47 : vector<34x34xf32>
    %cst_32 = arith.constant dense<0.000000e+00> : vector<34xf32>
    %49 = vector.multi_reduction <add>, %48, %cst_32 [1] : vector<34x34xf32> to vector<34xf32>
    %50 = vector.shape_cast %49 : vector<34xf32> to vector<34x1xf32>
    %51 = tpu.reciprocal %50 {approx = true} : vector<34x1xf32> -> vector<34x1xf32>
    %52 = vector.broadcast %51 : vector<34x1xf32> to vector<34x34xf32>
    %53 = arith.mulf %48, %52 : vector<34x34xf32>
    %54 = arith.truncf %53 : vector<34x34xf32> to vector<34x34xbf16>
    %cst_33 = arith.constant dense<0.000000e+00> : vector<34x64xf32>
    %55 = tpu.matmul %54, %41, %cst_33 {dimension_numbers = #tpu.dot_dimension_numbers<[1], [0], [0], [1], [0, 0, 1, 1], [], []>} : vector<34x34xbf16>, vector<34x64xbf16>, vector<34x64xf32> -> vector<34x64xf32>
    %56 = vector.broadcast %29 : vector<1x64xf32> to vector<34x64xf32>
    %57 = arith.addf %56, %55 : vector<34x64xf32>
    %c1 = arith.constant 1 : index
    %c0_34 = arith.constant 0 : index
    %c0_35 = arith.constant 0 : index
    %58 = vector.load %arg7[%c1, %c0_34, %c0_35] : memref<2x64x32xbf16, #tpu.memory_space<vmem>>, vector<1x64x32xbf16>
    %59 = vector.shape_cast %58 : vector<1x64x32xbf16> to vector<64x32xbf16>
    %cst_36 = arith.constant dense<0.000000e+00> : vector<34x32xf32>
    %60 = tpu.matmul %28, %59, %cst_36 {dimension_numbers = #tpu.dot_dimension_numbers<[1], [0], [0], [1], [0, 0, 1, 1], [], []>} : vector<34x64xbf16>, vector<64x32xbf16>, vector<34x32xf32> -> vector<34x32xf32>
    %61 = arith.truncf %60 : vector<34x32xf32> to vector<34x32xbf16>
    %c1_37 = arith.constant 1 : index
    %c0_38 = arith.constant 0 : index
    %c0_39 = arith.constant 0 : index
    %62 = vector.load %arg8[%c1_37, %c0_38, %c0_39] : memref<2x64x32xbf16, #tpu.memory_space<vmem>>, vector<1x64x32xbf16>
    %63 = vector.shape_cast %62 : vector<1x64x32xbf16> to vector<64x32xbf16>
    %cst_40 = arith.constant dense<0.000000e+00> : vector<34x32xf32>
    %64 = tpu.matmul %28, %63, %cst_40 {dimension_numbers = #tpu.dot_dimension_numbers<[1], [0], [0], [1], [0, 0, 1, 1], [], []>} : vector<34x64xbf16>, vector<64x32xbf16>, vector<34x32xf32> -> vector<34x32xf32>
    %65 = arith.truncf %64 : vector<34x32xf32> to vector<34x32xbf16>
    %c1_41 = arith.constant 1 : index
    %c0_42 = arith.constant 0 : index
    %c0_43 = arith.constant 0 : index
    %66 = vector.load %arg9[%c1_41, %c0_42, %c0_43] : memref<2x64x64xbf16, #tpu.memory_space<vmem>>, vector<1x64x64xbf16>
    %67 = vector.shape_cast %66 : vector<1x64x64xbf16> to vector<64x64xbf16>
    %cst_44 = arith.constant dense<0.000000e+00> : vector<34x64xf32>
    %68 = tpu.matmul %28, %67, %cst_44 {dimension_numbers = #tpu.dot_dimension_numbers<[1], [0], [0], [1], [0, 0, 1, 1], [], []>} : vector<34x64xbf16>, vector<64x64xbf16>, vector<34x64xf32> -> vector<34x64xf32>
    %69 = arith.truncf %68 : vector<34x64xf32> to vector<34x64xbf16>
    %cst_45 = arith.constant dense<0.000000e+00> : vector<34x34xf32>
    %70 = tpu.matmul %61, %65, %cst_45 {dimension_numbers = #tpu.dot_dimension_numbers<[1], [1], [0], [0], [0, 0, 1, 0], [], []>} : vector<34x32xbf16>, vector<34x32xbf16>, vector<34x34xf32> -> vector<34x34xf32>
    %71 = arith.addf %70, %5 : vector<34x34xf32>
    %cst_46 = arith.constant dense<0xFF800000> : vector<34xf32>
    %72 = vector.multi_reduction <maximumf>, %71, %cst_46 [1] : vector<34x34xf32> to vector<34xf32>
    %73 = vector.shape_cast %72 : vector<34xf32> to vector<34x1xf32>
    %74 = vector.broadcast %73 : vector<34x1xf32> to vector<34x34xf32>
    %75 = arith.subf %71, %74 : vector<34x34xf32>
    %76 = math.exp %75 : vector<34x34xf32>
    %cst_47 = arith.constant dense<0.000000e+00> : vector<34xf32>
    %77 = vector.multi_reduction <add>, %76, %cst_47 [1] : vector<34x34xf32> to vector<34xf32>
    %78 = vector.shape_cast %77 : vector<34xf32> to vector<34x1xf32>
    %79 = tpu.reciprocal %78 {approx = true} : vector<34x1xf32> -> vector<34x1xf32>
    %80 = vector.broadcast %79 : vector<34x1xf32> to vector<34x34xf32>
    %81 = arith.mulf %76, %80 : vector<34x34xf32>
    %82 = arith.truncf %81 : vector<34x34xf32> to vector<34x34xbf16>
    %cst_48 = arith.constant dense<0.000000e+00> : vector<34x64xf32>
    %83 = tpu.matmul %82, %69, %cst_48 {dimension_numbers = #tpu.dot_dimension_numbers<[1], [0], [0], [1], [0, 0, 1, 1], [], []>} : vector<34x34xbf16>, vector<34x64xbf16>, vector<34x64xf32> -> vector<34x64xf32>
    %84 = arith.addf %57, %83 : vector<34x64xf32>
    %85 = arith.addf %4, %84 : vector<34x64xf32>
    %cst_49 = arith.constant dense<0.000000e+00> : vector<34xf32>
    %86 = vector.multi_reduction <add>, %85, %cst_49 [1] : vector<34x64xf32> to vector<34xf32>
    %87 = vector.shape_cast %86 : vector<34xf32> to vector<34x1xf32>
    %cst_50 = arith.constant 6.400000e+01 : f32
    %88 = vector.broadcast %cst_50 : f32 to vector<34x1xf32>
    %89 = arith.divf %87, %88 : vector<34x1xf32>
    %90 = vector.broadcast %89 : vector<34x1xf32> to vector<34x64xf32>
    %91 = arith.subf %85, %90 : vector<34x64xf32>
    %92 = arith.mulf %91, %91 : vector<34x64xf32>
    %cst_51 = arith.constant dense<0.000000e+00> : vector<34xf32>
    %93 = vector.multi_reduction <add>, %92, %cst_51 [1] : vector<34x64xf32> to vector<34xf32>
    %94 = vector.shape_cast %93 : vector<34xf32> to vector<34x1xf32>
    %cst_52 = arith.constant 6.400000e+01 : f32
    %95 = vector.broadcast %cst_52 : f32 to vector<34x1xf32>
    %96 = arith.divf %94, %95 : vector<34x1xf32>
    %cst_53 = arith.constant 9.99999974E-6 : f32
    %97 = vector.broadcast %cst_53 : f32 to vector<34x1xf32>
    %98 = arith.addf %96, %97 : vector<34x1xf32>
    %99 = math.rsqrt %98 : vector<34x1xf32>
    %100 = vector.broadcast %99 : vector<34x1xf32> to vector<34x64xf32>
    %101 = arith.mulf %91, %100 : vector<34x64xf32>
    %102 = arith.truncf %101 : vector<34x64xf32> to vector<34x64xbf16>
    %c0_54 = arith.constant 0 : index
    %c0_55 = arith.constant 0 : index
    %103 = vector.load %arg11[%c0_54, %c0_55] : memref<64x128xbf16, #tpu.memory_space<vmem>>, vector<64x128xbf16>
    %cst_56 = arith.constant dense<0.000000e+00> : vector<34x128xf32>
    %104 = tpu.matmul %102, %103, %cst_56 {dimension_numbers = #tpu.dot_dimension_numbers<[1], [0], [0], [1], [0, 0, 1, 1], [], []>} : vector<34x64xbf16>, vector<64x128xbf16>, vector<34x128xf32> -> vector<34x128xf32>
    %c0_57 = arith.constant 0 : index
    %c0_58 = arith.constant 0 : index
    %105 = vector.load %arg12[%c0_57, %c0_58] : memref<1x128xf32, #tpu.memory_space<vmem>>, vector<1x128xf32>
    %106 = vector.broadcast %105 : vector<1x128xf32> to vector<34x128xf32>
    %107 = arith.addf %104, %106 : vector<34x128xf32>
    %108 = arith.mulf %107, %107 : vector<34x128xf32>
    %109 = arith.mulf %107, %108 : vector<34x128xf32>
    %cst_59 = arith.constant 4.471500e-02 : f32
    %110 = vector.broadcast %cst_59 : f32 to vector<34x128xf32>
    %111 = arith.mulf %110, %109 : vector<34x128xf32>
    %112 = arith.addf %107, %111 : vector<34x128xf32>
    %cst_60 = arith.constant 0.797884583 : f32
    %113 = vector.broadcast %cst_60 : f32 to vector<34x128xf32>
    %114 = arith.mulf %113, %112 : vector<34x128xf32>
    %115 = math.tanh %114 : vector<34x128xf32>
    %cst_61 = arith.constant 1.000000e+00 : f32
    %116 = vector.broadcast %cst_61 : f32 to vector<34x128xf32>
    %117 = arith.addf %116, %115 : vector<34x128xf32>
    %cst_62 = arith.constant 5.000000e-01 : f32
    %118 = vector.broadcast %cst_62 : f32 to vector<34x128xf32>
    %119 = arith.mulf %118, %117 : vector<34x128xf32>
    %120 = arith.mulf %107, %119 : vector<34x128xf32>
    %121 = arith.truncf %120 : vector<34x128xf32> to vector<34x128xbf16>
    %c0_63 = arith.constant 0 : index
    %c0_64 = arith.constant 0 : index
    %122 = vector.load %arg13[%c0_63, %c0_64] : memref<128x64xbf16, #tpu.memory_space<vmem>>, vector<128x64xbf16>
    %cst_65 = arith.constant dense<0.000000e+00> : vector<34x64xf32>
    %123 = tpu.matmul %121, %122, %cst_65 {dimension_numbers = #tpu.dot_dimension_numbers<[1], [0], [0], [1], [0, 0, 1, 1], [], []>} : vector<34x128xbf16>, vector<128x64xbf16>, vector<34x64xf32> -> vector<34x64xf32>
    %124 = arith.addf %85, %123 : vector<34x64xf32>
    %c0_66 = arith.constant 0 : index
    %c0_67 = arith.constant 0 : index
    %125 = vector.load %arg14[%c0_66, %c0_67] : memref<1x64xf32, #tpu.memory_space<vmem>>, vector<1x64xf32>
    %126 = vector.broadcast %125 : vector<1x64xf32> to vector<34x64xf32>
    %127 = arith.addf %124, %126 : vector<34x64xf32>
    %c0_68 = arith.constant 0 : index
    %c0_69 = arith.constant 0 : index
    %128 = vector.load %arg15[%c0_68, %c0_69] : memref<1x64xf32, #tpu.memory_space<vmem>>, vector<1x64xf32>
    %c0_70 = arith.constant 0 : index
    %c0_71 = arith.constant 0 : index
    %129 = vector.load %arg16[%c0_70, %c0_71] : memref<1x64xf32, #tpu.memory_space<vmem>>, vector<1x64xf32>
    %cst_72 = arith.constant dense<0.000000e+00> : vector<34xf32>
    %130 = vector.multi_reduction <add>, %127, %cst_72 [1] : vector<34x64xf32> to vector<34xf32>
    %131 = vector.shape_cast %130 : vector<34xf32> to vector<34x1xf32>
    %cst_73 = arith.constant 6.400000e+01 : f32
    %132 = vector.broadcast %cst_73 : f32 to vector<34x1xf32>
    %133 = arith.divf %131, %132 : vector<34x1xf32>
    %134 = vector.broadcast %133 : vector<34x1xf32> to vector<34x64xf32>
    %135 = arith.subf %127, %134 : vector<34x64xf32>
    %136 = arith.mulf %135, %135 : vector<34x64xf32>
    %cst_74 = arith.constant dense<0.000000e+00> : vector<34xf32>
    %137 = vector.multi_reduction <add>, %136, %cst_74 [1] : vector<34x64xf32> to vector<34xf32>
    %138 = vector.shape_cast %137 : vector<34xf32> to vector<34x1xf32>
    %cst_75 = arith.constant 6.400000e+01 : f32
    %139 = vector.broadcast %cst_75 : f32 to vector<34x1xf32>
    %140 = arith.divf %138, %139 : vector<34x1xf32>
    %cst_76 = arith.constant 9.99999974E-6 : f32
    %141 = vector.broadcast %cst_76 : f32 to vector<34x1xf32>
    %142 = arith.addf %140, %141 : vector<34x1xf32>
    %143 = math.rsqrt %142 : vector<34x1xf32>
    %144 = vector.broadcast %143 : vector<34x1xf32> to vector<34x64xf32>
    %145 = arith.mulf %135, %144 : vector<34x64xf32>
    %146 = vector.broadcast %128 : vector<1x64xf32> to vector<34x64xf32>
    %147 = arith.mulf %145, %146 : vector<34x64xf32>
    %148 = vector.broadcast %129 : vector<1x64xf32> to vector<34x64xf32>
    %149 = arith.addf %147, %148 : vector<34x64xf32>
    %150 = arith.truncf %149 : vector<34x64xf32> to vector<34x64xbf16>
    %c0_77 = arith.constant 0 : index
    %c0_78 = arith.constant 0 : index
    %151 = vector.load %arg20[%c0_77, %c0_78] : memref<1x64xf32, #tpu.memory_space<vmem>>, vector<1x64xf32>
    %c0_79 = arith.constant 0 : index
    %c0_80 = arith.constant 0 : index
    %c0_81 = arith.constant 0 : index
    %152 = vector.load %arg17[%c0_79, %c0_80, %c0_81] : memref<2x64x32xbf16, #tpu.memory_space<vmem>>, vector<1x64x32xbf16>
    %153 = vector.shape_cast %152 : vector<1x64x32xbf16> to vector<64x32xbf16>
    %cst_82 = arith.constant dense<0.000000e+00> : vector<34x32xf32>
    %154 = tpu.matmul %150, %153, %cst_82 {dimension_numbers = #tpu.dot_dimension_numbers<[1], [0], [0], [1], [0, 0, 1, 1], [], []>} : vector<34x64xbf16>, vector<64x32xbf16>, vector<34x32xf32> -> vector<34x32xf32>
    %155 = arith.truncf %154 : vector<34x32xf32> to vector<34x32xbf16>
    %c0_83 = arith.constant 0 : index
    %c0_84 = arith.constant 0 : index
    %c0_85 = arith.constant 0 : index
    %156 = vector.load %arg18[%c0_83, %c0_84, %c0_85] : memref<2x64x32xbf16, #tpu.memory_space<vmem>>, vector<1x64x32xbf16>
    %157 = vector.shape_cast %156 : vector<1x64x32xbf16> to vector<64x32xbf16>
    %cst_86 = arith.constant dense<0.000000e+00> : vector<34x32xf32>
    %158 = tpu.matmul %150, %157, %cst_86 {dimension_numbers = #tpu.dot_dimension_numbers<[1], [0], [0], [1], [0, 0, 1, 1], [], []>} : vector<34x64xbf16>, vector<64x32xbf16>, vector<34x32xf32> -> vector<34x32xf32>
    %159 = arith.truncf %158 : vector<34x32xf32> to vector<34x32xbf16>
    %c0_87 = arith.constant 0 : index
    %c0_88 = arith.constant 0 : index
    %c0_89 = arith.constant 0 : index
    %160 = vector.load %arg19[%c0_87, %c0_88, %c0_89] : memref<2x64x64xbf16, #tpu.memory_space<vmem>>, vector<1x64x64xbf16>
    %161 = vector.shape_cast %160 : vector<1x64x64xbf16> to vector<64x64xbf16>
    %cst_90 = arith.constant dense<0.000000e+00> : vector<34x64xf32>
    %162 = tpu.matmul %150, %161, %cst_90 {dimension_numbers = #tpu.dot_dimension_numbers<[1], [0], [0], [1], [0, 0, 1, 1], [], []>} : vector<34x64xbf16>, vector<64x64xbf16>, vector<34x64xf32> -> vector<34x64xf32>
    %163 = arith.truncf %162 : vector<34x64xf32> to vector<34x64xbf16>
    %cst_91 = arith.constant dense<0.000000e+00> : vector<34x34xf32>
    %164 = tpu.matmul %155, %159, %cst_91 {dimension_numbers = #tpu.dot_dimension_numbers<[1], [1], [0], [0], [0, 0, 1, 0], [], []>} : vector<34x32xbf16>, vector<34x32xbf16>, vector<34x34xf32> -> vector<34x34xf32>
    %165 = arith.addf %164, %5 : vector<34x34xf32>
    %cst_92 = arith.constant dense<0xFF800000> : vector<34xf32>
    %166 = vector.multi_reduction <maximumf>, %165, %cst_92 [1] : vector<34x34xf32> to vector<34xf32>
    %167 = vector.shape_cast %166 : vector<34xf32> to vector<34x1xf32>
    %168 = vector.broadcast %167 : vector<34x1xf32> to vector<34x34xf32>
    %169 = arith.subf %165, %168 : vector<34x34xf32>
    %170 = math.exp %169 : vector<34x34xf32>
    %cst_93 = arith.constant dense<0.000000e+00> : vector<34xf32>
    %171 = vector.multi_reduction <add>, %170, %cst_93 [1] : vector<34x34xf32> to vector<34xf32>
    %172 = vector.shape_cast %171 : vector<34xf32> to vector<34x1xf32>
    %173 = tpu.reciprocal %172 {approx = true} : vector<34x1xf32> -> vector<34x1xf32>
    %174 = vector.broadcast %173 : vector<34x1xf32> to vector<34x34xf32>
    %175 = arith.mulf %170, %174 : vector<34x34xf32>
    %176 = arith.truncf %175 : vector<34x34xf32> to vector<34x34xbf16>
    %cst_94 = arith.constant dense<0.000000e+00> : vector<34x64xf32>
    %177 = tpu.matmul %176, %163, %cst_94 {dimension_numbers = #tpu.dot_dimension_numbers<[1], [0], [0], [1], [0, 0, 1, 1], [], []>} : vector<34x34xbf16>, vector<34x64xbf16>, vector<34x64xf32> -> vector<34x64xf32>
    %178 = vector.broadcast %151 : vector<1x64xf32> to vector<34x64xf32>
    %179 = arith.addf %178, %177 : vector<34x64xf32>
    %c1_95 = arith.constant 1 : index
    %c0_96 = arith.constant 0 : index
    %c0_97 = arith.constant 0 : index
    %180 = vector.load %arg17[%c1_95, %c0_96, %c0_97] : memref<2x64x32xbf16, #tpu.memory_space<vmem>>, vector<1x64x32xbf16>
    %181 = vector.shape_cast %180 : vector<1x64x32xbf16> to vector<64x32xbf16>
    %cst_98 = arith.constant dense<0.000000e+00> : vector<34x32xf32>
    %182 = tpu.matmul %150, %181, %cst_98 {dimension_numbers = #tpu.dot_dimension_numbers<[1], [0], [0], [1], [0, 0, 1, 1], [], []>} : vector<34x64xbf16>, vector<64x32xbf16>, vector<34x32xf32> -> vector<34x32xf32>
    %183 = arith.truncf %182 : vector<34x32xf32> to vector<34x32xbf16>
    %c1_99 = arith.constant 1 : index
    %c0_100 = arith.constant 0 : index
    %c0_101 = arith.constant 0 : index
    %184 = vector.load %arg18[%c1_99, %c0_100, %c0_101] : memref<2x64x32xbf16, #tpu.memory_space<vmem>>, vector<1x64x32xbf16>
    %185 = vector.shape_cast %184 : vector<1x64x32xbf16> to vector<64x32xbf16>
    %cst_102 = arith.constant dense<0.000000e+00> : vector<34x32xf32>
    %186 = tpu.matmul %150, %185, %cst_102 {dimension_numbers = #tpu.dot_dimension_numbers<[1], [0], [0], [1], [0, 0, 1, 1], [], []>} : vector<34x64xbf16>, vector<64x32xbf16>, vector<34x32xf32> -> vector<34x32xf32>
    %187 = arith.truncf %186 : vector<34x32xf32> to vector<34x32xbf16>
    %c1_103 = arith.constant 1 : index
    %c0_104 = arith.constant 0 : index
    %c0_105 = arith.constant 0 : index
    %188 = vector.load %arg19[%c1_103, %c0_104, %c0_105] : memref<2x64x64xbf16, #tpu.memory_space<vmem>>, vector<1x64x64xbf16>
    %189 = vector.shape_cast %188 : vector<1x64x64xbf16> to vector<64x64xbf16>
    %cst_106 = arith.constant dense<0.000000e+00> : vector<34x64xf32>
    %190 = tpu.matmul %150, %189, %cst_106 {dimension_numbers = #tpu.dot_dimension_numbers<[1], [0], [0], [1], [0, 0, 1, 1], [], []>} : vector<34x64xbf16>, vector<64x64xbf16>, vector<34x64xf32> -> vector<34x64xf32>
    %191 = arith.truncf %190 : vector<34x64xf32> to vector<34x64xbf16>
    %cst_107 = arith.constant dense<0.000000e+00> : vector<34x34xf32>
    %192 = tpu.matmul %183, %187, %cst_107 {dimension_numbers = #tpu.dot_dimension_numbers<[1], [1], [0], [0], [0, 0, 1, 0], [], []>} : vector<34x32xbf16>, vector<34x32xbf16>, vector<34x34xf32> -> vector<34x34xf32>
    %193 = arith.addf %192, %5 : vector<34x34xf32>
    %cst_108 = arith.constant dense<0xFF800000> : vector<34xf32>
    %194 = vector.multi_reduction <maximumf>, %193, %cst_108 [1] : vector<34x34xf32> to vector<34xf32>
    %195 = vector.shape_cast %194 : vector<34xf32> to vector<34x1xf32>
    %196 = vector.broadcast %195 : vector<34x1xf32> to vector<34x34xf32>
    %197 = arith.subf %193, %196 : vector<34x34xf32>
    %198 = math.exp %197 : vector<34x34xf32>
    %cst_109 = arith.constant dense<0.000000e+00> : vector<34xf32>
    %199 = vector.multi_reduction <add>, %198, %cst_109 [1] : vector<34x34xf32> to vector<34xf32>
    %200 = vector.shape_cast %199 : vector<34xf32> to vector<34x1xf32>
    %201 = tpu.reciprocal %200 {approx = true} : vector<34x1xf32> -> vector<34x1xf32>
    %202 = vector.broadcast %201 : vector<34x1xf32> to vector<34x34xf32>
    %203 = arith.mulf %198, %202 : vector<34x34xf32>
    %204 = arith.truncf %203 : vector<34x34xf32> to vector<34x34xbf16>
    %cst_110 = arith.constant dense<0.000000e+00> : vector<34x64xf32>
    %205 = tpu.matmul %204, %191, %cst_110 {dimension_numbers = #tpu.dot_dimension_numbers<[1], [0], [0], [1], [0, 0, 1, 1], [], []>} : vector<34x34xbf16>, vector<34x64xbf16>, vector<34x64xf32> -> vector<34x64xf32>
    %206 = arith.addf %179, %205 : vector<34x64xf32>
    %207 = arith.addf %127, %206 : vector<34x64xf32>
    %cst_111 = arith.constant dense<0.000000e+00> : vector<34xf32>
    %208 = vector.multi_reduction <add>, %207, %cst_111 [1] : vector<34x64xf32> to vector<34xf32>
    %209 = vector.shape_cast %208 : vector<34xf32> to vector<34x1xf32>
    %cst_112 = arith.constant 6.400000e+01 : f32
    %210 = vector.broadcast %cst_112 : f32 to vector<34x1xf32>
    %211 = arith.divf %209, %210 : vector<34x1xf32>
    %212 = vector.broadcast %211 : vector<34x1xf32> to vector<34x64xf32>
    %213 = arith.subf %207, %212 : vector<34x64xf32>
    %214 = arith.mulf %213, %213 : vector<34x64xf32>
    %cst_113 = arith.constant dense<0.000000e+00> : vector<34xf32>
    %215 = vector.multi_reduction <add>, %214, %cst_113 [1] : vector<34x64xf32> to vector<34xf32>
    %216 = vector.shape_cast %215 : vector<34xf32> to vector<34x1xf32>
    %cst_114 = arith.constant 6.400000e+01 : f32
    %217 = vector.broadcast %cst_114 : f32 to vector<34x1xf32>
    %218 = arith.divf %216, %217 : vector<34x1xf32>
    %cst_115 = arith.constant 9.99999974E-6 : f32
    %219 = vector.broadcast %cst_115 : f32 to vector<34x1xf32>
    %220 = arith.addf %218, %219 : vector<34x1xf32>
    %221 = math.rsqrt %220 : vector<34x1xf32>
    %222 = vector.broadcast %221 : vector<34x1xf32> to vector<34x64xf32>
    %223 = arith.mulf %213, %222 : vector<34x64xf32>
    %224 = arith.truncf %223 : vector<34x64xf32> to vector<34x64xbf16>
    %c0_116 = arith.constant 0 : index
    %c0_117 = arith.constant 0 : index
    %225 = vector.load %arg21[%c0_116, %c0_117] : memref<64x128xbf16, #tpu.memory_space<vmem>>, vector<64x128xbf16>
    %cst_118 = arith.constant dense<0.000000e+00> : vector<34x128xf32>
    %226 = tpu.matmul %224, %225, %cst_118 {dimension_numbers = #tpu.dot_dimension_numbers<[1], [0], [0], [1], [0, 0, 1, 1], [], []>} : vector<34x64xbf16>, vector<64x128xbf16>, vector<34x128xf32> -> vector<34x128xf32>
    %c0_119 = arith.constant 0 : index
    %c0_120 = arith.constant 0 : index
    %227 = vector.load %arg22[%c0_119, %c0_120] : memref<1x128xf32, #tpu.memory_space<vmem>>, vector<1x128xf32>
    %228 = vector.broadcast %227 : vector<1x128xf32> to vector<34x128xf32>
    %229 = arith.addf %226, %228 : vector<34x128xf32>
    %230 = arith.mulf %229, %229 : vector<34x128xf32>
    %231 = arith.mulf %229, %230 : vector<34x128xf32>
    %cst_121 = arith.constant 4.471500e-02 : f32
    %232 = vector.broadcast %cst_121 : f32 to vector<34x128xf32>
    %233 = arith.mulf %232, %231 : vector<34x128xf32>
    %234 = arith.addf %229, %233 : vector<34x128xf32>
    %cst_122 = arith.constant 0.797884583 : f32
    %235 = vector.broadcast %cst_122 : f32 to vector<34x128xf32>
    %236 = arith.mulf %235, %234 : vector<34x128xf32>
    %237 = math.tanh %236 : vector<34x128xf32>
    %cst_123 = arith.constant 1.000000e+00 : f32
    %238 = vector.broadcast %cst_123 : f32 to vector<34x128xf32>
    %239 = arith.addf %238, %237 : vector<34x128xf32>
    %cst_124 = arith.constant 5.000000e-01 : f32
    %240 = vector.broadcast %cst_124 : f32 to vector<34x128xf32>
    %241 = arith.mulf %240, %239 : vector<34x128xf32>
    %242 = arith.mulf %229, %241 : vector<34x128xf32>
    %243 = arith.truncf %242 : vector<34x128xf32> to vector<34x128xbf16>
    %c0_125 = arith.constant 0 : index
    %c0_126 = arith.constant 0 : index
    %244 = vector.load %arg23[%c0_125, %c0_126] : memref<128x64xbf16, #tpu.memory_space<vmem>>, vector<128x64xbf16>
    %cst_127 = arith.constant dense<0.000000e+00> : vector<34x64xf32>
    %245 = tpu.matmul %243, %244, %cst_127 {dimension_numbers = #tpu.dot_dimension_numbers<[1], [0], [0], [1], [0, 0, 1, 1], [], []>} : vector<34x128xbf16>, vector<128x64xbf16>, vector<34x64xf32> -> vector<34x64xf32>
    %246 = arith.addf %207, %245 : vector<34x64xf32>
    %c0_128 = arith.constant 0 : index
    %c0_129 = arith.constant 0 : index
    %247 = vector.load %arg24[%c0_128, %c0_129] : memref<1x64xf32, #tpu.memory_space<vmem>>, vector<1x64xf32>
    %248 = vector.broadcast %247 : vector<1x64xf32> to vector<34x64xf32>
    %249 = arith.addf %246, %248 : vector<34x64xf32>
    %cst_130 = arith.constant dense<0.000000e+00> : vector<34xf32>
    %250 = vector.multi_reduction <add>, %249, %cst_130 [1] : vector<34x64xf32> to vector<34xf32>
    %251 = vector.shape_cast %250 : vector<34xf32> to vector<34x1xf32>
    %cst_131 = arith.constant 6.400000e+01 : f32
    %252 = vector.broadcast %cst_131 : f32 to vector<34x1xf32>
    %253 = arith.divf %251, %252 : vector<34x1xf32>
    %254 = vector.broadcast %253 : vector<34x1xf32> to vector<34x64xf32>
    %255 = arith.subf %249, %254 : vector<34x64xf32>
    %256 = arith.mulf %255, %255 : vector<34x64xf32>
    %cst_132 = arith.constant dense<0.000000e+00> : vector<34xf32>
    %257 = vector.multi_reduction <add>, %256, %cst_132 [1] : vector<34x64xf32> to vector<34xf32>
    %258 = vector.shape_cast %257 : vector<34xf32> to vector<34x1xf32>
    %cst_133 = arith.constant 6.400000e+01 : f32
    %259 = vector.broadcast %cst_133 : f32 to vector<34x1xf32>
    %260 = arith.divf %258, %259 : vector<34x1xf32>
    %cst_134 = arith.constant 9.99999974E-6 : f32
    %261 = vector.broadcast %cst_134 : f32 to vector<34x1xf32>
    %262 = arith.addf %260, %261 : vector<34x1xf32>
    %263 = math.rsqrt %262 : vector<34x1xf32>
    %264 = vector.broadcast %263 : vector<34x1xf32> to vector<34x64xf32>
    %265 = arith.mulf %255, %264 : vector<34x64xf32>
    %266 = arith.truncf %265 : vector<34x64xf32> to vector<34x64xbf16>
    %c0_135 = arith.constant 0 : index
    %c0_136 = arith.constant 0 : index
    %267 = vector.load %arg4[%c0_135, %c0_136] : memref<2x34xbf16, #tpu.memory_space<vmem>>, vector<2x34xbf16>
    %cst_137 = arith.constant dense<0.000000e+00> : vector<2x64xf32>
    %268 = tpu.matmul %267, %266, %cst_137 {dimension_numbers = #tpu.dot_dimension_numbers<[1], [0], [0], [1], [0, 0, 1, 1], [], []>} : vector<2x34xbf16>, vector<34x64xbf16>, vector<2x64xf32> -> vector<2x64xf32>
    %269 = arith.truncf %268 : vector<2x64xf32> to vector<2x64xbf16>
    %c0_138 = arith.constant 0 : index
    %c0_139 = arith.constant 0 : index
    %270 = vector.load %arg25[%c0_138, %c0_139] : memref<64x128xbf16, #tpu.memory_space<vmem>>, vector<64x128xbf16>
    %cst_140 = arith.constant dense<0.000000e+00> : vector<2x128xf32>
    %271 = tpu.matmul %269, %270, %cst_140 {dimension_numbers = #tpu.dot_dimension_numbers<[1], [0], [0], [1], [0, 0, 1, 1], [], []>} : vector<2x64xbf16>, vector<64x128xbf16>, vector<2x128xf32> -> vector<2x128xf32>
    %c0_141 = arith.constant 0 : index
    %c0_142 = arith.constant 0 : index
    %272 = vector.load %arg26[%c0_141, %c0_142] : memref<1x128xf32, #tpu.memory_space<vmem>>, vector<1x128xf32>
    %273 = vector.broadcast %272 : vector<1x128xf32> to vector<2x128xf32>
    %274 = arith.addf %271, %273 : vector<2x128xf32>
    %c0_143 = arith.constant 0 : index
    %c0_144 = arith.constant 0 : index
    %275 = vector.load %arg27[%c0_143, %c0_144] : memref<2x128xf32, #tpu.memory_space<vmem>>, vector<2x128xf32>
    tpu.vector_store %arg27[%c0_143, %c0_144], %274 {strides = array<i32>} : memref<2x128xf32, #tpu.memory_space<vmem>>, vector<2x128xf32>,
    return
  }
}

</mosaic_0001>

<llo_original>
// kernel: tpu_custom_call.1
$region0: #{tpu_custom_call.1}
  #allocation0 [shape = 'u32[]', space=smem, size = 0x4, offset = 0x4, fixed_abs, tag = 'smem constant byte address 0x4 - core index']
  #allocation1 [shape = 'u32[144,128]{1,0:T(1,128)}', space=vmem, size = 0x12000, scoped, tag = 'internal scratch']
  %s0 = inlined_call_operand.hbm [shape: f32[8,128], index: 0, kind: input, shape index: {}]
  %s1 = inlined_call_operand.hbm [shape: f32[8,128], index: 1, kind: output, shape index: {}]
  %s2 = sld [smem:[#allocation0]]
  $region18: #{tpu_custom_call.1} parent=0
    _
  %s4 = ssub.s32 1, %s2
  %s5 = scalar_select 0, %s4, %s2
  $region1: #{tpu_custom_call.1} parent=0
    #allocation2 [shape = 'u8[4096]{0}', space=vmem, size = 0x1000, scoped, tag = 'input window, operand 0, single buffered']
    #allocation3 [shape = 's32[1]{0}', space=sflag, size = 0x4, scoped, tag = 'scoped memory for tpu_custom_call.1']
    #allocation4 [shape = 's32[1]{0}', space=sflag, size = 0x4, scoped, tag = 'scoped memory for tpu_custom_call.1']
    #allocation5 [shape = 'u8[4096]{0}', space=vmem, size = 0x1000, scoped, tag = 'output window, operand 0, single buffered']
    %6 = vsyncpa [#allocation3], 0
    %7 = vsyncpa [#allocation4], 0
    // Predicated region
    $region2: #{tpu_custom_call.1} parent=1 // pred_check
      _
    $region3: #{tpu_custom_call.1} parent=1 // pred_check_branch
      %9 = sbr.rel (0) target = $region5
    $region4: #{tpu_custom_call.1} parent=1 // pred_region
      %s11 = ssub.s32 128, 128
      %12 = vsyncadd [#allocation3], %s11
      %s14 = sshll.u32 [#allocation2], 4
      %s15 = int_to_ptr.vmem [resolvable:$true] %s14
      %17 = dma.hbm_to_vmem [thread:$0]  %s0, 128, %s15, [#allocation3]
    $region5: #{tpu_custom_call.1} parent=1 // pred_fallthru
      _
    // Predicated region
    $region6: #{tpu_custom_call.1} parent=1 // pred_check
      _
    $region7: #{tpu_custom_call.1} parent=1 // pred_check_branch
      %19 = sbr.rel (0) target = $region9
    $region8: #{tpu_custom_call.1} parent=1 // pred_region
      %20 = dma.done [#allocation3], 128
    $region9: #{tpu_custom_call.1} parent=1 // pred_fallthru
      _
    %v21 = vld [vmem:[#allocation2] sm:$0xff]
    %v22 = verf.f32.pop %v21
    %23 = vst [vmem:[#allocation5] sm:$0xff] %v22
    // Predicated region
    $region10: #{tpu_custom_call.1} parent=1 // pred_check
      _
    $region11: #{tpu_custom_call.1} parent=1 // pred_check_branch
      %25 = sbr.rel (0) target = $region13
    $region12: #{tpu_custom_call.1} parent=1 // pred_region
      %s27 = ssub.s32 128, 128
      %28 = vsyncadd [#allocation4], %s27
      %s30 = sshll.u32 [#allocation5], 4
      %s31 = int_to_ptr.vmem [resolvable:$true] %s30
      %33 = dma.vmem_to_hbm [thread:$0]  %s31, 128, %s1, [#allocation4]
    $region13: #{tpu_custom_call.1} parent=1 // pred_fallthru
      _
    // Predicated region
    $region14: #{tpu_custom_call.1} parent=1 // pred_check
      _
    $region15: #{tpu_custom_call.1} parent=1 // pred_check_branch
      %35 = sbr.rel (0) target = $region17
    $region16: #{tpu_custom_call.1} parent=1 // pred_region
      %36 = dma.done [#allocation4], 128
    $region17: #{tpu_custom_call.1} parent=1 // pred_fallthru
      _
    %37 = vsyncpa [#allocation3], 1
    %38 = vsyncpa [#allocation4], 1

// kernel: vit_forward.1
$region0: #{vit_forward.1}
  #allocation0 [shape = 'u32[]', space=smem, size = 0x4, offset = 0x4, fixed_abs, tag = 'smem constant byte address 0x4 - core index']
  #allocation1 [shape = 'u32[144,128]{1,0:T(1,128)}', space=vmem, size = 0x12000, scoped, tag = 'internal scratch']
  %s0 = inlined_call_operand.vmem [shape: bf16[34,128], index: 0, kind: input, shape index: {}]
  %s1 = inlined_call_operand.vmem [shape: bf16[128,64], index: 1, kind: input, shape index: {}]
  %s2 = inlined_call_operand.vmem [shape: f32[34,64], index: 2, kind: input, shape index: {}]
  %s3 = inlined_call_operand.vmem [shape: f32[34,34], index: 3, kind: input, shape index: {}]
  %s4 = inlined_call_operand.vmem [shape: bf16[2,34], index: 4, kind: input, shape index: {}]
  %s5 = inlined_call_operand.vmem [shape: f32[1,64], index: 5, kind: input, shape index: {}]
  %s6 = inlined_call_operand.vmem [shape: f32[1,64], index: 6, kind: input, shape index: {}]
  %s7 = inlined_call_operand.vmem [shape: bf16[2,64,32], index: 7, kind: input, shape index: {}]
  %s8 = inlined_call_operand.vmem [shape: bf16[2,64,32], index: 8, kind: input, shape index: {}]
  %s9 = inlined_call_operand.vmem [shape: bf16[2,64,64], index: 9, kind: input, shape index: {}]
  %s10 = inlined_call_operand.vmem [shape: f32[1,64], index: 10, kind: input, shape index: {}]
  %s11 = inlined_call_operand.vmem [shape: bf16[64,128], index: 11, kind: input, shape index: {}]
  %s12 = inlined_call_operand.vmem [shape: f32[1,128], index: 12, kind: input, shape index: {}]
  %s13 = inlined_call_operand.vmem [shape: bf16[128,64], index: 13, kind: input, shape index: {}]
  %s14 = inlined_call_operand.vmem [shape: f32[1,64], index: 14, kind: input, shape index: {}]
  %s15 = inlined_call_operand.vmem [shape: f32[1,64], index: 15, kind: input, shape index: {}]
  %s16 = inlined_call_operand.vmem [shape: f32[1,64], index: 16, kind: input, shape index: {}]
  %s17 = inlined_call_operand.vmem [shape: bf16[2,64,32], index: 17, kind: input, shape index: {}]
  %s18 = inlined_call_operand.vmem [shape: bf16[2,64,32], index: 18, kind: input, shape index: {}]
  %s19 = inlined_call_operand.vmem [shape: bf16[2,64,64], index: 19, kind: input, shape index: {}]
  %s20 = inlined_call_operand.vmem [shape: f32[1,64], index: 20, kind: input, shape index: {}]
  %s21 = inlined_call_operand.vmem [shape: bf16[64,128], index: 21, kind: input, shape index: {}]
  %s22 = inlined_call_operand.vmem [shape: f32[1,128], index: 22, kind: input, shape index: {}]
  %s23 = inlined_call_operand.vmem [shape: bf16[128,64], index: 23, kind: input, shape index: {}]
  %s24 = inlined_call_operand.vmem [shape: f32[1,64], index: 24, kind: input, shape index: {}]
  %s25 = inlined_call_operand.vmem [shape: bf16[64,128], index: 25, kind: input, shape index: {}]
  %s26 = inlined_call_operand.vmem [shape: f32[1,128], index: 26, kind: input, shape index: {}]
  %s27 = inlined_call_operand.hbm [shape: f32[2,128], index: 27, kind: output, shape index: {}]
  %s28 = sld [smem:[#allocation0]]
  $region118: #{vit_forward.1} parent=0
    _
  %s30 = ssub.s32 1, %s28
  %s31 = scalar_select 0, %s30, %s28
  $region1: #{vit_forward.1} parent=0
    #allocation2 [shape = 'u8[1024]{0}', space=vmem, size = 0x400, scoped, tag = 'output window, operand 0, single buffered']
    #allocation3 [shape = 's32[1]{0}', space=sflag, size = 0x4, scoped, tag = 'scoped memory for vit_forward.1']
    %32 = vsyncpa [#allocation3], 0
    // Predicated region
    $region2: #{vit_forward.1} parent=1 // pred_check
      _
    $region3: #{vit_forward.1} parent=1 // pred_check_branch
      %34 = sbr.rel (0) target = $region5
    $region4: #{vit_forward.1} parent=1 // pred_region
      _
    $region5: #{vit_forward.1} parent=1 // pred_fallthru
      _
    // Predicated region
    $region6: #{vit_forward.1} parent=1 // pred_check
      _
    $region7: #{vit_forward.1} parent=1 // pred_check_branch
      %36 = sbr.rel (0) target = $region9
    $region8: #{vit_forward.1} parent=1 // pred_region
      _
    $region9: #{vit_forward.1} parent=1 // pred_fallthru
      _
    // Predicated region
    $region10: #{vit_forward.1} parent=1 // pred_check
      _
    $region11: #{vit_forward.1} parent=1 // pred_check_branch
      %38 = sbr.rel (0) target = $region13
    $region12: #{vit_forward.1} parent=1 // pred_region
      _
    $region13: #{vit_forward.1} parent=1 // pred_fallthru
      _
    // Predicated region
    $region14: #{vit_forward.1} parent=1 // pred_check
      _
    $region15: #{vit_forward.1} parent=1 // pred_check_branch
      %40 = sbr.rel (0) target = $region17
    $region16: #{vit_forward.1} parent=1 // pred_region
      _
    $region17: #{vit_forward.1} parent=1 // pred_fallthru
      _
    // Predicated region
    $region18: #{vit_forward.1} parent=1 // pred_check
      _
    $region19: #{vit_forward.1} parent=1 // pred_check_branch
      %42 = sbr.rel (0) target = $region21
    $region20: #{vit_forward.1} parent=1 // pred_region
      _
    $region21: #{vit_forward.1} parent=1 // pred_fallthru
      _
    // Predicated region
    $region22: #{vit_forward.1} parent=1 // pred_check
      _
    $region23: #{vit_forward.1} parent=1 // pred_check_branch
      %44 = sbr.rel (0) target = $region25
    $region24: #{vit_forward.1} parent=1 // pred_region
      _
    $region25: #{vit_forward.1} parent=1 // pred_fallthru
      _
    // Predicated region
    $region26: #{vit_forward.1} parent=1 // pred_check
      _
    $region27: #{vit_forward.1} parent=1 // pred_check_branch
      %46 = sbr.rel (0) target = $region29
    $region28: #{vit_forward.1} parent=1 // pred_region
      _
    $region29: #{vit_forward.1} parent=1 // pred_fallthru
      _
    // Predicated region
    $region30: #{vit_forward.1} parent=1 // pred_check
      _
    $region31: #{vit_forward.1} parent=1 // pred_check_branch
      %48 = sbr.rel (0) target = $region33
    $region32: #{vit_forward.1} parent=1 // pred_region
      _
    $region33: #{vit_forward.1} parent=1 // pred_fallthru
      _
    // Predicated region
    $region34: #{vit_forward.1} parent=1 // pred_check
      _
    $region35: #{vit_forward.1} parent=1 // pred_check_branch
      %50 = sbr.rel (0) target = $region37
    $region36: #{vit_forward.1} parent=1 // pred_region
      _
    $region37: #{vit_forward.1} parent=1 // pred_fallthru
      _
    // Predicated region
    $region38: #{vit_forward.1} parent=1 // pred_check
      _
    $region39: #{vit_forward.1} parent=1 // pred_check_branch
      %52 = sbr.rel (0) target = $region41
    $region40: #{vit_forward.1} parent=1 // pred_region
      _
    $region41: #{vit_forward.1} parent=1 // pred_fallthru
      _
    // Predicated region
    $region42: #{vit_forward.1} parent=1 // pred_check
      _
    $region43: #{vit_forward.1} parent=1 // pred_check_branch
      %54 = sbr.rel (0) target = $region45
    $region44: #{vit_forward.1} parent=1 // pred_region
      _
    $region45: #{vit_forward.1} parent=1 // pred_fallthru
      _
    // Predicated region
    $region46: #{vit_forward.1} parent=1 // pred_check
      _
    $region47: #{vit_forward.1} parent=1 // pred_check_branch
      %56 = sbr.rel (0) target = $region49
    $region48: #{vit_forward.1} parent=1 // pred_region
      _
    $region49: #{vit_forward.1} parent=1 // pred_fallthru
      _
    // Predicated region
    $region50: #{vit_forward.1} parent=1 // pred_check
      _
    $region51: #{vit_forward.1} parent=1 // pred_check_branch
      %58 = sbr.rel (0) target = $region53
    $region52: #{vit_forward.1} parent=1 // pred_region
      _
    $region53: #{vit_forward.1} parent=1 // pred_fallthru
      _
    // Predicated region
    $region54: #{vit_forward.1} parent=1 // pred_check
      _
    $region55: #{vit_forward.1} parent=1 // pred_check_branch
      %60 = sbr.rel (0) target = $region57
    $region56: #{vit_forward.1} parent=1 // pred_region
      _
    $region57: #{vit_forward.1} parent=1 // pred_fallthru
      _
    // Predicated region
    $region58: #{vit_forward.1} parent=1 // pred_check
      _
    $region59: #{vit_forward.1} parent=1 // pred_check_branch
      %62 = sbr.rel (0) target = $region61
    $region60: #{vit_forward.1} parent=1 // pred_region
      _
    $region61: #{vit_forward.1} parent=1 // pred_fallthru
      _
    // Predicated region
    $region62: #{vit_forward.1} parent=1 // pred_check
      _
    $region63: #{vit_forward.1} parent=1 // pred_check_branch
      %64 = sbr.rel (0) target = $region65
    $region64: #{vit_forward.1} parent=1 // pred_region
      _
    $region65: #{vit_forward.1} parent=1 // pred_fallthru
      _
    // Predicated region
    $region66: #{vit_forward.1} parent=1 // pred_check
      _
    $region67: #{vit_forward.1} parent=1 // pred_check_branch
      %66 = sbr.rel (0) target = $region69
    $region68: #{vit_forward.1} parent=1 // pred_region
      _
    $region69: #{vit_forward.1} parent=1 // pred_fallthru
      _
    // Predicated region
    $region70: #{vit_forward.1} parent=1 // pred_check
      _
    $region71: #{vit_forward.1} parent=1 // pred_check_branch
      %68 = sbr.rel (0) target = $region73
    $region72: #{vit_forward.1} parent=1 // pred_region
      _
    $region73: #{vit_forward.1} parent=1 // pred_fallthru
      _
    // Predicated region
    $region74: #{vit_forward.1} parent=1 // pred_check
      _
    $region75: #{vit_forward.1} parent=1 // pred_check_branch
      %70 = sbr.rel (0) target = $region77
    $region76: #{vit_forward.1} parent=1 // pred_region
      _
    $region77: #{vit_forward.1} parent=1 // pred_fallthru
      _
    // Predicated region
    $region78: #{vit_forward.1} parent=1 // pred_check
      _
    $region79: #{vit_forward.1} parent=1 // pred_check_branch
      %72 = sbr.rel (0) target = $region81
    $region80: #{vit_forward.1} parent=1 // pred_region
      _
    $region81: #{vit_forward.1} parent=1 // pred_fallthru
      _
    // Predicated region
    $region82: #{vit_forward.1} parent=1 // pred_check
      _
    $region83: #{vit_forward.1} parent=1 // pred_check_branch
      %74 = sbr.rel (0) target = $region85
    $region84: #{vit_forward.1} parent=1 // pred_region
      _
    $region85: #{vit_forward.1} parent=1 // pred_fallthru
      _
    // Predicated region
    $region86: #{vit_forward.1} parent=1 // pred_check
      _
    $region87: #{vit_forward.1} parent=1 // pred_check_branch
      %76 = sbr.rel (0) target = $region89
    $region88: #{vit_forward.1} parent=1 // pred_region
      _
    $region89: #{vit_forward.1} parent=1 // pred_fallthru
      _
    // Predicated region
    $region90: #{vit_forward.1} parent=1 // pred_check
      _
    $region91: #{vit_forward.1} parent=1 // pred_check_branch
      %78 = sbr.rel (0) target = $region93
    $region92: #{vit_forward.1} parent=1 // pred_region
      _
    $region93: #{vit_forward.1} parent=1 // pred_fallthru
      _
    // Predicated region
    $region94: #{vit_forward.1} parent=1 // pred_check
      _
    $region95: #{vit_forward.1} parent=1 // pred_check_branch
      %80 = sbr.rel (0) target = $region97
    $region96: #{vit_forward.1} parent=1 // pred_region
      _
    $region97: #{vit_forward.1} parent=1 // pred_fallthru
      _
    // Predicated region
    $region98: #{vit_forward.1} parent=1 // pred_check
      _
    $region99: #{vit_forward.1} parent=1 // pred_check_branch
      %82 = sbr.rel (0) target = $region101
    $region100: #{vit_forward.1} parent=1 // pred_region
      _
    $region101: #{vit_forward.1} parent=1 // pred_fallthru
      _
    // Predicated region
    $region102: #{vit_forward.1} parent=1 // pred_check
      _
    $region103: #{vit_forward.1} parent=1 // pred_check_branch
      %84 = sbr.rel (0) target = $region105
    $region104: #{vit_forward.1} parent=1 // pred_region
      _
    $region105: #{vit_forward.1} parent=1 // pred_fallthru
      _
    // Predicated region
    $region106: #{vit_forward.1} parent=1 // pred_check
      _
    $region107: #{vit_forward.1} parent=1 // pred_check_branch
      %86 = sbr.rel (0) target = $region109
    $region108: #{vit_forward.1} parent=1 // pred_region
      _
    $region109: #{vit_forward.1} parent=1 // pred_fallthru
      _
    %v88 = vld [vmem:[%s0] sm:$0xf]
    %v89 = vld [vmem:[%s0 + $0x4] sm:$0xf]
    %v90 = vld [vmem:[%s0 + $0x8] sm:$0xf]
    %v91 = vld [vmem:[%s0 + $0xc] sm:$0xf]
    %v92 = vld [vmem:[%s0 + $0x10] sm:$0x1]
    %v93 = vld [vmem:[%s1] sm:$0xf]
    %v94 = vld [vmem:[%s1 + $0x4] sm:$0xf]
    %v95 = vld [vmem:[%s1 + $0x8] sm:$0xf]
    %v96 = vld [vmem:[%s1 + $0xc] sm:$0xf]
    %v97 = vld [vmem:[%s1 + $0x10] sm:$0xf]
    %v98 = vld [vmem:[%s1 + $0x14] sm:$0xf]
    %v99 = vld [vmem:[%s1 + $0x18] sm:$0xf]
    %v100 = vld [vmem:[%s1 + $0x1c] sm:$0xf]
    %v101 = vld [vmem:[%s1 + $0x20] sm:$0xf]
    %v102 = vld [vmem:[%s1 + $0x24] sm:$0xf]
    %v103 = vld [vmem:[%s1 + $0x28] sm:$0xf]
    %v104 = vld [vmem:[%s1 + $0x2c] sm:$0xf]
    %v105 = vld [vmem:[%s1 + $0x30] sm:$0xf]
    %v106 = vld [vmem:[%s1 + $0x34] sm:$0xf]
    %v107 = vld [vmem:[%s1 + $0x38] sm:$0xf]
    %v108 = vld [vmem:[%s1 + $0x3c] sm:$0xf]
    %v109 = vld [vmem:[%s2] sm:$0xff]
    %v110 = vld [vmem:[%s2 + $0x8] sm:$0xff]
    %v111 = vld [vmem:[%s2 + $0x10] sm:$0xff]
    %v112 = vld [vmem:[%s2 + $0x18] sm:$0xff]
    %v113 = vld [vmem:[%s2 + $0x20] sm:$0x3]
    %v119 = vunpack.c.l.b16 %v88
    %v120 = vunpack.c.l.b16 %v89
    %v121 = vunpack.c.l.b16 %v90
    %v122 = vunpack.c.l.b16 %v91
    %v123 = vunpack.c.l.b16 %v92
    %v124 = vpack.c.b16 %v120, %v119
    %v125 = vpack.c.b16 %v122, %v121
    %v126 = vpack.c.b16 %v123, %v123
    %v146 = vunpack.c.l.b16 %v93
    %v147 = vunpack.c.l.b16 %v94
    %v148 = vunpack.c.l.b16 %v95
    %v149 = vunpack.c.l.b16 %v96
    %v150 = vunpack.c.l.b16 %v97
    %v151 = vunpack.c.l.b16 %v98
    %v152 = vunpack.c.l.b16 %v99
    %v153 = vunpack.c.l.b16 %v100
    %v154 = vunpack.c.l.b16 %v101
    %v155 = vunpack.c.l.b16 %v102
    %v156 = vunpack.c.l.b16 %v103
    %v157 = vunpack.c.l.b16 %v104
    %v158 = vunpack.c.l.b16 %v105
    %v159 = vunpack.c.l.b16 %v106
    %v160 = vunpack.c.l.b16 %v107
    %v161 = vunpack.c.l.b16 %v108
    %v162 = vpack.c.b16 %v147, %v146
    %v163 = vpack.c.b16 %v149, %v148
    %v164 = vpack.c.b16 %v151, %v150
    %v165 = vpack.c.b16 %v153, %v152
    %v166 = vpack.c.b16 %v155, %v154
    %v167 = vpack.c.b16 %v157, %v156
    %v168 = vpack.c.b16 %v159, %v158
    %v169 = vpack.c.b16 %v161, %v160
    %178 = vmatprep.subr.bf16.mxu0 0
    %179 = vmatpush1.bf16.msra.mxu0 %v169
    %180 = vmatprep.subr.bf16.mxu0 0
    %181 = vmatpush1.bf16.msra.mxu0 %v168
    %182 = vmatprep.subr.bf16.mxu0 0
    %183 = vmatpush1.bf16.msra.mxu0 %v167
    %184 = vmatprep.subr.bf16.mxu0 0
    %185 = vmatpush1.bf16.msra.mxu0 %v166
    %186 = vmatprep.subr.bf16.mxu0 0
    %187 = vmatpush1.bf16.msra.mxu0 %v165
    %188 = vmatprep.subr.bf16.mxu0 0
    %189 = vmatpush1.bf16.msra.mxu0 %v164
    %190 = vmatprep.subr.bf16.mxu0 0
    %191 = vmatpush1.bf16.msra.mxu0 %v163
    %192 = vmatprep.subr.bf16.mxu0 0
    %193 = vmatpush1.bf16.msra.mxu0 %v162
    %194 = vmatprep.subr.bf16.mxu0 0
    %195 = vmatpush2.bf16.msra.mxu0 0
    %196 = vmatprep.subr.bf16.mxu0 0
    %197 = vmatpush2.bf16.msra.mxu0 0
    %198 = vmatprep.subr.bf16.mxu0 0
    %199 = vmatpush2.bf16.msra.mxu0 0
    %200 = vmatprep.subr.bf16.mxu0 0
    %201 = vmatpush2.bf16.msra.mxu0 0
    %202 = vmatprep.subr.bf16.mxu0 0
    %203 = vmatpush2.bf16.msra.mxu0 0
    %204 = vmatprep.subr.bf16.mxu0 0
    %205 = vmatpush2.bf16.msra.mxu0 0
    %206 = vmatprep.subr.bf16.mxu0 0
    %207 = vmatpush2.bf16.msra.mxu0 0
    %208 = vmatprep.subr.bf16.mxu0 0
    %209 = vmatpush2.bf16.msra.mxu0 0
    %210 = vmatprep.mubr.bf16.mxu0 0
    %211 = vmatmul.mubr.bf16.gmra.mxu0 %v124
    %v212 = vpop.f32.mrf.mxu0
    %v213 = vadd.f32 %v109, %v212
    %v214 = vpop.f32.mrf.mxu0
    %v215 = vpop.f32.mrf.mxu0
    %v216 = vadd.f32 %v110, %v215
    %v217 = vpop.f32.mrf.mxu0
    %218 = vmatprep.mubr.bf16.mxu0 0
    %219 = vmatmul.mubr.bf16.gmra.mxu0 %v125
    %v220 = vpop.f32.mrf.mxu0
    %v221 = vadd.f32 %v111, %v220
    %v222 = vpop.f32.mrf.mxu0
    %v223 = vpop.f32.mrf.mxu0
    %v224 = vadd.f32 %v112, %v223
    %v225 = vpop.f32.mrf.mxu0
    %226 = vmatprep.mubr.bf16.mxu0 0
    %227 = vmatmul.mubr.bf16.gmra.mxu0 %v126
    %v228 = vpop.f32.mrf.mxu0
    %v229 = vadd.f32 %v113, %v228
    %v230 = vpop.f32.mrf.mxu0
    %v231 = vpop.f32.mrf.mxu0
    %v232 = vpop.f32.mrf.mxu0
    %233 = vdwg.mxu0
    %v234 = vld [vmem:[%s3] sm:$0xff]
    %v235 = vld [vmem:[%s3 + $0x8] sm:$0xff]
    %v236 = vld [vmem:[%s3 + $0x10] sm:$0xff]
    %v237 = vld [vmem:[%s3 + $0x18] sm:$0xff]
    %v238 = vld [vmem:[%s3 + $0x20] sm:$0x3]
    %v239 = vld [vmem:[%s5] sm:$0x1]
    %v240 = vld [vmem:[%s6] sm:$0x1]
    %vm241 = vcmask 523264
    %v242 = vsel %vm241, %v213, 0.0
    %243 = vadd.xlane.f32.xlu0 %v242
    %v244 = vpop.xlane.xlu0 %243
    %v245 = vsel %vm241, %v216, 0.0
    %246 = vadd.xlane.f32.xlu0 %v245
    %v247 = vpop.xlane.xlu0 %246
    %v248 = vsel %vm241, %v221, 0.0
    %249 = vadd.xlane.f32.xlu0 %v248
    %v250 = vpop.xlane.xlu0 %249
    %v251 = vsel %vm241, %v224, 0.0
    %252 = vadd.xlane.f32.xlu0 %v251
    %v253 = vpop.xlane.xlu0 %252
    %vm254 = vcmask 517120
    %v255 = vsel %vm254, %v229, 0.0
    %256 = vadd.xlane.f32.xlu0 %v255
    %v257 = vpop.xlane.xlu0 %256
    %v258 = vrcp.pop 64.0
    %v259 = vmul.f32 %v244, %v258
    %v260 = vmul.f32 %v247, %v258
    %v261 = vmul.f32 %v250, %v258
    %v262 = vmul.f32 %v253, %v258
    %v263 = vmul.f32 %v257, %v258
    %v264 = vsub.f32 %v213, %v259
    %v265 = vsub.f32 %v216, %v260
    %v266 = vsub.f32 %v221, %v261
    %v267 = vsub.f32 %v224, %v262
    %v268 = vsub.f32 %v229, %v263
    %v269 = vmul.f32 %v264, %v264
    %v270 = vmul.f32 %v265, %v265
    %v271 = vmul.f32 %v266, %v266
    %v272 = vmul.f32 %v267, %v267
    %v273 = vmul.f32 %v268, %v268
    %v274 = vsel %vm241, %v269, 0.0
    %275 = vadd.xlane.f32.xlu0 %v274
    %v276 = vpop.xlane.xlu0 %275
    %v277 = vsel %vm241, %v270, 0.0
    %278 = vadd.xlane.f32.xlu0 %v277
    %v279 = vpop.xlane.xlu0 %278
    %v280 = vsel %vm241, %v271, 0.0
    %281 = vadd.xlane.f32.xlu0 %v280
    %v282 = vpop.xlane.xlu0 %281
    %v283 = vsel %vm241, %v272, 0.0
    %284 = vadd.xlane.f32.xlu0 %v283
    %v285 = vpop.xlane.xlu0 %284
    %v286 = vsel %vm254, %v273, 0.0
    %287 = vadd.xlane.f32.xlu0 %v286
    %v288 = vpop.xlane.xlu0 %287
    %v289 = vmul.f32 %v276, %v258
    %v290 = vmul.f32 %v279, %v258
    %v291 = vmul.f32 %v282, %v258
    %v292 = vmul.f32 %v285, %v258
    %v293 = vmul.f32 %v288, %v258
    %v294 = vadd.f32 %v289, 1e-05
    %v295 = vadd.f32 %v290, 1e-05
    %v296 = vadd.f32 %v291, 1e-05
    %v297 = vadd.f32 %v292, 1e-05
    %v298 = vadd.f32 %v293, 1e-05
    %v299 = vrsqrt.pop %v294
    %v300 = vrsqrt.pop %v295
    %v301 = vrsqrt.pop %v296
    %v302 = vrsqrt.pop %v297
    %v303 = vrsqrt.pop %v298
    %v304 = vmul.f32 %v264, %v299
    %v305 = vmul.f32 %v265, %v300
    %v306 = vmul.f32 %v266, %v301
    %v307 = vmul.f32 %v267, %v302
    %v308 = vmul.f32 %v268, %v303
    %v310 = vlaneseq
    %v311 = vshrl.u32 %v310, 7
    %v312 = vsub.s32 0, %v311
    %v313 = vrot.slane %v239, %v312
    %v315 = vmul.f32 %v304, %v313
    %v316 = vmul.f32 %v305, %v313
    %v317 = vmul.f32 %v306, %v313
    %v318 = vmul.f32 %v307, %v313
    %v319 = vmul.f32 %v308, %v313
    %v321 = vlaneseq
    %v322 = vshrl.u32 %v321, 7
    %v323 = vsub.s32 0, %v322
    %v324 = vrot.slane %v240, %v323
    %v326 = vadd.f32 %v315, %v324
    %v327 = vadd.f32 %v316, %v324
    %v328 = vadd.f32 %v317, %v324
    %v329 = vadd.f32 %v318, %v324
    %v330 = vadd.f32 %v319, %v324
    %v331 = vpack.c.bf16 %v327, %v326
    %v332 = vpack.c.bf16 %v329, %v328
    %v333 = vpack.c.bf16 %v330, %v330
    %v334 = vld [vmem:[%s10] sm:$0x1]
    %v335 = vld [vmem:[%s7] sm:$0xf]
    %v336 = vld [vmem:[%s7 + $0x4] sm:$0xf]
    %v337 = vld [vmem:[%s7 + $0x8] sm:$0xf]
    %v338 = vld [vmem:[%s7 + $0xc] sm:$0xf]
    %v339 = vld [vmem:[%s7 + $0x10] sm:$0xf]
    %v340 = vld [vmem:[%s7 + $0x14] sm:$0xf]
    %v341 = vld [vmem:[%s7 + $0x18] sm:$0xf]
    %v342 = vld [vmem:[%s7 + $0x1c] sm:$0xf]
    %v351 = vunpack.c.l.b16 %v335
    %v352 = vunpack.c.l.b16 %v336
    %v353 = vunpack.c.l.b16 %v337
    %v354 = vunpack.c.l.b16 %v338
    %v355 = vunpack.c.l.b16 %v339
    %v356 = vunpack.c.l.b16 %v340
    %v357 = vunpack.c.l.b16 %v341
    %v358 = vunpack.c.l.b16 %v342
    %v359 = vpack.c.b16 %v352, %v351
    %v360 = vpack.c.b16 %v354, %v353
    %v361 = vpack.c.b16 %v356, %v355
    %v362 = vpack.c.b16 %v358, %v357
    %v368 = vsel %vm241, %v331, 0
    %v371 = vsel %vm241, %v332, 0
    %v374 = vsel %vm241, %v333, 0
    %376 = vmatprep.subr.bf16.mxu0 0
    %377 = vmatpush1.bf16.msra.mxu0 0
    %378 = vmatprep.subr.bf16.mxu0 0
    %379 = vmatpush1.bf16.msra.mxu0 0
    %380 = vmatprep.subr.bf16.mxu0 0
    %381 = vmatpush1.bf16.msra.mxu0 0
    %382 = vmatprep.subr.bf16.mxu0 0
    %383 = vmatpush1.bf16.msra.mxu0 0
    %384 = vmatprep.subr.bf16.mxu0 0
    %385 = vmatpush1.bf16.msra.mxu0 %v362
    %386 = vmatprep.subr.bf16.mxu0 0
    %387 = vmatpush1.bf16.msra.mxu0 %v361
    %388 = vmatprep.subr.bf16.mxu0 0
    %389 = vmatpush1.bf16.msra.mxu0 %v360
    %390 = vmatprep.subr.bf16.mxu0 0
    %391 = vmatpush1.bf16.msra.mxu0 %v359
    %392 = vmatprep.subr.bf16.mxu0 0
    %393 = vmatpush2.bf16.msra.mxu0 0
    %394 = vmatprep.subr.bf16.mxu0 0
    %395 = vmatpush2.bf16.msra.mxu0 0
    %396 = vmatprep.subr.bf16.mxu0 0
    %397 = vmatpush2.bf16.msra.mxu0 0
    %398 = vmatprep.subr.bf16.mxu0 0
    %399 = vmatpush2.bf16.msra.mxu0 0
    %400 = vmatprep.subr.bf16.mxu0 0
    %401 = vmatpush2.bf16.msra.mxu0 0
    %402 = vmatprep.subr.bf16.mxu0 0
    %403 = vmatpush2.bf16.msra.mxu0 0
    %404 = vmatprep.subr.bf16.mxu0 0
    %405 = vmatpush2.bf16.msra.mxu0 0
    %406 = vmatprep.subr.bf16.mxu0 0
    %407 = vmatpush2.bf16.msra.mxu0 0
    %408 = vmatprep.mubr.bf16.mxu0 0
    %409 = vmatmul.mubr.bf16.gmra.mxu0 %v368
    %v410 = vpop.f32.mrf.mxu0
    %v411 = vadd.f32 0.0, %v410
    %v412 = vpop.f32.mrf.mxu0
    %v413 = vpop.f32.mrf.mxu0
    %v414 = vadd.f32 0.0, %v413
    %v415 = vpop.f32.mrf.mxu0
    %416 = vmatprep.mubr.bf16.mxu0 0
    %417 = vmatmul.mubr.bf16.gmra.mxu0 %v371
    %v418 = vpop.f32.mrf.mxu0
    %v419 = vadd.f32 0.0, %v418
    %v420 = vpop.f32.mrf.mxu0
    %v421 = vpop.f32.mrf.mxu0
    %v422 = vadd.f32 0.0, %v421
    %v423 = vpop.f32.mrf.mxu0
    %424 = vmatprep.mubr.bf16.mxu0 0
    %425 = vmatmul.mubr.bf16.gmra.mxu0 %v374
    %v426 = vpop.f32.mrf.mxu0
    %v427 = vadd.f32 0.0, %v426
    %v428 = vpop.f32.mrf.mxu0
    %v429 = vpop.f32.mrf.mxu0
    %v430 = vpop.f32.mrf.mxu0
    %431 = vdwg.mxu0
    %v432 = vpack.c.bf16 %v414, %v411
    %v433 = vpack.c.bf16 %v422, %v419
    %v434 = vpack.c.bf16 %v427, %v427
    %v435 = vld [vmem:[%s8] sm:$0xf]
    %v436 = vld [vmem:[%s8 + $0x4] sm:$0xf]
    %v437 = vld [vmem:[%s8 + $0x8] sm:$0xf]
    %v438 = vld [vmem:[%s8 + $0xc] sm:$0xf]
    %v439 = vld [vmem:[%s8 + $0x10] sm:$0xf]
    %v440 = vld [vmem:[%s8 + $0x14] sm:$0xf]
    %v441 = vld [vmem:[%s8 + $0x18] sm:$0xf]
    %v442 = vld [vmem:[%s8 + $0x1c] sm:$0xf]
    %v451 = vunpack.c.l.b16 %v435
    %v452 = vunpack.c.l.b16 %v436
    %v453 = vunpack.c.l.b16 %v437
    %v454 = vunpack.c.l.b16 %v438
    %v455 = vunpack.c.l.b16 %v439
    %v456 = vunpack.c.l.b16 %v440
    %v457 = vunpack.c.l.b16 %v441
    %v458 = vunpack.c.l.b16 %v442
    %v459 = vpack.c.b16 %v452, %v451
    %v460 = vpack.c.b16 %v454, %v453
    %v461 = vpack.c.b16 %v456, %v455
    %v462 = vpack.c.b16 %v458, %v457
    %467 = vmatprep.subr.bf16.mxu0 0
    %468 = vmatpush1.bf16.msra.mxu0 0
    %469 = vmatprep.subr.bf16.mxu0 0
    %470 = vmatpush1.bf16.msra.mxu0 0
    %471 = vmatprep.subr.bf16.mxu0 0
    %472 = vmatpush1.bf16.msra.mxu0 0
    %473 = vmatprep.subr.bf16.mxu0 0
    %474 = vmatpush1.bf16.msra.mxu0 0
    %475 = vmatprep.subr.bf16.mxu0 0
    %476 = vmatpush1.bf16.msra.mxu0 %v462
    %477 = vmatprep.subr.bf16.mxu0 0
    %478 = vmatpush1.bf16.msra.mxu0 %v461
    %479 = vmatprep.subr.bf16.mxu0 0
    %480 = vmatpush1.bf16.msra.mxu0 %v460
    %481 = vmatprep.subr.bf16.mxu0 0
    %482 = vmatpush1.bf16.msra.mxu0 %v459
    %483 = vmatprep.subr.bf16.mxu0 0
    %484 = vmatpush2.bf16.msra.mxu0 0
    %485 = vmatprep.subr.bf16.mxu0 0
    %486 = vmatpush2.bf16.msra.mxu0 0
    %487 = vmatprep.subr.bf16.mxu0 0
    %488 = vmatpush2.bf16.msra.mxu0 0
    %489 = vmatprep.subr.bf16.mxu0 0
    %490 = vmatpush2.bf16.msra.mxu0 0
    %491 = vmatprep.subr.bf16.mxu0 0
    %492 = vmatpush2.bf16.msra.mxu0 0
    %493 = vmatprep.subr.bf16.mxu0 0
    %494 = vmatpush2.bf16.msra.mxu0 0
    %495 = vmatprep.subr.bf16.mxu0 0
    %496 = vmatpush2.bf16.msra.mxu0 0
    %497 = vmatprep.subr.bf16.mxu0 0
    %498 = vmatpush2.bf16.msra.mxu0 0
    %499 = vmatprep.mubr.bf16.mxu0 0
    %500 = vmatmul.mubr.bf16.gmra.mxu0 %v368
    %v501 = vpop.f32.mrf.mxu0
    %v502 = vadd.f32 0.0, %v501
    %v503 = vpop.f32.mrf.mxu0
    %v504 = vpop.f32.mrf.mxu0
    %v505 = vadd.f32 0.0, %v504
    %v506 = vpop.f32.mrf.mxu0
    %507 = vmatprep.mubr.bf16.mxu0 0
    %508 = vmatmul.mubr.bf16.gmra.mxu0 %v371
    %v509 = vpop.f32.mrf.mxu0
    %v510 = vadd.f32 0.0, %v509
    %v511 = vpop.f32.mrf.mxu0
    %v512 = vpop.f32.mrf.mxu0
    %v513 = vadd.f32 0.0, %v512
    %v514 = vpop.f32.mrf.mxu0
    %515 = vmatprep.mubr.bf16.mxu0 0
    %516 = vmatmul.mubr.bf16.gmra.mxu0 %v374
    %v517 = vpop.f32.mrf.mxu0
    %v518 = vadd.f32 0.0, %v517
    %v519 = vpop.f32.mrf.mxu0
    %v520 = vpop.f32.mrf.mxu0
    %v521 = vpop.f32.mrf.mxu0
    %522 = vdwg.mxu0
    %v523 = vpack.c.bf16 %v505, %v502
    %v524 = vpack.c.bf16 %v513, %v510
    %v525 = vpack.c.bf16 %v518, %v518
    %v526 = vld [vmem:[%s9] sm:$0xf]
    %v527 = vld [vmem:[%s9 + $0x4] sm:$0xf]
    %v528 = vld [vmem:[%s9 + $0x8] sm:$0xf]
    %v529 = vld [vmem:[%s9 + $0xc] sm:$0xf]
    %v530 = vld [vmem:[%s9 + $0x10] sm:$0xf]
    %v531 = vld [vmem:[%s9 + $0x14] sm:$0xf]
    %v532 = vld [vmem:[%s9 + $0x18] sm:$0xf]
    %v533 = vld [vmem:[%s9 + $0x1c] sm:$0xf]
    %v542 = vunpack.c.l.b16 %v526
    %v543 = vunpack.c.l.b16 %v527
    %v544 = vunpack.c.l.b16 %v528
    %v545 = vunpack.c.l.b16 %v529
    %v546 = vunpack.c.l.b16 %v530
    %v547 = vunpack.c.l.b16 %v531
    %v548 = vunpack.c.l.b16 %v532
    %v549 = vunpack.c.l.b16 %v533
    %v550 = vpack.c.b16 %v543, %v542
    %v551 = vpack.c.b16 %v545, %v544
    %v552 = vpack.c.b16 %v547, %v546
    %v553 = vpack.c.b16 %v549, %v548
    %558 = vmatprep.subr.bf16.mxu0 0
    %559 = vmatpush1.bf16.msra.mxu0 0
    %560 = vmatprep.subr.bf16.mxu0 0
    %561 = vmatpush1.bf16.msra.mxu0 0
    %562 = vmatprep.subr.bf16.mxu0 0
    %563 = vmatpush1.bf16.msra.mxu0 0
    %564 = vmatprep.subr.bf16.mxu0 0
    %565 = vmatpush1.bf16.msra.mxu0 0
    %566 = vmatprep.subr.bf16.mxu0 0
    %567 = vmatpush1.bf16.msra.mxu0 %v553
    %568 = vmatprep.subr.bf16.mxu0 0
    %569 = vmatpush1.bf16.msra.mxu0 %v552
    %570 = vmatprep.subr.bf16.mxu0 0
    %571 = vmatpush1.bf16.msra.mxu0 %v551
    %572 = vmatprep.subr.bf16.mxu0 0
    %573 = vmatpush1.bf16.msra.mxu0 %v550
    %574 = vmatprep.subr.bf16.mxu0 0
    %575 = vmatpush2.bf16.msra.mxu0 0
    %576 = vmatprep.subr.bf16.mxu0 0
    %577 = vmatpush2.bf16.msra.mxu0 0
    %578 = vmatprep.subr.bf16.mxu0 0
    %579 = vmatpush2.bf16.msra.mxu0 0
    %580 = vmatprep.subr.bf16.mxu0 0
    %581 = vmatpush2.bf16.msra.mxu0 0
    %582 = vmatprep.subr.bf16.mxu0 0
    %583 = vmatpush2.bf16.msra.mxu0 0
    %584 = vmatprep.subr.bf16.mxu0 0
    %585 = vmatpush2.bf16.msra.mxu0 0
    %586 = vmatprep.subr.bf16.mxu0 0
    %587 = vmatpush2.bf16.msra.mxu0 0
    %588 = vmatprep.subr.bf16.mxu0 0
    %589 = vmatpush2.bf16.msra.mxu0 0
    %590 = vmatprep.mubr.bf16.mxu0 0
    %591 = vmatmul.mubr.bf16.gmra.mxu0 %v368
    %v592 = vpop.f32.mrf.mxu0
    %v593 = vadd.f32 0.0, %v592
    %v594 = vpop.f32.mrf.mxu0
    %v595 = vpop.f32.mrf.mxu0
    %v596 = vadd.f32 0.0, %v595
    %v597 = vpop.f32.mrf.mxu0
    %598 = vmatprep.mubr.bf16.mxu0 0
    %599 = vmatmul.mubr.bf16.gmra.mxu0 %v371
    %v600 = vpop.f32.mrf.mxu0
    %v601 = vadd.f32 0.0, %v600
    %v602 = vpop.f32.mrf.mxu0
    %v603 = vpop.f32.mrf.mxu0
    %v604 = vadd.f32 0.0, %v603
    %v605 = vpop.f32.mrf.mxu0
    %606 = vmatprep.mubr.bf16.mxu0 0
    %607 = vmatmul.mubr.bf16.gmra.mxu0 %v374
    %v608 = vpop.f32.mrf.mxu0
    %v609 = vadd.f32 0.0, %v608
    %v610 = vpop.f32.mrf.mxu0
    %v611 = vpop.f32.mrf.mxu0
    %v612 = vpop.f32.mrf.mxu0
    %613 = vdwg.mxu0
    %v614 = vpack.c.bf16 %v596, %v593
    %v615 = vpack.c.bf16 %v604, %v601
    %v616 = vpack.c.bf16 %v609, %v609
    %vm617 = vcmask 261120
    %v619 = vsel %vm617, %v432, 0
    %v622 = vsel %vm617, %v433, 0
    %v625 = vsel %vm617, %v434, 0
    %v628 = vsel %vm617, %v523, 0
    %v631 = vsel %vm617, %v524, 0
    %v634 = vsel %vm617, %v525, 0
    %636 = vmatprep.subr.bf16.mxu0 0
    %637 = vmatpush1.bf16.xpose.msra.mxu0 0
    %638 = vmatprep.subr.bf16.mxu0 0
    %639 = vmatpush1.bf16.xpose.msra.mxu0 0
    %640 = vmatprep.subr.bf16.mxu0 0
    %641 = vmatpush1.bf16.xpose.msra.mxu0 0
    %642 = vmatprep.subr.bf16.mxu0 0
    %643 = vmatpush1.bf16.xpose.msra.mxu0 0
    %644 = vmatprep.subr.bf16.mxu0 0
    %645 = vmatpush1.bf16.xpose.msra.mxu0 0
    %646 = vmatprep.subr.bf16.mxu0 0
    %647 = vmatpush1.bf16.xpose.msra.mxu0 %v634
    %648 = vmatprep.subr.bf16.mxu0 0
    %649 = vmatpush1.bf16.xpose.msra.mxu0 %v631
    %650 = vmatprep.subr.bf16.mxu0 0
    %651 = vmatpush1.bf16.xpose.msra.mxu0 %v628
    %652 = vmatprep.subr.bf16.mxu0 0
    %653 = vmatpush2.bf16.xpose.msra.mxu0 0
    %654 = vmatprep.subr.bf16.mxu0 0
    %655 = vmatpush2.bf16.xpose.msra.mxu0 0
    %656 = vmatprep.subr.bf16.mxu0 0
    %657 = vmatpush2.bf16.xpose.msra.mxu0 0
    %658 = vmatprep.subr.bf16.mxu0 0
    %659 = vmatpush2.bf16.xpose.msra.mxu0 0
    %660 = vmatprep.subr.bf16.mxu0 0
    %661 = vmatpush2.bf16.xpose.msra.mxu0 0
    %662 = vmatprep.subr.bf16.mxu0 0
    %663 = vmatpush2.bf16.xpose.msra.mxu0 0
    %664 = vmatprep.subr.bf16.mxu0 0
    %665 = vmatpush2.bf16.xpose.msra.mxu0 0
    %666 = vmatprep.subr.bf16.mxu0 0
    %667 = vmatpush2.bf16.xpose.msra.mxu0 0
    %668 = vmatprep.mubr.bf16.mxu0 0
    %669 = vmatmul.mubr.bf16.gmra.mxu0 %v619
    %v670 = vpop.f32.mrf.mxu0
    %v671 = vadd.f32 %v234, %v670
    %v672 = vpop.f32.mrf.mxu0
    %v673 = vpop.f32.mrf.mxu0
    %v674 = vadd.f32 %v235, %v673
    %v675 = vpop.f32.mrf.mxu0
    %676 = vmatprep.mubr.bf16.mxu0 0
    %677 = vmatmul.mubr.bf16.gmra.mxu0 %v622
    %v678 = vpop.f32.mrf.mxu0
    %v679 = vadd.f32 %v236, %v678
    %v680 = vpop.f32.mrf.mxu0
    %v681 = vpop.f32.mrf.mxu0
    %v682 = vadd.f32 %v237, %v681
    %v683 = vpop.f32.mrf.mxu0
    %684 = vmatprep.mubr.bf16.mxu0 0
    %685 = vmatmul.mubr.bf16.gmra.mxu0 %v625
    %v686 = vpop.f32.mrf.mxu0
    %v687 = vadd.f32 %v238, %v686
    %v688 = vpop.f32.mrf.mxu0
    %v689 = vpop.f32.mrf.mxu0
    %v690 = vpop.f32.mrf.mxu0
    %691 = vdwg.mxu0
    %vm692 = vcmask 277504
    %v693 = vsel %vm692, %v671, -inf
    %694 = vmax.xlane.f32.xlu0 %v693
    %v695 = vpop.xlane.xlu0 %694
    %v696 = vsel %vm692, %v674, -inf
    %697 = vmax.xlane.f32.xlu0 %v696
    %v698 = vpop.xlane.xlu0 %697
    %v699 = vsel %vm692, %v679, -inf
    %700 = vmax.xlane.f32.xlu0 %v699
    %v701 = vpop.xlane.xlu0 %700
    %v702 = vsel %vm692, %v682, -inf
    %703 = vmax.xlane.f32.xlu0 %v702
    %v704 = vpop.xlane.xlu0 %703
    %vm705 = vcmask 271360
    %v706 = vsel %vm705, %v687, -inf
    %707 = vmax.xlane.f32.xlu0 %v706
    %v708 = vpop.xlane.xlu0 %707
    %v709 = vsub.f32 %v671, %v695
    %v710 = vsub.f32 %v674, %v698
    %v711 = vsub.f32 %v679, %v701
    %v712 = vsub.f32 %v682, %v704
    %v713 = vsub.f32 %v687, %v708
    %v714 = vmul.f32 %v709, 1.442695
    %v715 = vpow.pop %v714
    %v716 = vmul.f32 %v710, 1.442695
    %v717 = vpow.pop %v716
    %v718 = vmul.f32 %v711, 1.442695
    %v719 = vpow.pop %v718
    %v720 = vmul.f32 %v712, 1.442695
    %v721 = vpow.pop %v720
    %v722 = vmul.f32 %v713, 1.442695
    %v723 = vpow.pop %v722
    %v724 = vsel %vm692, %v715, 0.0
    %725 = vadd.xlane.f32.xlu0 %v724
    %v726 = vpop.xlane.xlu0 %725
    %v727 = vsel %vm692, %v717, 0.0
    %728 = vadd.xlane.f32.xlu0 %v727
    %v729 = vpop.xlane.xlu0 %728
    %v730 = vsel %vm692, %v719, 0.0
    %731 = vadd.xlane.f32.xlu0 %v730
    %v732 = vpop.xlane.xlu0 %731
    %v733 = vsel %vm692, %v721, 0.0
    %734 = vadd.xlane.f32.xlu0 %v733
    %v735 = vpop.xlane.xlu0 %734
    %v736 = vsel %vm705, %v723, 0.0
    %737 = vadd.xlane.f32.xlu0 %v736
    %v738 = vpop.xlane.xlu0 %737
    %v739 = vrcp.pop %v726
    %v740 = vrcp.pop %v729
    %v741 = vrcp.pop %v732
    %v742 = vrcp.pop %v735
    %v743 = vrcp.pop %v738
    %v744 = vmul.f32 %v715, %v739
    %v745 = vmul.f32 %v717, %v740
    %v746 = vmul.f32 %v719, %v741
    %v747 = vmul.f32 %v721, %v742
    %v748 = vmul.f32 %v723, %v743
    %v749 = vpack.c.bf16 %v745, %v744
    %v750 = vpack.c.bf16 %v747, %v746
    %v751 = vpack.c.bf16 %v748, %v748
    %v753 = vsel %vm692, %v749, 0
    %v756 = vsel %vm692, %v750, 0
    %v759 = vsel %vm692, %v751, 0
    %vm761 = vcmask 1040384
    %v763 = vsel %vm761, %v616, 0
    %765 = vmatprep.subr.bf16.mxu0 0
    %766 = vmatpush1.bf16.msra.mxu0 0
    %767 = vmatprep.subr.bf16.mxu0 0
    %768 = vmatpush1.bf16.msra.mxu0 0
    %769 = vmatprep.subr.bf16.mxu0 0
    %770 = vmatpush1.bf16.msra.mxu0 0
    %771 = vmatprep.subr.bf16.mxu0 0
    %772 = vmatpush1.bf16.msra.mxu0 0
    %773 = vmatprep.subr.bf16.mxu0 0
    %774 = vmatpush1.bf16.msra.mxu0 0
    %775 = vmatprep.subr.bf16.mxu0 0
    %776 = vmatpush1.bf16.msra.mxu0 %v763
    %777 = vmatprep.subr.bf16.mxu0 0
    %778 = vmatpush1.bf16.msra.mxu0 %v615
    %779 = vmatprep.subr.bf16.mxu0 0
    %780 = vmatpush1.bf16.msra.mxu0 %v614
    %781 = vmatprep.subr.bf16.mxu0 0
    %782 = vmatpush2.bf16.msra.mxu0 0
    %783 = vmatprep.subr.bf16.mxu0 0
    %784 = vmatpush2.bf16.msra.mxu0 0
    %785 = vmatprep.subr.bf16.mxu0 0
    %786 = vmatpush2.bf16.msra.mxu0 0
    %787 = vmatprep.subr.bf16.mxu0 0
    %788 = vmatpush2.bf16.msra.mxu0 0
    %789 = vmatprep.subr.bf16.mxu0 0
    %790 = vmatpush2.bf16.msra.mxu0 0
    %791 = vmatprep.subr.bf16.mxu0 0
    %792 = vmatpush2.bf16.msra.mxu0 0
    %793 = vmatprep.subr.bf16.mxu0 0
    %794 = vmatpush2.bf16.msra.mxu0 0
    %795 = vmatprep.subr.bf16.mxu0 0
    %796 = vmatpush2.bf16.msra.mxu0 0
    %797 = vmatprep.mubr.bf16.mxu0 0
    %798 = vmatmul.mubr.bf16.gmra.mxu0 %v753
    %v799 = vpop.f32.mrf.mxu0
    %v800 = vadd.f32 0.0, %v799
    %v801 = vpop.f32.mrf.mxu0
    %v802 = vpop.f32.mrf.mxu0
    %v803 = vadd.f32 0.0, %v802
    %v804 = vpop.f32.mrf.mxu0
    %805 = vmatprep.mubr.bf16.mxu0 0
    %806 = vmatmul.mubr.bf16.gmra.mxu0 %v756
    %v807 = vpop.f32.mrf.mxu0
    %v808 = vadd.f32 0.0, %v807
    %v809 = vpop.f32.mrf.mxu0
    %v810 = vpop.f32.mrf.mxu0
    %v811 = vadd.f32 0.0, %v810
    %v812 = vpop.f32.mrf.mxu0
    %813 = vmatprep.mubr.bf16.mxu0 0
    %814 = vmatmul.mubr.bf16.gmra.mxu0 %v759
    %v815 = vpop.f32.mrf.mxu0
    %v816 = vadd.f32 0.0, %v815
    %v817 = vpop.f32.mrf.mxu0
    %v818 = vpop.f32.mrf.mxu0
    %v819 = vpop.f32.mrf.mxu0
    %820 = vdwg.mxu0
    %v822 = vlaneseq
    %v823 = vshrl.u32 %v822, 7
    %v824 = vsub.s32 0, %v823
    %v825 = vrot.slane %v334, %v824
    %v827 = vadd.f32 %v825, %v800
    %v828 = vadd.f32 %v825, %v803
    %v829 = vadd.f32 %v825, %v808
    %v830 = vadd.f32 %v825, %v811
    %v831 = vadd.f32 %v825, %v816
    %s832 = scalar_lea.vmem %s7, 32
    %v833 = vld [vmem:[%s832] sm:$0xf]
    %v834 = vld [vmem:[%s832 + $0x4] sm:$0xf]
    %v835 = vld [vmem:[%s832 + $0x8] sm:$0xf]
    %v836 = vld [vmem:[%s832 + $0xc] sm:$0xf]
    %v837 = vld [vmem:[%s832 + $0x10] sm:$0xf]
    %v838 = vld [vmem:[%s832 + $0x14] sm:$0xf]
    %v839 = vld [vmem:[%s832 + $0x18] sm:$0xf]
    %v840 = vld [vmem:[%s832 + $0x1c] sm:$0xf]
    %v849 = vunpack.c.l.b16 %v833
    %v850 = vunpack.c.l.b16 %v834
    %v851 = vunpack.c.l.b16 %v835
    %v852 = vunpack.c.l.b16 %v836
    %v853 = vunpack.c.l.b16 %v837
    %v854 = vunpack.c.l.b16 %v838
    %v855 = vunpack.c.l.b16 %v839
    %v856 = vunpack.c.l.b16 %v840
    %v857 = vpack.c.b16 %v850, %v849
    %v858 = vpack.c.b16 %v852, %v851
    %v859 = vpack.c.b16 %v854, %v853
    %v860 = vpack.c.b16 %v856, %v855
    %865 = vmatprep.subr.bf16.mxu0 0
    %866 = vmatpush1.bf16.msra.mxu0 0
    %867 = vmatprep.subr.bf16.mxu0 0
    %868 = vmatpush1.bf16.msra.mxu0 0
    %869 = vmatprep.subr.bf16.mxu0 0
    %870 = vmatpush1.bf16.msra.mxu0 0
    %871 = vmatprep.subr.bf16.mxu0 0
    %872 = vmatpush1.bf16.msra.mxu0 0
    %873 = vmatprep.subr.bf16.mxu0 0
    %874 = vmatpush1.bf16.msra.mxu0 %v860
    %875 = vmatprep.subr.bf16.mxu0 0
    %876 = vmatpush1.bf16.msra.mxu0 %v859
    %877 = vmatprep.subr.bf16.mxu0 0
    %878 = vmatpush1.bf16.msra.mxu0 %v858
    %879 = vmatprep.subr.bf16.mxu0 0
    %880 = vmatpush1.bf16.msra.mxu0 %v857
    %881 = vmatprep.subr.bf16.mxu0 0
    %882 = vmatpush2.bf16.msra.mxu0 0
    %883 = vmatprep.subr.bf16.mxu0 0
    %884 = vmatpush2.bf16.msra.mxu0 0
    %885 = vmatprep.subr.bf16.mxu0 0
    %886 = vmatpush2.bf16.msra.mxu0 0
    %887 = vmatprep.subr.bf16.mxu0 0
    %888 = vmatpush2.bf16.msra.mxu0 0
    %889 = vmatprep.subr.bf16.mxu0 0
    %890 = vmatpush2.bf16.msra.mxu0 0
    %891 = vmatprep.subr.bf16.mxu0 0
    %892 = vmatpush2.bf16.msra.mxu0 0
    %893 = vmatprep.subr.bf16.mxu0 0
    %894 = vmatpush2.bf16.msra.mxu0 0
    %895 = vmatprep.subr.bf16.mxu0 0
    %896 = vmatpush2.bf16.msra.mxu0 0
    %897 = vmatprep.mubr.bf16.mxu0 0
    %898 = vmatmul.mubr.bf16.gmra.mxu0 %v368
    %v899 = vpop.f32.mrf.mxu0
    %v900 = vadd.f32 0.0, %v899
    %v901 = vpop.f32.mrf.mxu0
    %v902 = vpop.f32.mrf.mxu0
    %v903 = vadd.f32 0.0, %v902
    %v904 = vpop.f32.mrf.mxu0
    %905 = vmatprep.mubr.bf16.mxu0 0
    %906 = vmatmul.mubr.bf16.gmra.mxu0 %v371
    %v907 = vpop.f32.mrf.mxu0
    %v908 = vadd.f32 0.0, %v907
    %v909 = vpop.f32.mrf.mxu0
    %v910 = vpop.f32.mrf.mxu0
    %v911 = vadd.f32 0.0, %v910
    %v912 = vpop.f32.mrf.mxu0
    %913 = vmatprep.mubr.bf16.mxu0 0
    %914 = vmatmul.mubr.bf16.gmra.mxu0 %v374
    %v915 = vpop.f32.mrf.mxu0
    %v916 = vadd.f32 0.0, %v915
    %v917 = vpop.f32.mrf.mxu0
    %v918 = vpop.f32.mrf.mxu0
    %v919 = vpop.f32.mrf.mxu0
    %920 = vdwg.mxu0
    %v921 = vpack.c.bf16 %v903, %v900
    %v922 = vpack.c.bf16 %v911, %v908
    %v923 = vpack.c.bf16 %v916, %v916
    %s924 = scalar_lea.vmem %s8, 32
    %v925 = vld [vmem:[%s924] sm:$0xf]
    %v926 = vld [vmem:[%s924 + $0x4] sm:$0xf]
    %v927 = vld [vmem:[%s924 + $0x8] sm:$0xf]
    %v928 = vld [vmem:[%s924 + $0xc] sm:$0xf]
    %v929 = vld [vmem:[%s924 + $0x10] sm:$0xf]
    %v930 = vld [vmem:[%s924 + $0x14] sm:$0xf]
    %v931 = vld [vmem:[%s924 + $0x18] sm:$0xf]
    %v932 = vld [vmem:[%s924 + $0x1c] sm:$0xf]
    %v941 = vunpack.c.l.b16 %v925
    %v942 = vunpack.c.l.b16 %v926
    %v943 = vunpack.c.l.b16 %v927
    %v944 = vunpack.c.l.b16 %v928
    %v945 = vunpack.c.l.b16 %v929
    %v946 = vunpack.c.l.b16 %v930
    %v947 = vunpack.c.l.b16 %v931
    %v948 = vunpack.c.l.b16 %v932
    %v949 = vpack.c.b16 %v942, %v941
    %v950 = vpack.c.b16 %v944, %v943
    %v951 = vpack.c.b16 %v946, %v945
    %v952 = vpack.c.b16 %v948, %v947
    %957 = vmatprep.subr.bf16.mxu0 0
    %958 = vmatpush1.bf16.msra.mxu0 0
    %959 = vmatprep.subr.bf16.mxu0 0
    %960 = vmatpush1.bf16.msra.mxu0 0
    %961 = vmatprep.subr.bf16.mxu0 0
    %962 = vmatpush1.bf16.msra.mxu0 0
    %963 = vmatprep.subr.bf16.mxu0 0
    %964 = vmatpush1.bf16.msra.mxu0 0
    %965 = vmatprep.subr.bf16.mxu0 0
    %966 = vmatpush1.bf16.msra.mxu0 %v952
    %967 = vmatprep.subr.bf16.mxu0 0
    %968 = vmatpush1.bf16.msra.mxu0 %v951
    %969 = vmatprep.subr.bf16.mxu0 0
    %970 = vmatpush1.bf16.msra.mxu0 %v950
    %971 = vmatprep.subr.bf16.mxu0 0
    %972 = vmatpush1.bf16.msra.mxu0 %v949
    %973 = vmatprep.subr.bf16.mxu0 0
    %974 = vmatpush2.bf16.msra.mxu0 0
    %975 = vmatprep.subr.bf16.mxu0 0
    %976 = vmatpush2.bf16.msra.mxu0 0
    %977 = vmatprep.subr.bf16.mxu0 0
    %978 = vmatpush2.bf16.msra.mxu0 0
    %979 = vmatprep.subr.bf16.mxu0 0
    %980 = vmatpush2.bf16.msra.mxu0 0
    %981 = vmatprep.subr.bf16.mxu0 0
    %982 = vmatpush2.bf16.msra.mxu0 0
    %983 = vmatprep.subr.bf16.mxu0 0
    %984 = vmatpush2.bf16.msra.mxu0 0
    %985 = vmatprep.subr.bf16.mxu0 0
    %986 = vmatpush2.bf16.msra.mxu0 0
    %987 = vmatprep.subr.bf16.mxu0 0
    %988 = vmatpush2.bf16.msra.mxu0 0
    %989 = vmatprep.mubr.bf16.mxu0 0
    %990 = vmatmul.mubr.bf16.gmra.mxu0 %v368
    %v991 = vpop.f32.mrf.mxu0
    %v992 = vadd.f32 0.0, %v991
    %v993 = vpop.f32.mrf.mxu0
    %v994 = vpop.f32.mrf.mxu0
    %v995 = vadd.f32 0.0, %v994
    %v996 = vpop.f32.mrf.mxu0
    %997 = vmatprep.mubr.bf16.mxu0 0
    %998 = vmatmul.mubr.bf16.gmra.mxu0 %v371
    %v999 = vpop.f32.mrf.mxu0
    %v1000 = vadd.f32 0.0, %v999
    %v1001 = vpop.f32.mrf.mxu0
    %v1002 = vpop.f32.mrf.mxu0
    %v1003 = vadd.f32 0.0, %v1002
    %v1004 = vpop.f32.mrf.mxu0
    %1005 = vmatprep.mubr.bf16.mxu0 0
    %1006 = vmatmul.mubr.bf16.gmra.mxu0 %v374
    %v1007 = vpop.f32.mrf.mxu0
    %v1008 = vadd.f32 0.0, %v1007
    %v1009 = vpop.f32.mrf.mxu0
    %v1010 = vpop.f32.mrf.mxu0
    %v1011 = vpop.f32.mrf.mxu0
    %1012 = vdwg.mxu0
    %v1013 = vpack.c.bf16 %v995, %v992
    %v1014 = vpack.c.bf16 %v1003, %v1000
    %v1015 = vpack.c.bf16 %v1008, %v1008
    %s1016 = scalar_lea.vmem %s9, 32
    %v1017 = vld [vmem:[%s1016] sm:$0xf]
    %v1018 = vld [vmem:[%s1016 + $0x4] sm:$0xf]
    %v1019 = vld [vmem:[%s1016 + $0x8] sm:$0xf]
    %v1020 = vld [vmem:[%s1016 + $0xc] sm:$0xf]
    %v1021 = vld [vmem:[%s1016 + $0x10] sm:$0xf]
    %v1022 = vld [vmem:[%s1016 + $0x14] sm:$0xf]
    %v1023 = vld [vmem:[%s1016 + $0x18] sm:$0xf]
    %v1024 = vld [vmem:[%s1016 + $0x1c] sm:$0xf]
    %v1033 = vunpack.c.l.b16 %v1017
    %v1034 = vunpack.c.l.b16 %v1018
    %v1035 = vunpack.c.l.b16 %v1019
    %v1036 = vunpack.c.l.b16 %v1020
    %v1037 = vunpack.c.l.b16 %v1021
    %v1038 = vunpack.c.l.b16 %v1022
    %v1039 = vunpack.c.l.b16 %v1023
    %v1040 = vunpack.c.l.b16 %v1024
    %v1041 = vpack.c.b16 %v1034, %v1033
    %v1042 = vpack.c.b16 %v1036, %v1035
    %v1043 = vpack.c.b16 %v1038, %v1037
    %v1044 = vpack.c.b16 %v1040, %v1039
    %1049 = vmatprep.subr.bf16.mxu0 0
    %1050 = vmatpush1.bf16.msra.mxu0 0
    %1051 = vmatprep.subr.bf16.mxu0 0
    %1052 = vmatpush1.bf16.msra.mxu0 0
    %1053 = vmatprep.subr.bf16.mxu0 0
    %1054 = vmatpush1.bf16.msra.mxu0 0
    %1055 = vmatprep.subr.bf16.mxu0 0
    %1056 = vmatpush1.bf16.msra.mxu0 0
    %1057 = vmatprep.subr.bf16.mxu0 0
    %1058 = vmatpush1.bf16.msra.mxu0 %v1044
    %1059 = vmatprep.subr.bf16.mxu0 0
    %1060 = vmatpush1.bf16.msra.mxu0 %v1043
    %1061 = vmatprep.subr.bf16.mxu0 0
    %1062 = vmatpush1.bf16.msra.mxu0 %v1042
    %1063 = vmatprep.subr.bf16.mxu0 0
    %1064 = vmatpush1.bf16.msra.mxu0 %v1041
    %1065 = vmatprep.subr.bf16.mxu0 0
    %1066 = vmatpush2.bf16.msra.mxu0 0
    %1067 = vmatprep.subr.bf16.mxu0 0
    %1068 = vmatpush2.bf16.msra.mxu0 0
    %1069 = vmatprep.subr.bf16.mxu0 0
    %1070 = vmatpush2.bf16.msra.mxu0 0
    %1071 = vmatprep.subr.bf16.mxu0 0
    %1072 = vmatpush2.bf16.msra.mxu0 0
    %1073 = vmatprep.subr.bf16.mxu0 0
    %1074 = vmatpush2.bf16.msra.mxu0 0
    %1075 = vmatprep.subr.bf16.mxu0 0
    %1076 = vmatpush2.bf16.msra.mxu0 0
    %1077 = vmatprep.subr.bf16.mxu0 0
    %1078 = vmatpush2.bf16.msra.mxu0 0
    %1079 = vmatprep.subr.bf16.mxu0 0
    %1080 = vmatpush2.bf16.msra.mxu0 0
    %1081 = vmatprep.mubr.bf16.mxu0 0
    %1082 = vmatmul.mubr.bf16.gmra.mxu0 %v368
    %v1083 = vpop.f32.mrf.mxu0
    %v1084 = vadd.f32 0.0, %v1083
    %v1085 = vpop.f32.mrf.mxu0
    %v1086 = vpop.f32.mrf.mxu0
    %v1087 = vadd.f32 0.0, %v1086
    %v1088 = vpop.f32.mrf.mxu0
    %1089 = vmatprep.mubr.bf16.mxu0 0
    %1090 = vmatmul.mubr.bf16.gmra.mxu0 %v371
    %v1091 = vpop.f32.mrf.mxu0
    %v1092 = vadd.f32 0.0, %v1091
    %v1093 = vpop.f32.mrf.mxu0
    %v1094 = vpop.f32.mrf.mxu0
    %v1095 = vadd.f32 0.0, %v1094
    %v1096 = vpop.f32.mrf.mxu0
    %1097 = vmatprep.mubr.bf16.mxu0 0
    %1098 = vmatmul.mubr.bf16.gmra.mxu0 %v374
    %v1099 = vpop.f32.mrf.mxu0
    %v1100 = vadd.f32 0.0, %v1099
    %v1101 = vpop.f32.mrf.mxu0
    %v1102 = vpop.f32.mrf.mxu0
    %v1103 = vpop.f32.mrf.mxu0
    %1104 = vdwg.mxu0
    %v1105 = vpack.c.bf16 %v1087, %v1084
    %v1106 = vpack.c.bf16 %v1095, %v1092
    %v1107 = vpack.c.bf16 %v1100, %v1100
    %v1109 = vsel %vm617, %v921, 0
    %v1112 = vsel %vm617, %v922, 0
    %v1115 = vsel %vm617, %v923, 0
    %v1118 = vsel %vm617, %v1013, 0
    %v1121 = vsel %vm617, %v1014, 0
    %v1124 = vsel %vm617, %v1015, 0
    %1126 = vmatprep.subr.bf16.mxu0 0
    %1127 = vmatpush1.bf16.xpose.msra.mxu0 0
    %1128 = vmatprep.subr.bf16.mxu0 0
    %1129 = vmatpush1.bf16.xpose.msra.mxu0 0
    %1130 = vmatprep.subr.bf16.mxu0 0
    %1131 = vmatpush1.bf16.xpose.msra.mxu0 0
    %1132 = vmatprep.subr.bf16.mxu0 0
    %1133 = vmatpush1.bf16.xpose.msra.mxu0 0
    %1134 = vmatprep.subr.bf16.mxu0 0
    %1135 = vmatpush1.bf16.xpose.msra.mxu0 0
    %1136 = vmatprep.subr.bf16.mxu0 0
    %1137 = vmatpush1.bf16.xpose.msra.mxu0 %v1124
    %1138 = vmatprep.subr.bf16.mxu0 0
    %1139 = vmatpush1.bf16.xpose.msra.mxu0 %v1121
    %1140 = vmatprep.subr.bf16.mxu0 0
    %1141 = vmatpush1.bf16.xpose.msra.mxu0 %v1118
    %1142 = vmatprep.subr.bf16.mxu0 0
    %1143 = vmatpush2.bf16.xpose.msra.mxu0 0
    %1144 = vmatprep.subr.bf16.mxu0 0
    %1145 = vmatpush2.bf16.xpose.msra.mxu0 0
    %1146 = vmatprep.subr.bf16.mxu0 0
    %1147 = vmatpush2.bf16.xpose.msra.mxu0 0
    %1148 = vmatprep.subr.bf16.mxu0 0
    %1149 = vmatpush2.bf16.xpose.msra.mxu0 0
    %1150 = vmatprep.subr.bf16.mxu0 0
    %1151 = vmatpush2.bf16.xpose.msra.mxu0 0
    %1152 = vmatprep.subr.bf16.mxu0 0
    %1153 = vmatpush2.bf16.xpose.msra.mxu0 0
    %1154 = vmatprep.subr.bf16.mxu0 0
    %1155 = vmatpush2.bf16.xpose.msra.mxu0 0
    %1156 = vmatprep.subr.bf16.mxu0 0
    %1157 = vmatpush2.bf16.xpose.msra.mxu0 0
    %1158 = vmatprep.mubr.bf16.mxu0 0
    %1159 = vmatmul.mubr.bf16.gmra.mxu0 %v1109
    %v1160 = vpop.f32.mrf.mxu0
    %v1161 = vadd.f32 %v234, %v1160
    %v1162 = vpop.f32.mrf.mxu0
    %v1163 = vpop.f32.mrf.mxu0
    %v1164 = vadd.f32 %v235, %v1163
    %v1165 = vpop.f32.mrf.mxu0
    %1166 = vmatprep.mubr.bf16.mxu0 0
    %1167 = vmatmul.mubr.bf16.gmra.mxu0 %v1112
    %v1168 = vpop.f32.mrf.mxu0
    %v1169 = vadd.f32 %v236, %v1168
    %v1170 = vpop.f32.mrf.mxu0
    %v1171 = vpop.f32.mrf.mxu0
    %v1172 = vadd.f32 %v237, %v1171
    %v1173 = vpop.f32.mrf.mxu0
    %1174 = vmatprep.mubr.bf16.mxu0 0
    %1175 = vmatmul.mubr.bf16.gmra.mxu0 %v1115
    %v1176 = vpop.f32.mrf.mxu0
    %v1177 = vadd.f32 %v238, %v1176
    %v1178 = vpop.f32.mrf.mxu0
    %v1179 = vpop.f32.mrf.mxu0
    %v1180 = vpop.f32.mrf.mxu0
    %1181 = vdwg.mxu0
    %v1182 = vsel %vm692, %v1161, -inf
    %1183 = vmax.xlane.f32.xlu0 %v1182
    %v1184 = vpop.xlane.xlu0 %1183
    %v1185 = vsel %vm692, %v1164, -inf
    %1186 = vmax.xlane.f32.xlu0 %v1185
    %v1187 = vpop.xlane.xlu0 %1186
    %v1188 = vsel %vm692, %v1169, -inf
    %1189 = vmax.xlane.f32.xlu0 %v1188
    %v1190 = vpop.xlane.xlu0 %1189
    %v1191 = vsel %vm692, %v1172, -inf
    %1192 = vmax.xlane.f32.xlu0 %v1191
    %v1193 = vpop.xlane.xlu0 %1192
    %v1194 = vsel %vm705, %v1177, -inf
    %1195 = vmax.xlane.f32.xlu0 %v1194
    %v1196 = vpop.xlane.xlu0 %1195
    %v1197 = vsub.f32 %v1161, %v1184
    %v1198 = vsub.f32 %v1164, %v1187
    %v1199 = vsub.f32 %v1169, %v1190
    %v1200 = vsub.f32 %v1172, %v1193
    %v1201 = vsub.f32 %v1177, %v1196
    %v1202 = vmul.f32 %v1197, 1.442695
    %v1203 = vpow.pop %v1202
    %v1204 = vmul.f32 %v1198, 1.442695
    %v1205 = vpow.pop %v1204
    %v1206 = vmul.f32 %v1199, 1.442695
    %v1207 = vpow.pop %v1206
    %v1208 = vmul.f32 %v1200, 1.442695
    %v1209 = vpow.pop %v1208
    %v1210 = vmul.f32 %v1201, 1.442695
    %v1211 = vpow.pop %v1210
    %v1212 = vsel %vm692, %v1203, 0.0
    %1213 = vadd.xlane.f32.xlu0 %v1212
    %v1214 = vpop.xlane.xlu0 %1213
    %v1215 = vsel %vm692, %v1205, 0.0
    %1216 = vadd.xlane.f32.xlu0 %v1215
    %v1217 = vpop.xlane.xlu0 %1216
    %v1218 = vsel %vm692, %v1207, 0.0
    %1219 = vadd.xlane.f32.xlu0 %v1218
    %v1220 = vpop.xlane.xlu0 %1219
    %v1221 = vsel %vm692, %v1209, 0.0
    %1222 = vadd.xlane.f32.xlu0 %v1221
    %v1223 = vpop.xlane.xlu0 %1222
    %v1224 = vsel %vm705, %v1211, 0.0
    %1225 = vadd.xlane.f32.xlu0 %v1224
    %v1226 = vpop.xlane.xlu0 %1225
    %v1227 = vrcp.pop %v1214
    %v1228 = vrcp.pop %v1217
    %v1229 = vrcp.pop %v1220
    %v1230 = vrcp.pop %v1223
    %v1231 = vrcp.pop %v1226
    %v1232 = vmul.f32 %v1203, %v1227
    %v1233 = vmul.f32 %v1205, %v1228
    %v1234 = vmul.f32 %v1207, %v1229
    %v1235 = vmul.f32 %v1209, %v1230
    %v1236 = vmul.f32 %v1211, %v1231
    %v1237 = vpack.c.bf16 %v1233, %v1232
    %v1238 = vpack.c.bf16 %v1235, %v1234
    %v1239 = vpack.c.bf16 %v1236, %v1236
    %v1241 = vsel %vm692, %v1237, 0
    %v1244 = vsel %vm692, %v1238, 0
    %v1247 = vsel %vm692, %v1239, 0
    %v1250 = vsel %vm761, %v1107, 0
    %1252 = vmatprep.subr.bf16.mxu0 0
    %1253 = vmatpush1.bf16.msra.mxu0 0
    %1254 = vmatprep.subr.bf16.mxu0 0
    %1255 = vmatpush1.bf16.msra.mxu0 0
    %1256 = vmatprep.subr.bf16.mxu0 0
    %1257 = vmatpush1.bf16.msra.mxu0 0
    %1258 = vmatprep.subr.bf16.mxu0 0
    %1259 = vmatpush1.bf16.msra.mxu0 0
    %1260 = vmatprep.subr.bf16.mxu0 0
    %1261 = vmatpush1.bf16.msra.mxu0 0
    %1262 = vmatprep.subr.bf16.mxu0 0
    %1263 = vmatpush1.bf16.msra.mxu0 %v1250
    %1264 = vmatprep.subr.bf16.mxu0 0
    %1265 = vmatpush1.bf16.msra.mxu0 %v1106
    %1266 = vmatprep.subr.bf16.mxu0 0
    %1267 = vmatpush1.bf16.msra.mxu0 %v1105
    %1268 = vmatprep.subr.bf16.mxu0 0
    %1269 = vmatpush2.bf16.msra.mxu0 0
    %1270 = vmatprep.subr.bf16.mxu0 0
    %1271 = vmatpush2.bf16.msra.mxu0 0
    %1272 = vmatprep.subr.bf16.mxu0 0
    %1273 = vmatpush2.bf16.msra.mxu0 0
    %1274 = vmatprep.subr.bf16.mxu0 0
    %1275 = vmatpush2.bf16.msra.mxu0 0
    %1276 = vmatprep.subr.bf16.mxu0 0
    %1277 = vmatpush2.bf16.msra.mxu0 0
    %1278 = vmatprep.subr.bf16.mxu0 0
    %1279 = vmatpush2.bf16.msra.mxu0 0
    %1280 = vmatprep.subr.bf16.mxu0 0
    %1281 = vmatpush2.bf16.msra.mxu0 0
    %1282 = vmatprep.subr.bf16.mxu0 0
    %1283 = vmatpush2.bf16.msra.mxu0 0
    %1284 = vmatprep.mubr.bf16.mxu0 0
    %1285 = vmatmul.mubr.bf16.gmra.mxu0 %v1241
    %v1286 = vpop.f32.mrf.mxu0
    %v1287 = vadd.f32 0.0, %v1286
    %v1288 = vpop.f32.mrf.mxu0
    %v1289 = vpop.f32.mrf.mxu0
    %v1290 = vadd.f32 0.0, %v1289
    %v1291 = vpop.f32.mrf.mxu0
    %1292 = vmatprep.mubr.bf16.mxu0 0
    %1293 = vmatmul.mubr.bf16.gmra.mxu0 %v1244
    %v1294 = vpop.f32.mrf.mxu0
    %v1295 = vadd.f32 0.0, %v1294
    %v1296 = vpop.f32.mrf.mxu0
    %v1297 = vpop.f32.mrf.mxu0
    %v1298 = vadd.f32 0.0, %v1297
    %v1299 = vpop.f32.mrf.mxu0
    %1300 = vmatprep.mubr.bf16.mxu0 0
    %1301 = vmatmul.mubr.bf16.gmra.mxu0 %v1247
    %v1302 = vpop.f32.mrf.mxu0
    %v1303 = vadd.f32 0.0, %v1302
    %v1304 = vpop.f32.mrf.mxu0
    %v1305 = vpop.f32.mrf.mxu0
    %v1306 = vpop.f32.mrf.mxu0
    %1307 = vdwg.mxu0
    %v1308 = vadd.f32 %v827, %v1287
    %v1309 = vadd.f32 %v828, %v1290
    %v1310 = vadd.f32 %v829, %v1295
    %v1311 = vadd.f32 %v830, %v1298
    %v1312 = vadd.f32 %v831, %v1303
    %v1313 = vadd.f32 %v213, %v1308
    %v1314 = vadd.f32 %v216, %v1309
    %v1315 = vadd.f32 %v221, %v1310
    %v1316 = vadd.f32 %v224, %v1311
    %v1317 = vadd.f32 %v229, %v1312
    %v1318 = vsel %vm241, %v1313, 0.0
    %1319 = vadd.xlane.f32.xlu0 %v1318
    %v1320 = vpop.xlane.xlu0 %1319
    %v1321 = vsel %vm241, %v1314, 0.0
    %1322 = vadd.xlane.f32.xlu0 %v1321
    %v1323 = vpop.xlane.xlu0 %1322
    %v1324 = vsel %vm241, %v1315, 0.0
    %1325 = vadd.xlane.f32.xlu0 %v1324
    %v1326 = vpop.xlane.xlu0 %1325
    %v1327 = vsel %vm241, %v1316, 0.0
    %1328 = vadd.xlane.f32.xlu0 %v1327
    %v1329 = vpop.xlane.xlu0 %1328
    %v1330 = vsel %vm254, %v1317, 0.0
    %1331 = vadd.xlane.f32.xlu0 %v1330
    %v1332 = vpop.xlane.xlu0 %1331
    %v1333 = vmul.f32 %v1320, %v258
    %v1334 = vmul.f32 %v1323, %v258
    %v1335 = vmul.f32 %v1326, %v258
    %v1336 = vmul.f32 %v1329, %v258
    %v1337 = vmul.f32 %v1332, %v258
    %v1338 = vsub.f32 %v1313, %v1333
    %v1339 = vsub.f32 %v1314, %v1334
    %v1340 = vsub.f32 %v1315, %v1335
    %v1341 = vsub.f32 %v1316, %v1336
    %v1342 = vsub.f32 %v1317, %v1337
    %v1343 = vmul.f32 %v1338, %v1338
    %v1344 = vmul.f32 %v1339, %v1339
    %v1345 = vmul.f32 %v1340, %v1340
    %v1346 = vmul.f32 %v1341, %v1341
    %v1347 = vmul.f32 %v1342, %v1342
    %v1348 = vsel %vm241, %v1343, 0.0
    %1349 = vadd.xlane.f32.xlu0 %v1348
    %v1350 = vpop.xlane.xlu0 %1349
    %v1351 = vsel %vm241, %v1344, 0.0
    %1352 = vadd.xlane.f32.xlu0 %v1351
    %v1353 = vpop.xlane.xlu0 %1352
    %v1354 = vsel %vm241, %v1345, 0.0
    %1355 = vadd.xlane.f32.xlu0 %v1354
    %v1356 = vpop.xlane.xlu0 %1355
    %v1357 = vsel %vm241, %v1346, 0.0
    %1358 = vadd.xlane.f32.xlu0 %v1357
    %v1359 = vpop.xlane.xlu0 %1358
    %v1360 = vsel %vm254, %v1347, 0.0
    %1361 = vadd.xlane.f32.xlu0 %v1360
    %v1362 = vpop.xlane.xlu0 %1361
    %v1363 = vmul.f32 %v1350, %v258
    %v1364 = vmul.f32 %v1353, %v258
    %v1365 = vmul.f32 %v1356, %v258
    %v1366 = vmul.f32 %v1359, %v258
    %v1367 = vmul.f32 %v1362, %v258
    %v1368 = vadd.f32 %v1363, 1e-05
    %v1369 = vadd.f32 %v1364, 1e-05
    %v1370 = vadd.f32 %v1365, 1e-05
    %v1371 = vadd.f32 %v1366, 1e-05
    %v1372 = vadd.f32 %v1367, 1e-05
    %v1373 = vrsqrt.pop %v1368
    %v1374 = vrsqrt.pop %v1369
    %v1375 = vrsqrt.pop %v1370
    %v1376 = vrsqrt.pop %v1371
    %v1377 = vrsqrt.pop %v1372
    %v1378 = vmul.f32 %v1338, %v1373
    %v1379 = vmul.f32 %v1339, %v1374
    %v1380 = vmul.f32 %v1340, %v1375
    %v1381 = vmul.f32 %v1341, %v1376
    %v1382 = vmul.f32 %v1342, %v1377
    %v1383 = vpack.c.bf16 %v1379, %v1378
    %v1384 = vpack.c.bf16 %v1381, %v1380
    %v1385 = vpack.c.bf16 %v1382, %v1382
    %v1386 = vld [vmem:[%s11] sm:$0xf]
    %v1387 = vld [vmem:[%s11 + $0x4] sm:$0xf]
    %v1388 = vld [vmem:[%s11 + $0x8] sm:$0xf]
    %v1389 = vld [vmem:[%s11 + $0xc] sm:$0xf]
    %v1390 = vld [vmem:[%s11 + $0x10] sm:$0xf]
    %v1391 = vld [vmem:[%s11 + $0x14] sm:$0xf]
    %v1392 = vld [vmem:[%s11 + $0x18] sm:$0xf]
    %v1393 = vld [vmem:[%s11 + $0x1c] sm:$0xf]
    %v1394 = vld [vmem:[%s12] sm:$0x1]
    %v1396 = vlaneseq
    %v1397 = vshrl.u32 %v1396, 7
    %v1398 = vsub.s32 0, %v1397
    %v1399 = vrot.slane %v1394, %v1398
    %v1409 = vunpack.c.l.b16 %v1386
    %v1410 = vunpack.c.l.b16 %v1387
    %v1411 = vunpack.c.l.b16 %v1388
    %v1412 = vunpack.c.l.b16 %v1389
    %v1413 = vunpack.c.l.b16 %v1390
    %v1414 = vunpack.c.l.b16 %v1391
    %v1415 = vunpack.c.l.b16 %v1392
    %v1416 = vunpack.c.l.b16 %v1393
    %v1417 = vpack.c.b16 %v1410, %v1409
    %v1418 = vpack.c.b16 %v1412, %v1411
    %v1419 = vpack.c.b16 %v1414, %v1413
    %v1420 = vpack.c.b16 %v1416, %v1415
    %v1426 = vsel %vm241, %v1383, 0
    %v1429 = vsel %vm241, %v1384, 0
    %v1432 = vsel %vm241, %v1385, 0
    %1434 = vmatprep.subr.bf16.mxu0 0
    %1435 = vmatpush1.bf16.msra.mxu0 0
    %1436 = vmatprep.subr.bf16.mxu0 0
    %1437 = vmatpush1.bf16.msra.mxu0 0
    %1438 = vmatprep.subr.bf16.mxu0 0
    %1439 = vmatpush1.bf16.msra.mxu0 0
    %1440 = vmatprep.subr.bf16.mxu0 0
    %1441 = vmatpush1.bf16.msra.mxu0 0
    %1442 = vmatprep.subr.bf16.mxu0 0
    %1443 = vmatpush1.bf16.msra.mxu0 %v1420
    %1444 = vmatprep.subr.bf16.mxu0 0
    %1445 = vmatpush1.bf16.msra.mxu0 %v1419
    %1446 = vmatprep.subr.bf16.mxu0 0
    %1447 = vmatpush1.bf16.msra.mxu0 %v1418
    %1448 = vmatprep.subr.bf16.mxu0 0
    %1449 = vmatpush1.bf16.msra.mxu0 %v1417
    %1450 = vmatprep.subr.bf16.mxu0 0
    %1451 = vmatpush2.bf16.msra.mxu0 0
    %1452 = vmatprep.subr.bf16.mxu0 0
    %1453 = vmatpush2.bf16.msra.mxu0 0
    %1454 = vmatprep.subr.bf16.mxu0 0
    %1455 = vmatpush2.bf16.msra.mxu0 0
    %1456 = vmatprep.subr.bf16.mxu0 0
    %1457 = vmatpush2.bf16.msra.mxu0 0
    %1458 = vmatprep.subr.bf16.mxu0 0
    %1459 = vmatpush2.bf16.msra.mxu0 0
    %1460 = vmatprep.subr.bf16.mxu0 0
    %1461 = vmatpush2.bf16.msra.mxu0 0
    %1462 = vmatprep.subr.bf16.mxu0 0
    %1463 = vmatpush2.bf16.msra.mxu0 0
    %1464 = vmatprep.subr.bf16.mxu0 0
    %1465 = vmatpush2.bf16.msra.mxu0 0
    %1466 = vmatprep.mubr.bf16.mxu0 0
    %1467 = vmatmul.mubr.bf16.gmra.mxu0 %v1426
    %v1468 = vpop.f32.mrf.mxu0
    %v1469 = vadd.f32 %v1399, %v1468
    %v1470 = vpop.f32.mrf.mxu0
    %v1471 = vpop.f32.mrf.mxu0
    %v1472 = vadd.f32 %v1399, %v1471
    %v1473 = vpop.f32.mrf.mxu0
    %1474 = vmatprep.mubr.bf16.mxu0 0
    %1475 = vmatmul.mubr.bf16.gmra.mxu0 %v1429
    %v1476 = vpop.f32.mrf.mxu0
    %v1477 = vadd.f32 %v1399, %v1476
    %v1478 = vpop.f32.mrf.mxu0
    %v1479 = vpop.f32.mrf.mxu0
    %v1480 = vadd.f32 %v1399, %v1479
    %v1481 = vpop.f32.mrf.mxu0
    %1482 = vmatprep.mubr.bf16.mxu0 0
    %1483 = vmatmul.mubr.bf16.gmra.mxu0 %v1432
    %v1484 = vpop.f32.mrf.mxu0
    %v1485 = vadd.f32 %v1399, %v1484
    %v1486 = vpop.f32.mrf.mxu0
    %v1487 = vpop.f32.mrf.mxu0
    %v1488 = vpop.f32.mrf.mxu0
    %1489 = vdwg.mxu0
    %v1490 = vmul.f32 %v1469, %v1469
    %v1491 = vmul.f32 %v1472, %v1472
    %v1492 = vmul.f32 %v1477, %v1477
    %v1493 = vmul.f32 %v1480, %v1480
    %v1494 = vmul.f32 %v1485, %v1485
    %v1495 = vmul.f32 %v1469, %v1490
    %v1496 = vmul.f32 %v1472, %v1491
    %v1497 = vmul.f32 %v1477, %v1492
    %v1498 = vmul.f32 %v1480, %v1493
    %v1499 = vmul.f32 %v1485, %v1494
    %v1500 = vmul.f32 %v1495, 0.044715
    %v1501 = vmul.f32 %v1496, 0.044715
    %v1502 = vmul.f32 %v1497, 0.044715
    %v1503 = vmul.f32 %v1498, 0.044715
    %v1504 = vmul.f32 %v1499, 0.044715
    %v1505 = vadd.f32 %v1469, %v1500
    %v1506 = vadd.f32 %v1472, %v1501
    %v1507 = vadd.f32 %v1477, %v1502
    %v1508 = vadd.f32 %v1480, %v1503
    %v1509 = vadd.f32 %v1485, %v1504
    %v1510 = vmul.f32 %v1505, 0.7978846
    %v1511 = vmul.f32 %v1506, 0.7978846
    %v1512 = vmul.f32 %v1507, 0.7978846
    %v1513 = vmul.f32 %v1508, 0.7978846
    %v1514 = vmul.f32 %v1509, 0.7978846
    %v1515 = vtanh.pop %v1510
    %v1516 = vtanh.pop %v1511
    %v1517 = vtanh.pop %v1512
    %v1518 = vtanh.pop %v1513
    %v1519 = vtanh.pop %v1514
    %v1520 = vadd.f32 %v1515, 1.0
    %v1521 = vadd.f32 %v1516, 1.0
    %v1522 = vadd.f32 %v1517, 1.0
    %v1523 = vadd.f32 %v1518, 1.0
    %v1524 = vadd.f32 %v1519, 1.0
    %v1525 = vmul.f32 %v1520, 0.5
    %v1526 = vmul.f32 %v1521, 0.5
    %v1527 = vmul.f32 %v1522, 0.5
    %v1528 = vmul.f32 %v1523, 0.5
    %v1529 = vmul.f32 %v1524, 0.5
    %v1530 = vmul.f32 %v1469, %v1525
    %v1531 = vmul.f32 %v1472, %v1526
    %v1532 = vmul.f32 %v1477, %v1527
    %v1533 = vmul.f32 %v1480, %v1528
    %v1534 = vmul.f32 %v1485, %v1529
    %v1535 = vpack.c.bf16 %v1531, %v1530
    %v1536 = vpack.c.bf16 %v1533, %v1532
    %v1537 = vpack.c.bf16 %v1534, %v1534
    %v1538 = vld [vmem:[%s13] sm:$0xf]
    %v1539 = vld [vmem:[%s13 + $0x4] sm:$0xf]
    %v1540 = vld [vmem:[%s13 + $0x8] sm:$0xf]
    %v1541 = vld [vmem:[%s13 + $0xc] sm:$0xf]
    %v1542 = vld [vmem:[%s13 + $0x10] sm:$0xf]
    %v1543 = vld [vmem:[%s13 + $0x14] sm:$0xf]
    %v1544 = vld [vmem:[%s13 + $0x18] sm:$0xf]
    %v1545 = vld [vmem:[%s13 + $0x1c] sm:$0xf]
    %v1546 = vld [vmem:[%s13 + $0x20] sm:$0xf]
    %v1547 = vld [vmem:[%s13 + $0x24] sm:$0xf]
    %v1548 = vld [vmem:[%s13 + $0x28] sm:$0xf]
    %v1549 = vld [vmem:[%s13 + $0x2c] sm:$0xf]
    %v1550 = vld [vmem:[%s13 + $0x30] sm:$0xf]
    %v1551 = vld [vmem:[%s13 + $0x34] sm:$0xf]
    %v1552 = vld [vmem:[%s13 + $0x38] sm:$0xf]
    %v1553 = vld [vmem:[%s13 + $0x3c] sm:$0xf]
    %v1570 = vunpack.c.l.b16 %v1538
    %v1571 = vunpack.c.l.b16 %v1539
    %v1572 = vunpack.c.l.b16 %v1540
    %v1573 = vunpack.c.l.b16 %v1541
    %v1574 = vunpack.c.l.b16 %v1542
    %v1575 = vunpack.c.l.b16 %v1543
    %v1576 = vunpack.c.l.b16 %v1544
    %v1577 = vunpack.c.l.b16 %v1545
    %v1578 = vunpack.c.l.b16 %v1546
    %v1579 = vunpack.c.l.b16 %v1547
    %v1580 = vunpack.c.l.b16 %v1548
    %v1581 = vunpack.c.l.b16 %v1549
    %v1582 = vunpack.c.l.b16 %v1550
    %v1583 = vunpack.c.l.b16 %v1551
    %v1584 = vunpack.c.l.b16 %v1552
    %v1585 = vunpack.c.l.b16 %v1553
    %v1586 = vpack.c.b16 %v1571, %v1570
    %v1587 = vpack.c.b16 %v1573, %v1572
    %v1588 = vpack.c.b16 %v1575, %v1574
    %v1589 = vpack.c.b16 %v1577, %v1576
    %v1590 = vpack.c.b16 %v1579, %v1578
    %v1591 = vpack.c.b16 %v1581, %v1580
    %v1592 = vpack.c.b16 %v1583, %v1582
    %v1593 = vpack.c.b16 %v1585, %v1584
    %1602 = vmatprep.subr.bf16.mxu0 0
    %1603 = vmatpush1.bf16.msra.mxu0 %v1593
    %1604 = vmatprep.subr.bf16.mxu0 0
    %1605 = vmatpush1.bf16.msra.mxu0 %v1592
    %1606 = vmatprep.subr.bf16.mxu0 0
    %1607 = vmatpush1.bf16.msra.mxu0 %v1591
    %1608 = vmatprep.subr.bf16.mxu0 0
    %1609 = vmatpush1.bf16.msra.mxu0 %v1590
    %1610 = vmatprep.subr.bf16.mxu0 0
    %1611 = vmatpush1.bf16.msra.mxu0 %v1589
    %1612 = vmatprep.subr.bf16.mxu0 0
    %1613 = vmatpush1.bf16.msra.mxu0 %v1588
    %1614 = vmatprep.subr.bf16.mxu0 0
    %1615 = vmatpush1.bf16.msra.mxu0 %v1587
    %1616 = vmatprep.subr.bf16.mxu0 0
    %1617 = vmatpush1.bf16.msra.mxu0 %v1586
    %1618 = vmatprep.subr.bf16.mxu0 0
    %1619 = vmatpush2.bf16.msra.mxu0 0
    %1620 = vmatprep.subr.bf16.mxu0 0
    %1621 = vmatpush2.bf16.msra.mxu0 0
    %1622 = vmatprep.subr.bf16.mxu0 0
    %1623 = vmatpush2.bf16.msra.mxu0 0
    %1624 = vmatprep.subr.bf16.mxu0 0
    %1625 = vmatpush2.bf16.msra.mxu0 0
    %1626 = vmatprep.subr.bf16.mxu0 0
    %1627 = vmatpush2.bf16.msra.mxu0 0
    %1628 = vmatprep.subr.bf16.mxu0 0
    %1629 = vmatpush2.bf16.msra.mxu0 0
    %1630 = vmatprep.subr.bf16.mxu0 0
    %1631 = vmatpush2.bf16.msra.mxu0 0
    %1632 = vmatprep.subr.bf16.mxu0 0
    %1633 = vmatpush2.bf16.msra.mxu0 0
    %1634 = vmatprep.mubr.bf16.mxu0 0
    %1635 = vmatmul.mubr.bf16.gmra.mxu0 %v1535
    %v1636 = vpop.f32.mrf.mxu0
    %v1637 = vadd.f32 0.0, %v1636
    %v1638 = vpop.f32.mrf.mxu0
    %v1639 = vpop.f32.mrf.mxu0
    %v1640 = vadd.f32 0.0, %v1639
    %v1641 = vpop.f32.mrf.mxu0
    %1642 = vmatprep.mubr.bf16.mxu0 0
    %1643 = vmatmul.mubr.bf16.gmra.mxu0 %v1536
    %v1644 = vpop.f32.mrf.mxu0
    %v1645 = vadd.f32 0.0, %v1644
    %v1646 = vpop.f32.mrf.mxu0
    %v1647 = vpop.f32.mrf.mxu0
    %v1648 = vadd.f32 0.0, %v1647
    %v1649 = vpop.f32.mrf.mxu0
    %1650 = vmatprep.mubr.bf16.mxu0 0
    %1651 = vmatmul.mubr.bf16.gmra.mxu0 %v1537
    %v1652 = vpop.f32.mrf.mxu0
    %v1653 = vadd.f32 0.0, %v1652
    %v1654 = vpop.f32.mrf.mxu0
    %v1655 = vpop.f32.mrf.mxu0
    %v1656 = vpop.f32.mrf.mxu0
    %1657 = vdwg.mxu0
    %v1658 = vadd.f32 %v1313, %v1637
    %v1659 = vadd.f32 %v1314, %v1640
    %v1660 = vadd.f32 %v1315, %v1645
    %v1661 = vadd.f32 %v1316, %v1648
    %v1662 = vadd.f32 %v1317, %v1653
    %v1663 = vld [vmem:[%s14] sm:$0x1]
    %v1665 = vlaneseq
    %v1666 = vshrl.u32 %v1665, 7
    %v1667 = vsub.s32 0, %v1666
    %v1668 = vrot.slane %v1663, %v1667
    %v1670 = vadd.f32 %v1658, %v1668
    %v1671 = vadd.f32 %v1659, %v1668
    %v1672 = vadd.f32 %v1660, %v1668
    %v1673 = vadd.f32 %v1661, %v1668
    %v1674 = vadd.f32 %v1662, %v1668
    %v1675 = vld [vmem:[%s15] sm:$0x1]
    %v1676 = vld [vmem:[%s16] sm:$0x1]
    %v1677 = vsel %vm241, %v1670, 0.0
    %1678 = vadd.xlane.f32.xlu0 %v1677
    %v1679 = vpop.xlane.xlu0 %1678
    %v1680 = vsel %vm241, %v1671, 0.0
    %1681 = vadd.xlane.f32.xlu0 %v1680
    %v1682 = vpop.xlane.xlu0 %1681
    %v1683 = vsel %vm241, %v1672, 0.0
    %1684 = vadd.xlane.f32.xlu0 %v1683
    %v1685 = vpop.xlane.xlu0 %1684
    %v1686 = vsel %vm241, %v1673, 0.0
    %1687 = vadd.xlane.f32.xlu0 %v1686
    %v1688 = vpop.xlane.xlu0 %1687
    %v1689 = vsel %vm254, %v1674, 0.0
    %1690 = vadd.xlane.f32.xlu0 %v1689
    %v1691 = vpop.xlane.xlu0 %1690
    %v1692 = vmul.f32 %v1679, %v258
    %v1693 = vmul.f32 %v1682, %v258
    %v1694 = vmul.f32 %v1685, %v258
    %v1695 = vmul.f32 %v1688, %v258
    %v1696 = vmul.f32 %v1691, %v258
    %v1697 = vsub.f32 %v1670, %v1692
    %v1698 = vsub.f32 %v1671, %v1693
    %v1699 = vsub.f32 %v1672, %v1694
    %v1700 = vsub.f32 %v1673, %v1695
    %v1701 = vsub.f32 %v1674, %v1696
    %v1702 = vmul.f32 %v1697, %v1697
    %v1703 = vmul.f32 %v1698, %v1698
    %v1704 = vmul.f32 %v1699, %v1699
    %v1705 = vmul.f32 %v1700, %v1700
    %v1706 = vmul.f32 %v1701, %v1701
    %v1707 = vsel %vm241, %v1702, 0.0
    %1708 = vadd.xlane.f32.xlu0 %v1707
    %v1709 = vpop.xlane.xlu0 %1708
    %v1710 = vsel %vm241, %v1703, 0.0
    %1711 = vadd.xlane.f32.xlu0 %v1710
    %v1712 = vpop.xlane.xlu0 %1711
    %v1713 = vsel %vm241, %v1704, 0.0
    %1714 = vadd.xlane.f32.xlu0 %v1713
    %v1715 = vpop.xlane.xlu0 %1714
    %v1716 = vsel %vm241, %v1705, 0.0
    %1717 = vadd.xlane.f32.xlu0 %v1716
    %v1718 = vpop.xlane.xlu0 %1717
    %v1719 = vsel %vm254, %v1706, 0.0
    %1720 = vadd.xlane.f32.xlu0 %v1719
    %v1721 = vpop.xlane.xlu0 %1720
    %v1722 = vmul.f32 %v1709, %v258
    %v1723 = vmul.f32 %v1712, %v258
    %v1724 = vmul.f32 %v1715, %v258
    %v1725 = vmul.f32 %v1718, %v258
    %v1726 = vmul.f32 %v1721, %v258
    %v1727 = vadd.f32 %v1722, 1e-05
    %v1728 = vadd.f32 %v1723, 1e-05
    %v1729 = vadd.f32 %v1724, 1e-05
    %v1730 = vadd.f32 %v1725, 1e-05
    %v1731 = vadd.f32 %v1726, 1e-05
    %v1732 = vrsqrt.pop %v1727
    %v1733 = vrsqrt.pop %v1728
    %v1734 = vrsqrt.pop %v1729
    %v1735 = vrsqrt.pop %v1730
    %v1736 = vrsqrt.pop %v1731
    %v1737 = vmul.f32 %v1697, %v1732
    %v1738 = vmul.f32 %v1698, %v1733
    %v1739 = vmul.f32 %v1699, %v1734
    %v1740 = vmul.f32 %v1700, %v1735
    %v1741 = vmul.f32 %v1701, %v1736
    %v1743 = vlaneseq
    %v1744 = vshrl.u32 %v1743, 7
    %v1745 = vsub.s32 0, %v1744
    %v1746 = vrot.slane %v1675, %v1745
    %v1748 = vmul.f32 %v1737, %v1746
    %v1749 = vmul.f32 %v1738, %v1746
    %v1750 = vmul.f32 %v1739, %v1746
    %v1751 = vmul.f32 %v1740, %v1746
    %v1752 = vmul.f32 %v1741, %v1746
    %v1754 = vlaneseq
    %v1755 = vshrl.u32 %v1754, 7
    %v1756 = vsub.s32 0, %v1755
    %v1757 = vrot.slane %v1676, %v1756
    %v1759 = vadd.f32 %v1748, %v1757
    %v1760 = vadd.f32 %v1749, %v1757
    %v1761 = vadd.f32 %v1750, %v1757
    %v1762 = vadd.f32 %v1751, %v1757
    %v1763 = vadd.f32 %v1752, %v1757
    %v1764 = vpack.c.bf16 %v1760, %v1759
    %v1765 = vpack.c.bf16 %v1762, %v1761
    %v1766 = vpack.c.bf16 %v1763, %v1763
    %v1767 = vld [vmem:[%s20] sm:$0x1]
    %v1768 = vld [vmem:[%s17] sm:$0xf]
    %v1769 = vld [vmem:[%s17 + $0x4] sm:$0xf]
    %v1770 = vld [vmem:[%s17 + $0x8] sm:$0xf]
    %v1771 = vld [vmem:[%s17 + $0xc] sm:$0xf]
    %v1772 = vld [vmem:[%s17 + $0x10] sm:$0xf]
    %v1773 = vld [vmem:[%s17 + $0x14] sm:$0xf]
    %v1774 = vld [vmem:[%s17 + $0x18] sm:$0xf]
    %v1775 = vld [vmem:[%s17 + $0x1c] sm:$0xf]
    %v1784 = vunpack.c.l.b16 %v1768
    %v1785 = vunpack.c.l.b16 %v1769
    %v1786 = vunpack.c.l.b16 %v1770
    %v1787 = vunpack.c.l.b16 %v1771
    %v1788 = vunpack.c.l.b16 %v1772
    %v1789 = vunpack.c.l.b16 %v1773
    %v1790 = vunpack.c.l.b16 %v1774
    %v1791 = vunpack.c.l.b16 %v1775
    %v1792 = vpack.c.b16 %v1785, %v1784
    %v1793 = vpack.c.b16 %v1787, %v1786
    %v1794 = vpack.c.b16 %v1789, %v1788
    %v1795 = vpack.c.b16 %v1791, %v1790
    %v1801 = vsel %vm241, %v1764, 0
    %v1804 = vsel %vm241, %v1765, 0
    %v1807 = vsel %vm241, %v1766, 0
    %1809 = vmatprep.subr.bf16.mxu0 0
    %1810 = vmatpush1.bf16.msra.mxu0 0
    %1811 = vmatprep.subr.bf16.mxu0 0
    %1812 = vmatpush1.bf16.msra.mxu0 0
    %1813 = vmatprep.subr.bf16.mxu0 0
    %1814 = vmatpush1.bf16.msra.mxu0 0
    %1815 = vmatprep.subr.bf16.mxu0 0
    %1816 = vmatpush1.bf16.msra.mxu0 0
    %1817 = vmatprep.subr.bf16.mxu0 0
    %1818 = vmatpush1.bf16.msra.mxu0 %v1795
    %1819 = vmatprep.subr.bf16.mxu0 0
    %1820 = vmatpush1.bf16.msra.mxu0 %v1794
    %1821 = vmatprep.subr.bf16.mxu0 0
    %1822 = vmatpush1.bf16.msra.mxu0 %v1793
    %1823 = vmatprep.subr.bf16.mxu0 0
    %1824 = vmatpush1.bf16.msra.mxu0 %v1792
    %1825 = vmatprep.subr.bf16.mxu0 0
    %1826 = vmatpush2.bf16.msra.mxu0 0
    %1827 = vmatprep.subr.bf16.mxu0 0
    %1828 = vmatpush2.bf16.msra.mxu0 0
    %1829 = vmatprep.subr.bf16.mxu0 0
    %1830 = vmatpush2.bf16.msra.mxu0 0
    %1831 = vmatprep.subr.bf16.mxu0 0
    %1832 = vmatpush2.bf16.msra.mxu0 0
    %1833 = vmatprep.subr.bf16.mxu0 0
    %1834 = vmatpush2.bf16.msra.mxu0 0
    %1835 = vmatprep.subr.bf16.mxu0 0
    %1836 = vmatpush2.bf16.msra.mxu0 0
    %1837 = vmatprep.subr.bf16.mxu0 0
    %1838 = vmatpush2.bf16.msra.mxu0 0
    %1839 = vmatprep.subr.bf16.mxu0 0
    %1840 = vmatpush2.bf16.msra.mxu0 0
    %1841 = vmatprep.mubr.bf16.mxu0 0
    %1842 = vmatmul.mubr.bf16.gmra.mxu0 %v1801
    %v1843 = vpop.f32.mrf.mxu0
    %v1844 = vadd.f32 0.0, %v1843
    %v1845 = vpop.f32.mrf.mxu0
    %v1846 = vpop.f32.mrf.mxu0
    %v1847 = vadd.f32 0.0, %v1846
    %v1848 = vpop.f32.mrf.mxu0
    %1849 = vmatprep.mubr.bf16.mxu0 0
    %1850 = vmatmul.mubr.bf16.gmra.mxu0 %v1804
    %v1851 = vpop.f32.mrf.mxu0
    %v1852 = vadd.f32 0.0, %v1851
    %v1853 = vpop.f32.mrf.mxu0
    %v1854 = vpop.f32.mrf.mxu0
    %v1855 = vadd.f32 0.0, %v1854
    %v1856 = vpop.f32.mrf.mxu0
    %1857 = vmatprep.mubr.bf16.mxu0 0
    %1858 = vmatmul.mubr.bf16.gmra.mxu0 %v1807
    %v1859 = vpop.f32.mrf.mxu0
    %v1860 = vadd.f32 0.0, %v1859
    %v1861 = vpop.f32.mrf.mxu0
    %v1862 = vpop.f32.mrf.mxu0
    %v1863 = vpop.f32.mrf.mxu0
    %1864 = vdwg.mxu0
    %v1865 = vpack.c.bf16 %v1847, %v1844
    %v1866 = vpack.c.bf16 %v1855, %v1852
    %v1867 = vpack.c.bf16 %v1860, %v1860
    %v1868 = vld [vmem:[%s18] sm:$0xf]
    %v1869 = vld [vmem:[%s18 + $0x4] sm:$0xf]
    %v1870 = vld [vmem:[%s18 + $0x8] sm:$0xf]
    %v1871 = vld [vmem:[%s18 + $0xc] sm:$0xf]
    %v1872 = vld [vmem:[%s18 + $0x10] sm:$0xf]
    %v1873 = vld [vmem:[%s18 + $0x14] sm:$0xf]
    %v1874 = vld [vmem:[%s18 + $0x18] sm:$0xf]
    %v1875 = vld [vmem:[%s18 + $0x1c] sm:$0xf]
    %v1884 = vunpack.c.l.b16 %v1868
    %v1885 = vunpack.c.l.b16 %v1869
    %v1886 = vunpack.c.l.b16 %v1870
    %v1887 = vunpack.c.l.b16 %v1871
    %v1888 = vunpack.c.l.b16 %v1872
    %v1889 = vunpack.c.l.b16 %v1873
    %v1890 = vunpack.c.l.b16 %v1874
    %v1891 = vunpack.c.l.b16 %v1875
    %v1892 = vpack.c.b16 %v1885, %v1884
    %v1893 = vpack.c.b16 %v1887, %v1886
    %v1894 = vpack.c.b16 %v1889, %v1888
    %v1895 = vpack.c.b16 %v1891, %v1890
    %1900 = vmatprep.subr.bf16.mxu0 0
    %1901 = vmatpush1.bf16.msra.mxu0 0
    %1902 = vmatprep.subr.bf16.mxu0 0
    %1903 = vmatpush1.bf16.msra.mxu0 0
    %1904 = vmatprep.subr.bf16.mxu0 0
    %1905 = vmatpush1.bf16.msra.mxu0 0
    %1906 = vmatprep.subr.bf16.mxu0 0
    %1907 = vmatpush1.bf16.msra.mxu0 0
    %1908 = vmatprep.subr.bf16.mxu0 0
    %1909 = vmatpush1.bf16.msra.mxu0 %v1895
    %1910 = vmatprep.subr.bf16.mxu0 0
    %1911 = vmatpush1.bf16.msra.mxu0 %v1894
    %1912 = vmatprep.subr.bf16.mxu0 0
    %1913 = vmatpush1.bf16.msra.mxu0 %v1893
    %1914 = vmatprep.subr.bf16.mxu0 0
    %1915 = vmatpush1.bf16.msra.mxu0 %v1892
    %1916 = vmatprep.subr.bf16.mxu0 0
    %1917 = vmatpush2.bf16.msra.mxu0 0
    %1918 = vmatprep.subr.bf16.mxu0 0
    %1919 = vmatpush2.bf16.msra.mxu0 0
    %1920 = vmatprep.subr.bf16.mxu0 0
    %1921 = vmatpush2.bf16.msra.mxu0 0
    %1922 = vmatprep.subr.bf16.mxu0 0
    %1923 = vmatpush2.bf16.msra.mxu0 0
    %1924 = vmatprep.subr.bf16.mxu0 0
    %1925 = vmatpush2.bf16.msra.mxu0 0
    %1926 = vmatprep.subr.bf16.mxu0 0
    %1927 = vmatpush2.bf16.msra.mxu0 0
    %1928 = vmatprep.subr.bf16.mxu0 0
    %1929 = vmatpush2.bf16.msra.mxu0 0
    %1930 = vmatprep.subr.bf16.mxu0 0
    %1931 = vmatpush2.bf16.msra.mxu0 0
    %1932 = vmatprep.mubr.bf16.mxu0 0
    %1933 = vmatmul.mubr.bf16.gmra.mxu0 %v1801
    %v1934 = vpop.f32.mrf.mxu0
    %v1935 = vadd.f32 0.0, %v1934
    %v1936 = vpop.f32.mrf.mxu0
    %v1937 = vpop.f32.mrf.mxu0
    %v1938 = vadd.f32 0.0, %v1937
    %v1939 = vpop.f32.mrf.mxu0
    %1940 = vmatprep.mubr.bf16.mxu0 0
    %1941 = vmatmul.mubr.bf16.gmra.mxu0 %v1804
    %v1942 = vpop.f32.mrf.mxu0
    %v1943 = vadd.f32 0.0, %v1942
    %v1944 = vpop.f32.mrf.mxu0
    %v1945 = vpop.f32.mrf.mxu0
    %v1946 = vadd.f32 0.0, %v1945
    %v1947 = vpop.f32.mrf.mxu0
    %1948 = vmatprep.mubr.bf16.mxu0 0
    %1949 = vmatmul.mubr.bf16.gmra.mxu0 %v1807
    %v1950 = vpop.f32.mrf.mxu0
    %v1951 = vadd.f32 0.0, %v1950
    %v1952 = vpop.f32.mrf.mxu0
    %v1953 = vpop.f32.mrf.mxu0
    %v1954 = vpop.f32.mrf.mxu0
    %1955 = vdwg.mxu0
    %v1956 = vpack.c.bf16 %v1938, %v1935
    %v1957 = vpack.c.bf16 %v1946, %v1943
    %v1958 = vpack.c.bf16 %v1951, %v1951
    %v1959 = vld [vmem:[%s19] sm:$0xf]
    %v1960 = vld [vmem:[%s19 + $0x4] sm:$0xf]
    %v1961 = vld [vmem:[%s19 + $0x8] sm:$0xf]
    %v1962 = vld [vmem:[%s19 + $0xc] sm:$0xf]
    %v1963 = vld [vmem:[%s19 + $0x10] sm:$0xf]
    %v1964 = vld [vmem:[%s19 + $0x14] sm:$0xf]
    %v1965 = vld [vmem:[%s19 + $0x18] sm:$0xf]
    %v1966 = vld [vmem:[%s19 + $0x1c] sm:$0xf]
    %v1975 = vunpack.c.l.b16 %v1959
    %v1976 = vunpack.c.l.b16 %v1960
    %v1977 = vunpack.c.l.b16 %v1961
    %v1978 = vunpack.c.l.b16 %v1962
    %v1979 = vunpack.c.l.b16 %v1963
    %v1980 = vunpack.c.l.b16 %v1964
    %v1981 = vunpack.c.l.b16 %v1965
    %v1982 = vunpack.c.l.b16 %v1966
    %v1983 = vpack.c.b16 %v1976, %v1975
    %v1984 = vpack.c.b16 %v1978, %v1977
    %v1985 = vpack.c.b16 %v1980, %v1979
    %v1986 = vpack.c.b16 %v1982, %v1981
    %1991 = vmatprep.subr.bf16.mxu0 0
    %1992 = vmatpush1.bf16.msra.mxu0 0
    %1993 = vmatprep.subr.bf16.mxu0 0
    %1994 = vmatpush1.bf16.msra.mxu0 0
    %1995 = vmatprep.subr.bf16.mxu0 0
    %1996 = vmatpush1.bf16.msra.mxu0 0
    %1997 = vmatprep.subr.bf16.mxu0 0
    %1998 = vmatpush1.bf16.msra.mxu0 0
    %1999 = vmatprep.subr.bf16.mxu0 0
    %2000 = vmatpush1.bf16.msra.mxu0 %v1986
    %2001 = vmatprep.subr.bf16.mxu0 0
    %2002 = vmatpush1.bf16.msra.mxu0 %v1985
    %2003 = vmatprep.subr.bf16.mxu0 0
    %2004 = vmatpush1.bf16.msra.mxu0 %v1984
    %2005 = vmatprep.subr.bf16.mxu0 0
    %2006 = vmatpush1.bf16.msra.mxu0 %v1983
    %2007 = vmatprep.subr.bf16.mxu0 0
    %2008 = vmatpush2.bf16.msra.mxu0 0
    %2009 = vmatprep.subr.bf16.mxu0 0
    %2010 = vmatpush2.bf16.msra.mxu0 0
    %2011 = vmatprep.subr.bf16.mxu0 0
    %2012 = vmatpush2.bf16.msra.mxu0 0
    %2013 = vmatprep.subr.bf16.mxu0 0
    %2014 = vmatpush2.bf16.msra.mxu0 0
    %2015 = vmatprep.subr.bf16.mxu0 0
    %2016 = vmatpush2.bf16.msra.mxu0 0
    %2017 = vmatprep.subr.bf16.mxu0 0
    %2018 = vmatpush2.bf16.msra.mxu0 0
    %2019 = vmatprep.subr.bf16.mxu0 0
    %2020 = vmatpush2.bf16.msra.mxu0 0
    %2021 = vmatprep.subr.bf16.mxu0 0
    %2022 = vmatpush2.bf16.msra.mxu0 0
    %2023 = vmatprep.mubr.bf16.mxu0 0
    %2024 = vmatmul.mubr.bf16.gmra.mxu0 %v1801
    %v2025 = vpop.f32.mrf.mxu0
    %v2026 = vadd.f32 0.0, %v2025
    %v2027 = vpop.f32.mrf.mxu0
    %v2028 = vpop.f32.mrf.mxu0
    %v2029 = vadd.f32 0.0, %v2028
    %v2030 = vpop.f32.mrf.mxu0
    %2031 = vmatprep.mubr.bf16.mxu0 0
    %2032 = vmatmul.mubr.bf16.gmra.mxu0 %v1804
    %v2033 = vpop.f32.mrf.mxu0
    %v2034 = vadd.f32 0.0, %v2033
    %v2035 = vpop.f32.mrf.mxu0
    %v2036 = vpop.f32.mrf.mxu0
    %v2037 = vadd.f32 0.0, %v2036
    %v2038 = vpop.f32.mrf.mxu0
    %2039 = vmatprep.mubr.bf16.mxu0 0
    %2040 = vmatmul.mubr.bf16.gmra.mxu0 %v1807
    %v2041 = vpop.f32.mrf.mxu0
    %v2042 = vadd.f32 0.0, %v2041
    %v2043 = vpop.f32.mrf.mxu0
    %v2044 = vpop.f32.mrf.mxu0
    %v2045 = vpop.f32.mrf.mxu0
    %2046 = vdwg.mxu0
    %v2047 = vpack.c.bf16 %v2029, %v2026
    %v2048 = vpack.c.bf16 %v2037, %v2034
    %v2049 = vpack.c.bf16 %v2042, %v2042
    %v2051 = vsel %vm617, %v1865, 0
    %v2054 = vsel %vm617, %v1866, 0
    %v2057 = vsel %vm617, %v1867, 0
    %v2060 = vsel %vm617, %v1956, 0
    %v2063 = vsel %vm617, %v1957, 0
    %v2066 = vsel %vm617, %v1958, 0
    %2068 = vmatprep.subr.bf16.mxu0 0
    %2069 = vmatpush1.bf16.xpose.msra.mxu0 0
    %2070 = vmatprep.subr.bf16.mxu0 0
    %2071 = vmatpush1.bf16.xpose.msra.mxu0 0
    %2072 = vmatprep.subr.bf16.mxu0 0
    %2073 = vmatpush1.bf16.xpose.msra.mxu0 0
    %2074 = vmatprep.subr.bf16.mxu0 0
    %2075 = vmatpush1.bf16.xpose.msra.mxu0 0
    %2076 = vmatprep.subr.bf16.mxu0 0
    %2077 = vmatpush1.bf16.xpose.msra.mxu0 0
    %2078 = vmatprep.subr.bf16.mxu0 0
    %2079 = vmatpush1.bf16.xpose.msra.mxu0 %v2066
    %2080 = vmatprep.subr.bf16.mxu0 0
    %2081 = vmatpush1.bf16.xpose.msra.mxu0 %v2063
    %2082 = vmatprep.subr.bf16.mxu0 0
    %2083 = vmatpush1.bf16.xpose.msra.mxu0 %v2060
    %2084 = vmatprep.subr.bf16.mxu0 0
    %2085 = vmatpush2.bf16.xpose.msra.mxu0 0
    %2086 = vmatprep.subr.bf16.mxu0 0
    %2087 = vmatpush2.bf16.xpose.msra.mxu0 0
    %2088 = vmatprep.subr.bf16.mxu0 0
    %2089 = vmatpush2.bf16.xpose.msra.mxu0 0
    %2090 = vmatprep.subr.bf16.mxu0 0
    %2091 = vmatpush2.bf16.xpose.msra.mxu0 0
    %2092 = vmatprep.subr.bf16.mxu0 0
    %2093 = vmatpush2.bf16.xpose.msra.mxu0 0
    %2094 = vmatprep.subr.bf16.mxu0 0
    %2095 = vmatpush2.bf16.xpose.msra.mxu0 0
    %2096 = vmatprep.subr.bf16.mxu0 0
    %2097 = vmatpush2.bf16.xpose.msra.mxu0 0
    %2098 = vmatprep.subr.bf16.mxu0 0
    %2099 = vmatpush2.bf16.xpose.msra.mxu0 0
    %2100 = vmatprep.mubr.bf16.mxu0 0
    %2101 = vmatmul.mubr.bf16.gmra.mxu0 %v2051
    %v2102 = vpop.f32.mrf.mxu0
    %v2103 = vadd.f32 %v234, %v2102
    %v2104 = vpop.f32.mrf.mxu0
    %v2105 = vpop.f32.mrf.mxu0
    %v2106 = vadd.f32 %v235, %v2105
    %v2107 = vpop.f32.mrf.mxu0
    %2108 = vmatprep.mubr.bf16.mxu0 0
    %2109 = vmatmul.mubr.bf16.gmra.mxu0 %v2054
    %v2110 = vpop.f32.mrf.mxu0
    %v2111 = vadd.f32 %v236, %v2110
    %v2112 = vpop.f32.mrf.mxu0
    %v2113 = vpop.f32.mrf.mxu0
    %v2114 = vadd.f32 %v237, %v2113
    %v2115 = vpop.f32.mrf.mxu0
    %2116 = vmatprep.mubr.bf16.mxu0 0
    %2117 = vmatmul.mubr.bf16.gmra.mxu0 %v2057
    %v2118 = vpop.f32.mrf.mxu0
    %v2119 = vadd.f32 %v238, %v2118
    %v2120 = vpop.f32.mrf.mxu0
    %v2121 = vpop.f32.mrf.mxu0
    %v2122 = vpop.f32.mrf.mxu0
    %2123 = vdwg.mxu0
    %v2124 = vsel %vm692, %v2103, -inf
    %2125 = vmax.xlane.f32.xlu0 %v2124
    %v2126 = vpop.xlane.xlu0 %2125
    %v2127 = vsel %vm692, %v2106, -inf
    %2128 = vmax.xlane.f32.xlu0 %v2127
    %v2129 = vpop.xlane.xlu0 %2128
    %v2130 = vsel %vm692, %v2111, -inf
    %2131 = vmax.xlane.f32.xlu0 %v2130
    %v2132 = vpop.xlane.xlu0 %2131
    %v2133 = vsel %vm692, %v2114, -inf
    %2134 = vmax.xlane.f32.xlu0 %v2133
    %v2135 = vpop.xlane.xlu0 %2134
    %v2136 = vsel %vm705, %v2119, -inf
    %2137 = vmax.xlane.f32.xlu0 %v2136
    %v2138 = vpop.xlane.xlu0 %2137
    %v2139 = vsub.f32 %v2103, %v2126
    %v2140 = vsub.f32 %v2106, %v2129
    %v2141 = vsub.f32 %v2111, %v2132
    %v2142 = vsub.f32 %v2114, %v2135
    %v2143 = vsub.f32 %v2119, %v2138
    %v2144 = vmul.f32 %v2139, 1.442695
    %v2145 = vpow.pop %v2144
    %v2146 = vmul.f32 %v2140, 1.442695
    %v2147 = vpow.pop %v2146
    %v2148 = vmul.f32 %v2141, 1.442695
    %v2149 = vpow.pop %v2148
    %v2150 = vmul.f32 %v2142, 1.442695
    %v2151 = vpow.pop %v2150
    %v2152 = vmul.f32 %v2143, 1.442695
    %v2153 = vpow.pop %v2152
    %v2154 = vsel %vm692, %v2145, 0.0
    %2155 = vadd.xlane.f32.xlu0 %v2154
    %v2156 = vpop.xlane.xlu0 %2155
    %v2157 = vsel %vm692, %v2147, 0.0
    %2158 = vadd.xlane.f32.xlu0 %v2157
    %v2159 = vpop.xlane.xlu0 %2158
    %v2160 = vsel %vm692, %v2149, 0.0
    %2161 = vadd.xlane.f32.xlu0 %v2160
    %v2162 = vpop.xlane.xlu0 %2161
    %v2163 = vsel %vm692, %v2151, 0.0
    %2164 = vadd.xlane.f32.xlu0 %v2163
    %v2165 = vpop.xlane.xlu0 %2164
    %v2166 = vsel %vm705, %v2153, 0.0
    %2167 = vadd.xlane.f32.xlu0 %v2166
    %v2168 = vpop.xlane.xlu0 %2167
    %v2169 = vrcp.pop %v2156
    %v2170 = vrcp.pop %v2159
    %v2171 = vrcp.pop %v2162
    %v2172 = vrcp.pop %v2165
    %v2173 = vrcp.pop %v2168
    %v2174 = vmul.f32 %v2145, %v2169
    %v2175 = vmul.f32 %v2147, %v2170
    %v2176 = vmul.f32 %v2149, %v2171
    %v2177 = vmul.f32 %v2151, %v2172
    %v2178 = vmul.f32 %v2153, %v2173
    %v2179 = vpack.c.bf16 %v2175, %v2174
    %v2180 = vpack.c.bf16 %v2177, %v2176
    %v2181 = vpack.c.bf16 %v2178, %v2178
    %v2183 = vsel %vm692, %v2179, 0
    %v2186 = vsel %vm692, %v2180, 0
    %v2189 = vsel %vm692, %v2181, 0
    %v2192 = vsel %vm761, %v2049, 0
    %2194 = vmatprep.subr.bf16.mxu0 0
    %2195 = vmatpush1.bf16.msra.mxu0 0
    %2196 = vmatprep.subr.bf16.mxu0 0
    %2197 = vmatpush1.bf16.msra.mxu0 0
    %2198 = vmatprep.subr.bf16.mxu0 0
    %2199 = vmatpush1.bf16.msra.mxu0 0
    %2200 = vmatprep.subr.bf16.mxu0 0
    %2201 = vmatpush1.bf16.msra.mxu0 0
    %2202 = vmatprep.subr.bf16.mxu0 0
    %2203 = vmatpush1.bf16.msra.mxu0 0
    %2204 = vmatprep.subr.bf16.mxu0 0
    %2205 = vmatpush1.bf16.msra.mxu0 %v2192
    %2206 = vmatprep.subr.bf16.mxu0 0
    %2207 = vmatpush1.bf16.msra.mxu0 %v2048
    %2208 = vmatprep.subr.bf16.mxu0 0
    %2209 = vmatpush1.bf16.msra.mxu0 %v2047
    %2210 = vmatprep.subr.bf16.mxu0 0
    %2211 = vmatpush2.bf16.msra.mxu0 0
    %2212 = vmatprep.subr.bf16.mxu0 0
    %2213 = vmatpush2.bf16.msra.mxu0 0
    %2214 = vmatprep.subr.bf16.mxu0 0
    %2215 = vmatpush2.bf16.msra.mxu0 0
    %2216 = vmatprep.subr.bf16.mxu0 0
    %2217 = vmatpush2.bf16.msra.mxu0 0
    %2218 = vmatprep.subr.bf16.mxu0 0
    %2219 = vmatpush2.bf16.msra.mxu0 0
    %2220 = vmatprep.subr.bf16.mxu0 0
    %2221 = vmatpush2.bf16.msra.mxu0 0
    %2222 = vmatprep.subr.bf16.mxu0 0
    %2223 = vmatpush2.bf16.msra.mxu0 0
    %2224 = vmatprep.subr.bf16.mxu0 0
    %2225 = vmatpush2.bf16.msra.mxu0 0
    %2226 = vmatprep.mubr.bf16.mxu0 0
    %2227 = vmatmul.mubr.bf16.gmra.mxu0 %v2183
    %v2228 = vpop.f32.mrf.mxu0
    %v2229 = vadd.f32 0.0, %v2228
    %v2230 = vpop.f32.mrf.mxu0
    %v2231 = vpop.f32.mrf.mxu0
    %v2232 = vadd.f32 0.0, %v2231
    %v2233 = vpop.f32.mrf.mxu0
    %2234 = vmatprep.mubr.bf16.mxu0 0
    %2235 = vmatmul.mubr.bf16.gmra.mxu0 %v2186
    %v2236 = vpop.f32.mrf.mxu0
    %v2237 = vadd.f32 0.0, %v2236
    %v2238 = vpop.f32.mrf.mxu0
    %v2239 = vpop.f32.mrf.mxu0
    %v2240 = vadd.f32 0.0, %v2239
    %v2241 = vpop.f32.mrf.mxu0
    %2242 = vmatprep.mubr.bf16.mxu0 0
    %2243 = vmatmul.mubr.bf16.gmra.mxu0 %v2189
    %v2244 = vpop.f32.mrf.mxu0
    %v2245 = vadd.f32 0.0, %v2244
    %v2246 = vpop.f32.mrf.mxu0
    %v2247 = vpop.f32.mrf.mxu0
    %v2248 = vpop.f32.mrf.mxu0
    %2249 = vdwg.mxu0
    %v2251 = vlaneseq
    %v2252 = vshrl.u32 %v2251, 7
    %v2253 = vsub.s32 0, %v2252
    %v2254 = vrot.slane %v1767, %v2253
    %v2256 = vadd.f32 %v2254, %v2229
    %v2257 = vadd.f32 %v2254, %v2232
    %v2258 = vadd.f32 %v2254, %v2237
    %v2259 = vadd.f32 %v2254, %v2240
    %v2260 = vadd.f32 %v2254, %v2245
    %s2261 = scalar_lea.vmem %s17, 32
    %v2262 = vld [vmem:[%s2261] sm:$0xf]
    %v2263 = vld [vmem:[%s2261 + $0x4] sm:$0xf]
    %v2264 = vld [vmem:[%s2261 + $0x8] sm:$0xf]
    %v2265 = vld [vmem:[%s2261 + $0xc] sm:$0xf]
    %v2266 = vld [vmem:[%s2261 + $0x10] sm:$0xf]
    %v2267 = vld [vmem:[%s2261 + $0x14] sm:$0xf]
    %v2268 = vld [vmem:[%s2261 + $0x18] sm:$0xf]
    %v2269 = vld [vmem:[%s2261 + $0x1c] sm:$0xf]
    %v2278 = vunpack.c.l.b16 %v2262
    %v2279 = vunpack.c.l.b16 %v2263
    %v2280 = vunpack.c.l.b16 %v2264
    %v2281 = vunpack.c.l.b16 %v2265
    %v2282 = vunpack.c.l.b16 %v2266
    %v2283 = vunpack.c.l.b16 %v2267
    %v2284 = vunpack.c.l.b16 %v2268
    %v2285 = vunpack.c.l.b16 %v2269
    %v2286 = vpack.c.b16 %v2279, %v2278
    %v2287 = vpack.c.b16 %v2281, %v2280
    %v2288 = vpack.c.b16 %v2283, %v2282
    %v2289 = vpack.c.b16 %v2285, %v2284
    %2294 = vmatprep.subr.bf16.mxu0 0
    %2295 = vmatpush1.bf16.msra.mxu0 0
    %2296 = vmatprep.subr.bf16.mxu0 0
    %2297 = vmatpush1.bf16.msra.mxu0 0
    %2298 = vmatprep.subr.bf16.mxu0 0
    %2299 = vmatpush1.bf16.msra.mxu0 0
    %2300 = vmatprep.subr.bf16.mxu0 0
    %2301 = vmatpush1.bf16.msra.mxu0 0
    %2302 = vmatprep.subr.bf16.mxu0 0
    %2303 = vmatpush1.bf16.msra.mxu0 %v2289
    %2304 = vmatprep.subr.bf16.mxu0 0
    %2305 = vmatpush1.bf16.msra.mxu0 %v2288
    %2306 = vmatprep.subr.bf16.mxu0 0
    %2307 = vmatpush1.bf16.msra.mxu0 %v2287
    %2308 = vmatprep.subr.bf16.mxu0 0
    %2309 = vmatpush1.bf16.msra.mxu0 %v2286
    %2310 = vmatprep.subr.bf16.mxu0 0
    %2311 = vmatpush2.bf16.msra.mxu0 0
    %2312 = vmatprep.subr.bf16.mxu0 0
    %2313 = vmatpush2.bf16.msra.mxu0 0
    %2314 = vmatprep.subr.bf16.mxu0 0
    %2315 = vmatpush2.bf16.msra.mxu0 0
    %2316 = vmatprep.subr.bf16.mxu0 0
    %2317 = vmatpush2.bf16.msra.mxu0 0
    %2318 = vmatprep.subr.bf16.mxu0 0
    %2319 = vmatpush2.bf16.msra.mxu0 0
    %2320 = vmatprep.subr.bf16.mxu0 0
    %2321 = vmatpush2.bf16.msra.mxu0 0
    %2322 = vmatprep.subr.bf16.mxu0 0
    %2323 = vmatpush2.bf16.msra.mxu0 0
    %2324 = vmatprep.subr.bf16.mxu0 0
    %2325 = vmatpush2.bf16.msra.mxu0 0
    %2326 = vmatprep.mubr.bf16.mxu0 0
    %2327 = vmatmul.mubr.bf16.gmra.mxu0 %v1801
    %v2328 = vpop.f32.mrf.mxu0
    %v2329 = vadd.f32 0.0, %v2328
    %v2330 = vpop.f32.mrf.mxu0
    %v2331 = vpop.f32.mrf.mxu0
    %v2332 = vadd.f32 0.0, %v2331
    %v2333 = vpop.f32.mrf.mxu0
    %2334 = vmatprep.mubr.bf16.mxu0 0
    %2335 = vmatmul.mubr.bf16.gmra.mxu0 %v1804
    %v2336 = vpop.f32.mrf.mxu0
    %v2337 = vadd.f32 0.0, %v2336
    %v2338 = vpop.f32.mrf.mxu0
    %v2339 = vpop.f32.mrf.mxu0
    %v2340 = vadd.f32 0.0, %v2339
    %v2341 = vpop.f32.mrf.mxu0
    %2342 = vmatprep.mubr.bf16.mxu0 0
    %2343 = vmatmul.mubr.bf16.gmra.mxu0 %v1807
    %v2344 = vpop.f32.mrf.mxu0
    %v2345 = vadd.f32 0.0, %v2344
    %v2346 = vpop.f32.mrf.mxu0
    %v2347 = vpop.f32.mrf.mxu0
    %v2348 = vpop.f32.mrf.mxu0
    %2349 = vdwg.mxu0
    %v2350 = vpack.c.bf16 %v2332, %v2329
    %v2351 = vpack.c.bf16 %v2340, %v2337
    %v2352 = vpack.c.bf16 %v2345, %v2345
    %s2353 = scalar_lea.vmem %s18, 32
    %v2354 = vld [vmem:[%s2353] sm:$0xf]
    %v2355 = vld [vmem:[%s2353 + $0x4] sm:$0xf]
    %v2356 = vld [vmem:[%s2353 + $0x8] sm:$0xf]
    %v2357 = vld [vmem:[%s2353 + $0xc] sm:$0xf]
    %v2358 = vld [vmem:[%s2353 + $0x10] sm:$0xf]
    %v2359 = vld [vmem:[%s2353 + $0x14] sm:$0xf]
    %v2360 = vld [vmem:[%s2353 + $0x18] sm:$0xf]
    %v2361 = vld [vmem:[%s2353 + $0x1c] sm:$0xf]
    %v2370 = vunpack.c.l.b16 %v2354
    %v2371 = vunpack.c.l.b16 %v2355
    %v2372 = vunpack.c.l.b16 %v2356
    %v2373 = vunpack.c.l.b16 %v2357
    %v2374 = vunpack.c.l.b16 %v2358
    %v2375 = vunpack.c.l.b16 %v2359
    %v2376 = vunpack.c.l.b16 %v2360
    %v2377 = vunpack.c.l.b16 %v2361
    %v2378 = vpack.c.b16 %v2371, %v2370
    %v2379 = vpack.c.b16 %v2373, %v2372
    %v2380 = vpack.c.b16 %v2375, %v2374
    %v2381 = vpack.c.b16 %v2377, %v2376
    %2386 = vmatprep.subr.bf16.mxu0 0
    %2387 = vmatpush1.bf16.msra.mxu0 0
    %2388 = vmatprep.subr.bf16.mxu0 0
    %2389 = vmatpush1.bf16.msra.mxu0 0
    %2390 = vmatprep.subr.bf16.mxu0 0
    %2391 = vmatpush1.bf16.msra.mxu0 0
    %2392 = vmatprep.subr.bf16.mxu0 0
    %2393 = vmatpush1.bf16.msra.mxu0 0
    %2394 = vmatprep.subr.bf16.mxu0 0
    %2395 = vmatpush1.bf16.msra.mxu0 %v2381
    %2396 = vmatprep.subr.bf16.mxu0 0
    %2397 = vmatpush1.bf16.msra.mxu0 %v2380
    %2398 = vmatprep.subr.bf16.mxu0 0
    %2399 = vmatpush1.bf16.msra.mxu0 %v2379
    %2400 = vmatprep.subr.bf16.mxu0 0
    %2401 = vmatpush1.bf16.msra.mxu0 %v2378
    %2402 = vmatprep.subr.bf16.mxu0 0
    %2403 = vmatpush2.bf16.msra.mxu0 0
    %2404 = vmatprep.subr.bf16.mxu0 0
    %2405 = vmatpush2.bf16.msra.mxu0 0
    %2406 = vmatprep.subr.bf16.mxu0 0
    %2407 = vmatpush2.bf16.msra.mxu0 0
    %2408 = vmatprep.subr.bf16.mxu0 0
    %2409 = vmatpush2.bf16.msra.mxu0 0
    %2410 = vmatprep.subr.bf16.mxu0 0
    %2411 = vmatpush2.bf16.msra.mxu0 0
    %2412 = vmatprep.subr.bf16.mxu0 0
    %2413 = vmatpush2.bf16.msra.mxu0 0
    %2414 = vmatprep.subr.bf16.mxu0 0
    %2415 = vmatpush2.bf16.msra.mxu0 0
    %2416 = vmatprep.subr.bf16.mxu0 0
    %2417 = vmatpush2.bf16.msra.mxu0 0
    %2418 = vmatprep.mubr.bf16.mxu0 0
    %2419 = vmatmul.mubr.bf16.gmra.mxu0 %v1801
    %v2420 = vpop.f32.mrf.mxu0
    %v2421 = vadd.f32 0.0, %v2420
    %v2422 = vpop.f32.mrf.mxu0
    %v2423 = vpop.f32.mrf.mxu0
    %v2424 = vadd.f32 0.0, %v2423
    %v2425 = vpop.f32.mrf.mxu0
    %2426 = vmatprep.mubr.bf16.mxu0 0
    %2427 = vmatmul.mubr.bf16.gmra.mxu0 %v1804
    %v2428 = vpop.f32.mrf.mxu0
    %v2429 = vadd.f32 0.0, %v2428
    %v2430 = vpop.f32.mrf.mxu0
    %v2431 = vpop.f32.mrf.mxu0
    %v2432 = vadd.f32 0.0, %v2431
    %v2433 = vpop.f32.mrf.mxu0
    %2434 = vmatprep.mubr.bf16.mxu0 0
    %2435 = vmatmul.mubr.bf16.gmra.mxu0 %v1807
    %v2436 = vpop.f32.mrf.mxu0
    %v2437 = vadd.f32 0.0, %v2436
    %v2438 = vpop.f32.mrf.mxu0
    %v2439 = vpop.f32.mrf.mxu0
    %v2440 = vpop.f32.mrf.mxu0
    %2441 = vdwg.mxu0
    %v2442 = vpack.c.bf16 %v2424, %v2421
    %v2443 = vpack.c.bf16 %v2432, %v2429
    %v2444 = vpack.c.bf16 %v2437, %v2437
    %s2445 = scalar_lea.vmem %s19, 32
    %v2446 = vld [vmem:[%s2445] sm:$0xf]
    %v2447 = vld [vmem:[%s2445 + $0x4] sm:$0xf]
    %v2448 = vld [vmem:[%s2445 + $0x8] sm:$0xf]
    %v2449 = vld [vmem:[%s2445 + $0xc] sm:$0xf]
    %v2450 = vld [vmem:[%s2445 + $0x10] sm:$0xf]
    %v2451 = vld [vmem:[%s2445 + $0x14] sm:$0xf]
    %v2452 = vld [vmem:[%s2445 + $0x18] sm:$0xf]
    %v2453 = vld [vmem:[%s2445 + $0x1c] sm:$0xf]
    %v2462 = vunpack.c.l.b16 %v2446
    %v2463 = vunpack.c.l.b16 %v2447
    %v2464 = vunpack.c.l.b16 %v2448
    %v2465 = vunpack.c.l.b16 %v2449
    %v2466 = vunpack.c.l.b16 %v2450
    %v2467 = vunpack.c.l.b16 %v2451
    %v2468 = vunpack.c.l.b16 %v2452
    %v2469 = vunpack.c.l.b16 %v2453
    %v2470 = vpack.c.b16 %v2463, %v2462
    %v2471 = vpack.c.b16 %v2465, %v2464
    %v2472 = vpack.c.b16 %v2467, %v2466
    %v2473 = vpack.c.b16 %v2469, %v2468
    %2478 = vmatprep.subr.bf16.mxu0 0
    %2479 = vmatpush1.bf16.msra.mxu0 0
    %2480 = vmatprep.subr.bf16.mxu0 0
    %2481 = vmatpush1.bf16.msra.mxu0 0
    %2482 = vmatprep.subr.bf16.mxu0 0
    %2483 = vmatpush1.bf16.msra.mxu0 0
    %2484 = vmatprep.subr.bf16.mxu0 0
    %2485 = vmatpush1.bf16.msra.mxu0 0
    %2486 = vmatprep.subr.bf16.mxu0 0
    %2487 = vmatpush1.bf16.msra.mxu0 %v2473
    %2488 = vmatprep.subr.bf16.mxu0 0
    %2489 = vmatpush1.bf16.msra.mxu0 %v2472
    %2490 = vmatprep.subr.bf16.mxu0 0
    %2491 = vmatpush1.bf16.msra.mxu0 %v2471
    %2492 = vmatprep.subr.bf16.mxu0 0
    %2493 = vmatpush1.bf16.msra.mxu0 %v2470
    %2494 = vmatprep.subr.bf16.mxu0 0
    %2495 = vmatpush2.bf16.msra.mxu0 0
    %2496 = vmatprep.subr.bf16.mxu0 0
    %2497 = vmatpush2.bf16.msra.mxu0 0
    %2498 = vmatprep.subr.bf16.mxu0 0
    %2499 = vmatpush2.bf16.msra.mxu0 0
    %2500 = vmatprep.subr.bf16.mxu0 0
    %2501 = vmatpush2.bf16.msra.mxu0 0
    %2502 = vmatprep.subr.bf16.mxu0 0
    %2503 = vmatpush2.bf16.msra.mxu0 0
    %2504 = vmatprep.subr.bf16.mxu0 0
    %2505 = vmatpush2.bf16.msra.mxu0 0
    %2506 = vmatprep.subr.bf16.mxu0 0
    %2507 = vmatpush2.bf16.msra.mxu0 0
    %2508 = vmatprep.subr.bf16.mxu0 0
    %2509 = vmatpush2.bf16.msra.mxu0 0
    %2510 = vmatprep.mubr.bf16.mxu0 0
    %2511 = vmatmul.mubr.bf16.gmra.mxu0 %v1801
    %v2512 = vpop.f32.mrf.mxu0
    %v2513 = vadd.f32 0.0, %v2512
    %v2514 = vpop.f32.mrf.mxu0
    %v2515 = vpop.f32.mrf.mxu0
    %v2516 = vadd.f32 0.0, %v2515
    %v2517 = vpop.f32.mrf.mxu0
    %2518 = vmatprep.mubr.bf16.mxu0 0
    %2519 = vmatmul.mubr.bf16.gmra.mxu0 %v1804
    %v2520 = vpop.f32.mrf.mxu0
    %v2521 = vadd.f32 0.0, %v2520
    %v2522 = vpop.f32.mrf.mxu0
    %v2523 = vpop.f32.mrf.mxu0
    %v2524 = vadd.f32 0.0, %v2523
    %v2525 = vpop.f32.mrf.mxu0
    %2526 = vmatprep.mubr.bf16.mxu0 0
    %2527 = vmatmul.mubr.bf16.gmra.mxu0 %v1807
    %v2528 = vpop.f32.mrf.mxu0
    %v2529 = vadd.f32 0.0, %v2528
    %v2530 = vpop.f32.mrf.mxu0
    %v2531 = vpop.f32.mrf.mxu0
    %v2532 = vpop.f32.mrf.mxu0
    %2533 = vdwg.mxu0
    %v2534 = vpack.c.bf16 %v2516, %v2513
    %v2535 = vpack.c.bf16 %v2524, %v2521
    %v2536 = vpack.c.bf16 %v2529, %v2529
    %v2538 = vsel %vm617, %v2350, 0
    %v2541 = vsel %vm617, %v2351, 0
    %v2544 = vsel %vm617, %v2352, 0
    %v2547 = vsel %vm617, %v2442, 0
    %v2550 = vsel %vm617, %v2443, 0
    %v2553 = vsel %vm617, %v2444, 0
    %2555 = vmatprep.subr.bf16.mxu0 0
    %2556 = vmatpush1.bf16.xpose.msra.mxu0 0
    %2557 = vmatprep.subr.bf16.mxu0 0
    %2558 = vmatpush1.bf16.xpose.msra.mxu0 0
    %2559 = vmatprep.subr.bf16.mxu0 0
    %2560 = vmatpush1.bf16.xpose.msra.mxu0 0
    %2561 = vmatprep.subr.bf16.mxu0 0
    %2562 = vmatpush1.bf16.xpose.msra.mxu0 0
    %2563 = vmatprep.subr.bf16.mxu0 0
    %2564 = vmatpush1.bf16.xpose.msra.mxu0 0
    %2565 = vmatprep.subr.bf16.mxu0 0
    %2566 = vmatpush1.bf16.xpose.msra.mxu0 %v2553
    %2567 = vmatprep.subr.bf16.mxu0 0
    %2568 = vmatpush1.bf16.xpose.msra.mxu0 %v2550
    %2569 = vmatprep.subr.bf16.mxu0 0
    %2570 = vmatpush1.bf16.xpose.msra.mxu0 %v2547
    %2571 = vmatprep.subr.bf16.mxu0 0
    %2572 = vmatpush2.bf16.xpose.msra.mxu0 0
    %2573 = vmatprep.subr.bf16.mxu0 0
    %2574 = vmatpush2.bf16.xpose.msra.mxu0 0
    %2575 = vmatprep.subr.bf16.mxu0 0
    %2576 = vmatpush2.bf16.xpose.msra.mxu0 0
    %2577 = vmatprep.subr.bf16.mxu0 0
    %2578 = vmatpush2.bf16.xpose.msra.mxu0 0
    %2579 = vmatprep.subr.bf16.mxu0 0
    %2580 = vmatpush2.bf16.xpose.msra.mxu0 0
    %2581 = vmatprep.subr.bf16.mxu0 0
    %2582 = vmatpush2.bf16.xpose.msra.mxu0 0
    %2583 = vmatprep.subr.bf16.mxu0 0
    %2584 = vmatpush2.bf16.xpose.msra.mxu0 0
    %2585 = vmatprep.subr.bf16.mxu0 0
    %2586 = vmatpush2.bf16.xpose.msra.mxu0 0
    %2587 = vmatprep.mubr.bf16.mxu0 0
    %2588 = vmatmul.mubr.bf16.gmra.mxu0 %v2538
    %v2589 = vpop.f32.mrf.mxu0
    %v2590 = vadd.f32 %v234, %v2589
    %v2591 = vpop.f32.mrf.mxu0
    %v2592 = vpop.f32.mrf.mxu0
    %v2593 = vadd.f32 %v235, %v2592
    %v2594 = vpop.f32.mrf.mxu0
    %2595 = vmatprep.mubr.bf16.mxu0 0
    %2596 = vmatmul.mubr.bf16.gmra.mxu0 %v2541
    %v2597 = vpop.f32.mrf.mxu0
    %v2598 = vadd.f32 %v236, %v2597
    %v2599 = vpop.f32.mrf.mxu0
    %v2600 = vpop.f32.mrf.mxu0
    %v2601 = vadd.f32 %v237, %v2600
    %v2602 = vpop.f32.mrf.mxu0
    %2603 = vmatprep.mubr.bf16.mxu0 0
    %2604 = vmatmul.mubr.bf16.gmra.mxu0 %v2544
    %v2605 = vpop.f32.mrf.mxu0
    %v2606 = vadd.f32 %v238, %v2605
    %v2607 = vpop.f32.mrf.mxu0
    %v2608 = vpop.f32.mrf.mxu0
    %v2609 = vpop.f32.mrf.mxu0
    %2610 = vdwg.mxu0
    %v2611 = vsel %vm692, %v2590, -inf
    %2612 = vmax.xlane.f32.xlu0 %v2611
    %v2613 = vpop.xlane.xlu0 %2612
    %v2614 = vsel %vm692, %v2593, -inf
    %2615 = vmax.xlane.f32.xlu0 %v2614
    %v2616 = vpop.xlane.xlu0 %2615
    %v2617 = vsel %vm692, %v2598, -inf
    %2618 = vmax.xlane.f32.xlu0 %v2617
    %v2619 = vpop.xlane.xlu0 %2618
    %v2620 = vsel %vm692, %v2601, -inf
    %2621 = vmax.xlane.f32.xlu0 %v2620
    %v2622 = vpop.xlane.xlu0 %2621
    %v2623 = vsel %vm705, %v2606, -inf
    %2624 = vmax.xlane.f32.xlu0 %v2623
    %v2625 = vpop.xlane.xlu0 %2624
    %v2626 = vsub.f32 %v2590, %v2613
    %v2627 = vsub.f32 %v2593, %v2616
    %v2628 = vsub.f32 %v2598, %v2619
    %v2629 = vsub.f32 %v2601, %v2622
    %v2630 = vsub.f32 %v2606, %v2625
    %v2631 = vmul.f32 %v2626, 1.442695
    %v2632 = vpow.pop %v2631
    %v2633 = vmul.f32 %v2627, 1.442695
    %v2634 = vpow.pop %v2633
    %v2635 = vmul.f32 %v2628, 1.442695
    %v2636 = vpow.pop %v2635
    %v2637 = vmul.f32 %v2629, 1.442695
    %v2638 = vpow.pop %v2637
    %v2639 = vmul.f32 %v2630, 1.442695
    %v2640 = vpow.pop %v2639
    %v2641 = vsel %vm692, %v2632, 0.0
    %2642 = vadd.xlane.f32.xlu0 %v2641
    %v2643 = vpop.xlane.xlu0 %2642
    %v2644 = vsel %vm692, %v2634, 0.0
    %2645 = vadd.xlane.f32.xlu0 %v2644
    %v2646 = vpop.xlane.xlu0 %2645
    %v2647 = vsel %vm692, %v2636, 0.0
    %2648 = vadd.xlane.f32.xlu0 %v2647
    %v2649 = vpop.xlane.xlu0 %2648
    %v2650 = vsel %vm692, %v2638, 0.0
    %2651 = vadd.xlane.f32.xlu0 %v2650
    %v2652 = vpop.xlane.xlu0 %2651
    %v2653 = vsel %vm705, %v2640, 0.0
    %2654 = vadd.xlane.f32.xlu0 %v2653
    %v2655 = vpop.xlane.xlu0 %2654
    %v2656 = vrcp.pop %v2643
    %v2657 = vrcp.pop %v2646
    %v2658 = vrcp.pop %v2649
    %v2659 = vrcp.pop %v2652
    %v2660 = vrcp.pop %v2655
    %v2661 = vmul.f32 %v2632, %v2656
    %v2662 = vmul.f32 %v2634, %v2657
    %v2663 = vmul.f32 %v2636, %v2658
    %v2664 = vmul.f32 %v2638, %v2659
    %v2665 = vmul.f32 %v2640, %v2660
    %v2666 = vpack.c.bf16 %v2662, %v2661
    %v2667 = vpack.c.bf16 %v2664, %v2663
    %v2668 = vpack.c.bf16 %v2665, %v2665
    %v2670 = vsel %vm692, %v2666, 0
    %v2673 = vsel %vm692, %v2667, 0
    %v2676 = vsel %vm692, %v2668, 0
    %v2679 = vsel %vm761, %v2536, 0
    %2681 = vmatprep.subr.bf16.mxu0 0
    %2682 = vmatpush1.bf16.msra.mxu0 0
    %2683 = vmatprep.subr.bf16.mxu0 0
    %2684 = vmatpush1.bf16.msra.mxu0 0
    %2685 = vmatprep.subr.bf16.mxu0 0
    %2686 = vmatpush1.bf16.msra.mxu0 0
    %2687 = vmatprep.subr.bf16.mxu0 0
    %2688 = vmatpush1.bf16.msra.mxu0 0
    %2689 = vmatprep.subr.bf16.mxu0 0
    %2690 = vmatpush1.bf16.msra.mxu0 0
    %2691 = vmatprep.subr.bf16.mxu0 0
    %2692 = vmatpush1.bf16.msra.mxu0 %v2679
    %2693 = vmatprep.subr.bf16.mxu0 0
    %2694 = vmatpush1.bf16.msra.mxu0 %v2535
    %2695 = vmatprep.subr.bf16.mxu0 0
    %2696 = vmatpush1.bf16.msra.mxu0 %v2534
    %2697 = vmatprep.subr.bf16.mxu0 0
    %2698 = vmatpush2.bf16.msra.mxu0 0
    %2699 = vmatprep.subr.bf16.mxu0 0
    %2700 = vmatpush2.bf16.msra.mxu0 0
    %2701 = vmatprep.subr.bf16.mxu0 0
    %2702 = vmatpush2.bf16.msra.mxu0 0
    %2703 = vmatprep.subr.bf16.mxu0 0
    %2704 = vmatpush2.bf16.msra.mxu0 0
    %2705 = vmatprep.subr.bf16.mxu0 0
    %2706 = vmatpush2.bf16.msra.mxu0 0
    %2707 = vmatprep.subr.bf16.mxu0 0
    %2708 = vmatpush2.bf16.msra.mxu0 0
    %2709 = vmatprep.subr.bf16.mxu0 0
    %2710 = vmatpush2.bf16.msra.mxu0 0
    %2711 = vmatprep.subr.bf16.mxu0 0
    %2712 = vmatpush2.bf16.msra.mxu0 0
    %2713 = vmatprep.mubr.bf16.mxu0 0
    %2714 = vmatmul.mubr.bf16.gmra.mxu0 %v2670
    %v2715 = vpop.f32.mrf.mxu0
    %v2716 = vadd.f32 0.0, %v2715
    %v2717 = vpop.f32.mrf.mxu0
    %v2718 = vpop.f32.mrf.mxu0
    %v2719 = vadd.f32 0.0, %v2718
    %v2720 = vpop.f32.mrf.mxu0
    %2721 = vmatprep.mubr.bf16.mxu0 0
    %2722 = vmatmul.mubr.bf16.gmra.mxu0 %v2673
    %v2723 = vpop.f32.mrf.mxu0
    %v2724 = vadd.f32 0.0, %v2723
    %v2725 = vpop.f32.mrf.mxu0
    %v2726 = vpop.f32.mrf.mxu0
    %v2727 = vadd.f32 0.0, %v2726
    %v2728 = vpop.f32.mrf.mxu0
    %2729 = vmatprep.mubr.bf16.mxu0 0
    %2730 = vmatmul.mubr.bf16.gmra.mxu0 %v2676
    %v2731 = vpop.f32.mrf.mxu0
    %v2732 = vadd.f32 0.0, %v2731
    %v2733 = vpop.f32.mrf.mxu0
    %v2734 = vpop.f32.mrf.mxu0
    %v2735 = vpop.f32.mrf.mxu0
    %2736 = vdwg.mxu0
    %v2737 = vadd.f32 %v2256, %v2716
    %v2738 = vadd.f32 %v2257, %v2719
    %v2739 = vadd.f32 %v2258, %v2724
    %v2740 = vadd.f32 %v2259, %v2727
    %v2741 = vadd.f32 %v2260, %v2732
    %v2742 = vadd.f32 %v1670, %v2737
    %v2743 = vadd.f32 %v1671, %v2738
    %v2744 = vadd.f32 %v1672, %v2739
    %v2745 = vadd.f32 %v1673, %v2740
    %v2746 = vadd.f32 %v1674, %v2741
    %v2747 = vsel %vm241, %v2742, 0.0
    %2748 = vadd.xlane.f32.xlu0 %v2747
    %v2749 = vpop.xlane.xlu0 %2748
    %v2750 = vsel %vm241, %v2743, 0.0
    %2751 = vadd.xlane.f32.xlu0 %v2750
    %v2752 = vpop.xlane.xlu0 %2751
    %v2753 = vsel %vm241, %v2744, 0.0
    %2754 = vadd.xlane.f32.xlu0 %v2753
    %v2755 = vpop.xlane.xlu0 %2754
    %v2756 = vsel %vm241, %v2745, 0.0
    %2757 = vadd.xlane.f32.xlu0 %v2756
    %v2758 = vpop.xlane.xlu0 %2757
    %v2759 = vsel %vm254, %v2746, 0.0
    %2760 = vadd.xlane.f32.xlu0 %v2759
    %v2761 = vpop.xlane.xlu0 %2760
    %v2762 = vmul.f32 %v2749, %v258
    %v2763 = vmul.f32 %v2752, %v258
    %v2764 = vmul.f32 %v2755, %v258
    %v2765 = vmul.f32 %v2758, %v258
    %v2766 = vmul.f32 %v2761, %v258
    %v2767 = vsub.f32 %v2742, %v2762
    %v2768 = vsub.f32 %v2743, %v2763
    %v2769 = vsub.f32 %v2744, %v2764
    %v2770 = vsub.f32 %v2745, %v2765
    %v2771 = vsub.f32 %v2746, %v2766
    %v2772 = vmul.f32 %v2767, %v2767
    %v2773 = vmul.f32 %v2768, %v2768
    %v2774 = vmul.f32 %v2769, %v2769
    %v2775 = vmul.f32 %v2770, %v2770
    %v2776 = vmul.f32 %v2771, %v2771
    %v2777 = vsel %vm241, %v2772, 0.0
    %2778 = vadd.xlane.f32.xlu0 %v2777
    %v2779 = vpop.xlane.xlu0 %2778
    %v2780 = vsel %vm241, %v2773, 0.0
    %2781 = vadd.xlane.f32.xlu0 %v2780
    %v2782 = vpop.xlane.xlu0 %2781
    %v2783 = vsel %vm241, %v2774, 0.0
    %2784 = vadd.xlane.f32.xlu0 %v2783
    %v2785 = vpop.xlane.xlu0 %2784
    %v2786 = vsel %vm241, %v2775, 0.0
    %2787 = vadd.xlane.f32.xlu0 %v2786
    %v2788 = vpop.xlane.xlu0 %2787
    %v2789 = vsel %vm254, %v2776, 0.0
    %2790 = vadd.xlane.f32.xlu0 %v2789
    %v2791 = vpop.xlane.xlu0 %2790
    %v2792 = vmul.f32 %v2779, %v258
    %v2793 = vmul.f32 %v2782, %v258
    %v2794 = vmul.f32 %v2785, %v258
    %v2795 = vmul.f32 %v2788, %v258
    %v2796 = vmul.f32 %v2791, %v258
    %v2797 = vadd.f32 %v2792, 1e-05
    %v2798 = vadd.f32 %v2793, 1e-05
    %v2799 = vadd.f32 %v2794, 1e-05
    %v2800 = vadd.f32 %v2795, 1e-05
    %v2801 = vadd.f32 %v2796, 1e-05
    %v2802 = vrsqrt.pop %v2797
    %v2803 = vrsqrt.pop %v2798
    %v2804 = vrsqrt.pop %v2799
    %v2805 = vrsqrt.pop %v2800
    %v2806 = vrsqrt.pop %v2801
    %v2807 = vmul.f32 %v2767, %v2802
    %v2808 = vmul.f32 %v2768, %v2803
    %v2809 = vmul.f32 %v2769, %v2804
    %v2810 = vmul.f32 %v2770, %v2805
    %v2811 = vmul.f32 %v2771, %v2806
    %v2812 = vpack.c.bf16 %v2808, %v2807
    %v2813 = vpack.c.bf16 %v2810, %v2809
    %v2814 = vpack.c.bf16 %v2811, %v2811
    %v2815 = vld [vmem:[%s21] sm:$0xf]
    %v2816 = vld [vmem:[%s21 + $0x4] sm:$0xf]
    %v2817 = vld [vmem:[%s21 + $0x8] sm:$0xf]
    %v2818 = vld [vmem:[%s21 + $0xc] sm:$0xf]
    %v2819 = vld [vmem:[%s21 + $0x10] sm:$0xf]
    %v2820 = vld [vmem:[%s21 + $0x14] sm:$0xf]
    %v2821 = vld [vmem:[%s21 + $0x18] sm:$0xf]
    %v2822 = vld [vmem:[%s21 + $0x1c] sm:$0xf]
    %v2823 = vld [vmem:[%s22] sm:$0x1]
    %v2825 = vlaneseq
    %v2826 = vshrl.u32 %v2825, 7
    %v2827 = vsub.s32 0, %v2826
    %v2828 = vrot.slane %v2823, %v2827
    %v2838 = vunpack.c.l.b16 %v2815
    %v2839 = vunpack.c.l.b16 %v2816
    %v2840 = vunpack.c.l.b16 %v2817
    %v2841 = vunpack.c.l.b16 %v2818
    %v2842 = vunpack.c.l.b16 %v2819
    %v2843 = vunpack.c.l.b16 %v2820
    %v2844 = vunpack.c.l.b16 %v2821
    %v2845 = vunpack.c.l.b16 %v2822
    %v2846 = vpack.c.b16 %v2839, %v2838
    %v2847 = vpack.c.b16 %v2841, %v2840
    %v2848 = vpack.c.b16 %v2843, %v2842
    %v2849 = vpack.c.b16 %v2845, %v2844
    %v2855 = vsel %vm241, %v2812, 0
    %v2858 = vsel %vm241, %v2813, 0
    %v2861 = vsel %vm241, %v2814, 0
    %2863 = vmatprep.subr.bf16.mxu0 0
    %2864 = vmatpush1.bf16.msra.mxu0 0
    %2865 = vmatprep.subr.bf16.mxu0 0
    %2866 = vmatpush1.bf16.msra.mxu0 0
    %2867 = vmatprep.subr.bf16.mxu0 0
    %2868 = vmatpush1.bf16.msra.mxu0 0
    %2869 = vmatprep.subr.bf16.mxu0 0
    %2870 = vmatpush1.bf16.msra.mxu0 0
    %2871 = vmatprep.subr.bf16.mxu0 0
    %2872 = vmatpush1.bf16.msra.mxu0 %v2849
    %2873 = vmatprep.subr.bf16.mxu0 0
    %2874 = vmatpush1.bf16.msra.mxu0 %v2848
    %2875 = vmatprep.subr.bf16.mxu0 0
    %2876 = vmatpush1.bf16.msra.mxu0 %v2847
    %2877 = vmatprep.subr.bf16.mxu0 0
    %2878 = vmatpush1.bf16.msra.mxu0 %v2846
    %2879 = vmatprep.subr.bf16.mxu0 0
    %2880 = vmatpush2.bf16.msra.mxu0 0
    %2881 = vmatprep.subr.bf16.mxu0 0
    %2882 = vmatpush2.bf16.msra.mxu0 0
    %2883 = vmatprep.subr.bf16.mxu0 0
    %2884 = vmatpush2.bf16.msra.mxu0 0
    %2885 = vmatprep.subr.bf16.mxu0 0
    %2886 = vmatpush2.bf16.msra.mxu0 0
    %2887 = vmatprep.subr.bf16.mxu0 0
    %2888 = vmatpush2.bf16.msra.mxu0 0
    %2889 = vmatprep.subr.bf16.mxu0 0
    %2890 = vmatpush2.bf16.msra.mxu0 0
    %2891 = vmatprep.subr.bf16.mxu0 0
    %2892 = vmatpush2.bf16.msra.mxu0 0
    %2893 = vmatprep.subr.bf16.mxu0 0
    %2894 = vmatpush2.bf16.msra.mxu0 0
    %2895 = vmatprep.mubr.bf16.mxu0 0
    %2896 = vmatmul.mubr.bf16.gmra.mxu0 %v2855
    %v2897 = vpop.f32.mrf.mxu0
    %v2898 = vadd.f32 %v2828, %v2897
    %v2899 = vpop.f32.mrf.mxu0
    %v2900 = vpop.f32.mrf.mxu0
    %v2901 = vadd.f32 %v2828, %v2900
    %v2902 = vpop.f32.mrf.mxu0
    %2903 = vmatprep.mubr.bf16.mxu0 0
    %2904 = vmatmul.mubr.bf16.gmra.mxu0 %v2858
    %v2905 = vpop.f32.mrf.mxu0
    %v2906 = vadd.f32 %v2828, %v2905
    %v2907 = vpop.f32.mrf.mxu0
    %v2908 = vpop.f32.mrf.mxu0
    %v2909 = vadd.f32 %v2828, %v2908
    %v2910 = vpop.f32.mrf.mxu0
    %2911 = vmatprep.mubr.bf16.mxu0 0
    %2912 = vmatmul.mubr.bf16.gmra.mxu0 %v2861
    %v2913 = vpop.f32.mrf.mxu0
    %v2914 = vadd.f32 %v2828, %v2913
    %v2915 = vpop.f32.mrf.mxu0
    %v2916 = vpop.f32.mrf.mxu0
    %v2917 = vpop.f32.mrf.mxu0
    %2918 = vdwg.mxu0
    %v2919 = vmul.f32 %v2898, %v2898
    %v2920 = vmul.f32 %v2901, %v2901
    %v2921 = vmul.f32 %v2906, %v2906
    %v2922 = vmul.f32 %v2909, %v2909
    %v2923 = vmul.f32 %v2914, %v2914
    %v2924 = vmul.f32 %v2898, %v2919
    %v2925 = vmul.f32 %v2901, %v2920
    %v2926 = vmul.f32 %v2906, %v2921
    %v2927 = vmul.f32 %v2909, %v2922
    %v2928 = vmul.f32 %v2914, %v2923
    %v2929 = vmul.f32 %v2924, 0.044715
    %v2930 = vmul.f32 %v2925, 0.044715
    %v2931 = vmul.f32 %v2926, 0.044715
    %v2932 = vmul.f32 %v2927, 0.044715
    %v2933 = vmul.f32 %v2928, 0.044715
    %v2934 = vadd.f32 %v2898, %v2929
    %v2935 = vadd.f32 %v2901, %v2930
    %v2936 = vadd.f32 %v2906, %v2931
    %v2937 = vadd.f32 %v2909, %v2932
    %v2938 = vadd.f32 %v2914, %v2933
    %v2939 = vmul.f32 %v2934, 0.7978846
    %v2940 = vmul.f32 %v2935, 0.7978846
    %v2941 = vmul.f32 %v2936, 0.7978846
    %v2942 = vmul.f32 %v2937, 0.7978846
    %v2943 = vmul.f32 %v2938, 0.7978846
    %v2944 = vtanh.pop %v2939
    %v2945 = vtanh.pop %v2940
    %v2946 = vtanh.pop %v2941
    %v2947 = vtanh.pop %v2942
    %v2948 = vtanh.pop %v2943
    %v2949 = vadd.f32 %v2944, 1.0
    %v2950 = vadd.f32 %v2945, 1.0
    %v2951 = vadd.f32 %v2946, 1.0
    %v2952 = vadd.f32 %v2947, 1.0
    %v2953 = vadd.f32 %v2948, 1.0
    %v2954 = vmul.f32 %v2949, 0.5
    %v2955 = vmul.f32 %v2950, 0.5
    %v2956 = vmul.f32 %v2951, 0.5
    %v2957 = vmul.f32 %v2952, 0.5
    %v2958 = vmul.f32 %v2953, 0.5
    %v2959 = vmul.f32 %v2898, %v2954
    %v2960 = vmul.f32 %v2901, %v2955
    %v2961 = vmul.f32 %v2906, %v2956
    %v2962 = vmul.f32 %v2909, %v2957
    %v2963 = vmul.f32 %v2914, %v2958
    %v2964 = vpack.c.bf16 %v2960, %v2959
    %v2965 = vpack.c.bf16 %v2962, %v2961
    %v2966 = vpack.c.bf16 %v2963, %v2963
    %v2967 = vld [vmem:[%s23] sm:$0xf]
    %v2968 = vld [vmem:[%s23 + $0x4] sm:$0xf]
    %v2969 = vld [vmem:[%s23 + $0x8] sm:$0xf]
    %v2970 = vld [vmem:[%s23 + $0xc] sm:$0xf]
    %v2971 = vld [vmem:[%s23 + $0x10] sm:$0xf]
    %v2972 = vld [vmem:[%s23 + $0x14] sm:$0xf]
    %v2973 = vld [vmem:[%s23 + $0x18] sm:$0xf]
    %v2974 = vld [vmem:[%s23 + $0x1c] sm:$0xf]
    %v2975 = vld [vmem:[%s23 + $0x20] sm:$0xf]
    %v2976 = vld [vmem:[%s23 + $0x24] sm:$0xf]
    %v2977 = vld [vmem:[%s23 + $0x28] sm:$0xf]
    %v2978 = vld [vmem:[%s23 + $0x2c] sm:$0xf]
    %v2979 = vld [vmem:[%s23 + $0x30] sm:$0xf]
    %v2980 = vld [vmem:[%s23 + $0x34] sm:$0xf]
    %v2981 = vld [vmem:[%s23 + $0x38] sm:$0xf]
    %v2982 = vld [vmem:[%s23 + $0x3c] sm:$0xf]
    %v2999 = vunpack.c.l.b16 %v2967
    %v3000 = vunpack.c.l.b16 %v2968
    %v3001 = vunpack.c.l.b16 %v2969
    %v3002 = vunpack.c.l.b16 %v2970
    %v3003 = vunpack.c.l.b16 %v2971
    %v3004 = vunpack.c.l.b16 %v2972
    %v3005 = vunpack.c.l.b16 %v2973
    %v3006 = vunpack.c.l.b16 %v2974
    %v3007 = vunpack.c.l.b16 %v2975
    %v3008 = vunpack.c.l.b16 %v2976
    %v3009 = vunpack.c.l.b16 %v2977
    %v3010 = vunpack.c.l.b16 %v2978
    %v3011 = vunpack.c.l.b16 %v2979
    %v3012 = vunpack.c.l.b16 %v2980
    %v3013 = vunpack.c.l.b16 %v2981
    %v3014 = vunpack.c.l.b16 %v2982
    %v3015 = vpack.c.b16 %v3000, %v2999
    %v3016 = vpack.c.b16 %v3002, %v3001
    %v3017 = vpack.c.b16 %v3004, %v3003
    %v3018 = vpack.c.b16 %v3006, %v3005
    %v3019 = vpack.c.b16 %v3008, %v3007
    %v3020 = vpack.c.b16 %v3010, %v3009
    %v3021 = vpack.c.b16 %v3012, %v3011
    %v3022 = vpack.c.b16 %v3014, %v3013
    %3031 = vmatprep.subr.bf16.mxu0 0
    %3032 = vmatpush1.bf16.msra.mxu0 %v3022
    %3033 = vmatprep.subr.bf16.mxu0 0
    %3034 = vmatpush1.bf16.msra.mxu0 %v3021
    %3035 = vmatprep.subr.bf16.mxu0 0
    %3036 = vmatpush1.bf16.msra.mxu0 %v3020
    %3037 = vmatprep.subr.bf16.mxu0 0
    %3038 = vmatpush1.bf16.msra.mxu0 %v3019
    %3039 = vmatprep.subr.bf16.mxu0 0
    %3040 = vmatpush1.bf16.msra.mxu0 %v3018
    %3041 = vmatprep.subr.bf16.mxu0 0
    %3042 = vmatpush1.bf16.msra.mxu0 %v3017
    %3043 = vmatprep.subr.bf16.mxu0 0
    %3044 = vmatpush1.bf16.msra.mxu0 %v3016
    %3045 = vmatprep.subr.bf16.mxu0 0
    %3046 = vmatpush1.bf16.msra.mxu0 %v3015
    %3047 = vmatprep.subr.bf16.mxu0 0
    %3048 = vmatpush2.bf16.msra.mxu0 0
    %3049 = vmatprep.subr.bf16.mxu0 0
    %3050 = vmatpush2.bf16.msra.mxu0 0
    %3051 = vmatprep.subr.bf16.mxu0 0
    %3052 = vmatpush2.bf16.msra.mxu0 0
    %3053 = vmatprep.subr.bf16.mxu0 0
    %3054 = vmatpush2.bf16.msra.mxu0 0
    %3055 = vmatprep.subr.bf16.mxu0 0
    %3056 = vmatpush2.bf16.msra.mxu0 0
    %3057 = vmatprep.subr.bf16.mxu0 0
    %3058 = vmatpush2.bf16.msra.mxu0 0
    %3059 = vmatprep.subr.bf16.mxu0 0
    %3060 = vmatpush2.bf16.msra.mxu0 0
    %3061 = vmatprep.subr.bf16.mxu0 0
    %3062 = vmatpush2.bf16.msra.mxu0 0
    %3063 = vmatprep.mubr.bf16.mxu0 0
    %3064 = vmatmul.mubr.bf16.gmra.mxu0 %v2964
    %v3065 = vpop.f32.mrf.mxu0
    %v3066 = vadd.f32 0.0, %v3065
    %v3067 = vpop.f32.mrf.mxu0
    %v3068 = vpop.f32.mrf.mxu0
    %v3069 = vadd.f32 0.0, %v3068
    %v3070 = vpop.f32.mrf.mxu0
    %3071 = vmatprep.mubr.bf16.mxu0 0
    %3072 = vmatmul.mubr.bf16.gmra.mxu0 %v2965
    %v3073 = vpop.f32.mrf.mxu0
    %v3074 = vadd.f32 0.0, %v3073
    %v3075 = vpop.f32.mrf.mxu0
    %v3076 = vpop.f32.mrf.mxu0
    %v3077 = vadd.f32 0.0, %v3076
    %v3078 = vpop.f32.mrf.mxu0
    %3079 = vmatprep.mubr.bf16.mxu0 0
    %3080 = vmatmul.mubr.bf16.gmra.mxu0 %v2966
    %v3081 = vpop.f32.mrf.mxu0
    %v3082 = vadd.f32 0.0, %v3081
    %v3083 = vpop.f32.mrf.mxu0
    %v3084 = vpop.f32.mrf.mxu0
    %v3085 = vpop.f32.mrf.mxu0
    %3086 = vdwg.mxu0
    %v3087 = vadd.f32 %v2742, %v3066
    %v3088 = vadd.f32 %v2743, %v3069
    %v3089 = vadd.f32 %v2744, %v3074
    %v3090 = vadd.f32 %v2745, %v3077
    %v3091 = vadd.f32 %v2746, %v3082
    %v3092 = vld [vmem:[%s24] sm:$0x1]
    %v3094 = vlaneseq
    %v3095 = vshrl.u32 %v3094, 7
    %v3096 = vsub.s32 0, %v3095
    %v3097 = vrot.slane %v3092, %v3096
    %v3099 = vadd.f32 %v3087, %v3097
    %v3100 = vadd.f32 %v3088, %v3097
    %v3101 = vadd.f32 %v3089, %v3097
    %v3102 = vadd.f32 %v3090, %v3097
    %v3103 = vadd.f32 %v3091, %v3097
    %v3104 = vsel %vm241, %v3099, 0.0
    %3105 = vadd.xlane.f32.xlu0 %v3104
    %v3106 = vpop.xlane.xlu0 %3105
    %v3107 = vsel %vm241, %v3100, 0.0
    %3108 = vadd.xlane.f32.xlu0 %v3107
    %v3109 = vpop.xlane.xlu0 %3108
    %v3110 = vsel %vm241, %v3101, 0.0
    %3111 = vadd.xlane.f32.xlu0 %v3110
    %v3112 = vpop.xlane.xlu0 %3111
    %v3113 = vsel %vm241, %v3102, 0.0
    %3114 = vadd.xlane.f32.xlu0 %v3113
    %v3115 = vpop.xlane.xlu0 %3114
    %v3116 = vsel %vm254, %v3103, 0.0
    %3117 = vadd.xlane.f32.xlu0 %v3116
    %v3118 = vpop.xlane.xlu0 %3117
    %v3119 = vmul.f32 %v3106, %v258
    %v3120 = vmul.f32 %v3109, %v258
    %v3121 = vmul.f32 %v3112, %v258
    %v3122 = vmul.f32 %v3115, %v258
    %v3123 = vmul.f32 %v3118, %v258
    %v3124 = vsub.f32 %v3099, %v3119
    %v3125 = vsub.f32 %v3100, %v3120
    %v3126 = vsub.f32 %v3101, %v3121
    %v3127 = vsub.f32 %v3102, %v3122
    %v3128 = vsub.f32 %v3103, %v3123
    %v3129 = vmul.f32 %v3124, %v3124
    %v3130 = vmul.f32 %v3125, %v3125
    %v3131 = vmul.f32 %v3126, %v3126
    %v3132 = vmul.f32 %v3127, %v3127
    %v3133 = vmul.f32 %v3128, %v3128
    %v3134 = vsel %vm241, %v3129, 0.0
    %3135 = vadd.xlane.f32.xlu0 %v3134
    %v3136 = vpop.xlane.xlu0 %3135
    %v3137 = vsel %vm241, %v3130, 0.0
    %3138 = vadd.xlane.f32.xlu0 %v3137
    %v3139 = vpop.xlane.xlu0 %3138
    %v3140 = vsel %vm241, %v3131, 0.0
    %3141 = vadd.xlane.f32.xlu0 %v3140
    %v3142 = vpop.xlane.xlu0 %3141
    %v3143 = vsel %vm241, %v3132, 0.0
    %3144 = vadd.xlane.f32.xlu0 %v3143
    %v3145 = vpop.xlane.xlu0 %3144
    %v3146 = vsel %vm254, %v3133, 0.0
    %3147 = vadd.xlane.f32.xlu0 %v3146
    %v3148 = vpop.xlane.xlu0 %3147
    %v3149 = vmul.f32 %v3136, %v258
    %v3150 = vmul.f32 %v3139, %v258
    %v3151 = vmul.f32 %v3142, %v258
    %v3152 = vmul.f32 %v3145, %v258
    %v3153 = vmul.f32 %v3148, %v258
    %v3154 = vadd.f32 %v3149, 1e-05
    %v3155 = vadd.f32 %v3150, 1e-05
    %v3156 = vadd.f32 %v3151, 1e-05
    %v3157 = vadd.f32 %v3152, 1e-05
    %v3158 = vadd.f32 %v3153, 1e-05
    %v3159 = vrsqrt.pop %v3154
    %v3160 = vrsqrt.pop %v3155
    %v3161 = vrsqrt.pop %v3156
    %v3162 = vrsqrt.pop %v3157
    %v3163 = vrsqrt.pop %v3158
    %v3164 = vmul.f32 %v3124, %v3159
    %v3165 = vmul.f32 %v3125, %v3160
    %v3166 = vmul.f32 %v3126, %v3161
    %v3167 = vmul.f32 %v3127, %v3162
    %v3168 = vmul.f32 %v3128, %v3163
    %v3169 = vpack.c.bf16 %v3165, %v3164
    %v3170 = vpack.c.bf16 %v3167, %v3166
    %v3171 = vpack.c.bf16 %v3168, %v3168
    %v3172 = vld [vmem:[%s4] sm:$0x1]
    %v3174 = vsel %vm692, %v3172, 0
    %v3177 = vsel %vm761, %v3171, 0
    %3179 = vmatprep.subr.bf16.mxu0 0
    %3180 = vmatpush1.bf16.msra.mxu0 0
    %3181 = vmatprep.subr.bf16.mxu0 0
    %3182 = vmatpush1.bf16.msra.mxu0 0
    %3183 = vmatprep.subr.bf16.mxu0 0
    %3184 = vmatpush1.bf16.msra.mxu0 0
    %3185 = vmatprep.subr.bf16.mxu0 0
    %3186 = vmatpush1.bf16.msra.mxu0 0
    %3187 = vmatprep.subr.bf16.mxu0 0
    %3188 = vmatpush1.bf16.msra.mxu0 0
    %3189 = vmatprep.subr.bf16.mxu0 0
    %3190 = vmatpush1.bf16.msra.mxu0 %v3177
    %3191 = vmatprep.subr.bf16.mxu0 0
    %3192 = vmatpush1.bf16.msra.mxu0 %v3170
    %3193 = vmatprep.subr.bf16.mxu0 0
    %3194 = vmatpush1.bf16.msra.mxu0 %v3169
    %3195 = vmatprep.subr.bf16.mxu0 0
    %3196 = vmatpush2.bf16.msra.mxu0 0
    %3197 = vmatprep.subr.bf16.mxu0 0
    %3198 = vmatpush2.bf16.msra.mxu0 0
    %3199 = vmatprep.subr.bf16.mxu0 0
    %3200 = vmatpush2.bf16.msra.mxu0 0
    %3201 = vmatprep.subr.bf16.mxu0 0
    %3202 = vmatpush2.bf16.msra.mxu0 0
    %3203 = vmatprep.subr.bf16.mxu0 0
    %3204 = vmatpush2.bf16.msra.mxu0 0
    %3205 = vmatprep.subr.bf16.mxu0 0
    %3206 = vmatpush2.bf16.msra.mxu0 0
    %3207 = vmatprep.subr.bf16.mxu0 0
    %3208 = vmatpush2.bf16.msra.mxu0 0
    %3209 = vmatprep.subr.bf16.mxu0 0
    %3210 = vmatpush2.bf16.msra.mxu0 0
    %3211 = vmatprep.mubr.bf16.mxu0 0
    %3212 = vmatmul.mubr.bf16.gmra.mxu0 %v3174
    %v3213 = vpop.f32.mrf.mxu0
    %v3214 = vadd.f32 0.0, %v3213
    %v3215 = vpop.f32.mrf.mxu0
    %v3216 = vpop.f32.mrf.mxu0
    %v3217 = vpop.f32.mrf.mxu0
    %3218 = vdwg.mxu0
    %v3219 = vpack.c.bf16 %v3214, %v3214
    %v3220 = vld [vmem:[%s25] sm:$0xf]
    %v3221 = vld [vmem:[%s25 + $0x4] sm:$0xf]
    %v3222 = vld [vmem:[%s25 + $0x8] sm:$0xf]
    %v3223 = vld [vmem:[%s25 + $0xc] sm:$0xf]
    %v3224 = vld [vmem:[%s25 + $0x10] sm:$0xf]
    %v3225 = vld [vmem:[%s25 + $0x14] sm:$0xf]
    %v3226 = vld [vmem:[%s25 + $0x18] sm:$0xf]
    %v3227 = vld [vmem:[%s25 + $0x1c] sm:$0xf]
    %v3228 = vld [vmem:[%s26] sm:$0x1]
    %v3230 = vlaneseq
    %v3231 = vshrl.u32 %v3230, 7
    %v3232 = vsub.s32 0, %v3231
    %v3233 = vrot.slane %v3228, %v3232
    %v3243 = vunpack.c.l.b16 %v3220
    %v3244 = vunpack.c.l.b16 %v3221
    %v3245 = vunpack.c.l.b16 %v3222
    %v3246 = vunpack.c.l.b16 %v3223
    %v3247 = vunpack.c.l.b16 %v3224
    %v3248 = vunpack.c.l.b16 %v3225
    %v3249 = vunpack.c.l.b16 %v3226
    %v3250 = vunpack.c.l.b16 %v3227
    %v3251 = vpack.c.b16 %v3244, %v3243
    %v3252 = vpack.c.b16 %v3246, %v3245
    %v3253 = vpack.c.b16 %v3248, %v3247
    %v3254 = vpack.c.b16 %v3250, %v3249
    %v3260 = vsel %vm241, %v3219, 0
    %3262 = vmatprep.subr.bf16.mxu0 0
    %3263 = vmatpush1.bf16.msra.mxu0 0
    %3264 = vmatprep.subr.bf16.mxu0 0
    %3265 = vmatpush1.bf16.msra.mxu0 0
    %3266 = vmatprep.subr.bf16.mxu0 0
    %3267 = vmatpush1.bf16.msra.mxu0 0
    %3268 = vmatprep.subr.bf16.mxu0 0
    %3269 = vmatpush1.bf16.msra.mxu0 0
    %3270 = vmatprep.subr.bf16.mxu0 0
    %3271 = vmatpush1.bf16.msra.mxu0 %v3254
    %3272 = vmatprep.subr.bf16.mxu0 0
    %3273 = vmatpush1.bf16.msra.mxu0 %v3253
    %3274 = vmatprep.subr.bf16.mxu0 0
    %3275 = vmatpush1.bf16.msra.mxu0 %v3252
    %3276 = vmatprep.subr.bf16.mxu0 0
    %3277 = vmatpush1.bf16.msra.mxu0 %v3251
    %3278 = vmatprep.subr.bf16.mxu0 0
    %3279 = vmatpush2.bf16.msra.mxu0 0
    %3280 = vmatprep.subr.bf16.mxu0 0
    %3281 = vmatpush2.bf16.msra.mxu0 0
    %3282 = vmatprep.subr.bf16.mxu0 0
    %3283 = vmatpush2.bf16.msra.mxu0 0
    %3284 = vmatprep.subr.bf16.mxu0 0
    %3285 = vmatpush2.bf16.msra.mxu0 0
    %3286 = vmatprep.subr.bf16.mxu0 0
    %3287 = vmatpush2.bf16.msra.mxu0 0
    %3288 = vmatprep.subr.bf16.mxu0 0
    %3289 = vmatpush2.bf16.msra.mxu0 0
    %3290 = vmatprep.subr.bf16.mxu0 0
    %3291 = vmatpush2.bf16.msra.mxu0 0
    %3292 = vmatprep.subr.bf16.mxu0 0
    %3293 = vmatpush2.bf16.msra.mxu0 0
    %3294 = vmatprep.mubr.bf16.mxu0 0
    %3295 = vmatmul.mubr.bf16.gmra.mxu0 %v3260
    %v3296 = vpop.f32.mrf.mxu0
    %v3297 = vadd.f32 %v3233, %v3296
    %v3298 = vpop.f32.mrf.mxu0
    %v3299 = vpop.f32.mrf.mxu0
    %v3300 = vpop.f32.mrf.mxu0
    %3301 = vdwg.mxu0
    %3302 = vst [vmem:[#allocation2] sm:$0x3] %v3297
    // Predicated region
    $region110: #{vit_forward.1} parent=1 // pred_check
      _
    $region111: #{vit_forward.1} parent=1 // pred_check_branch
      %3304 = sbr.rel (0) target = $region113
    $region112: #{vit_forward.1} parent=1 // pred_region
      %s3306 = ssub.s32 32, 32
      %3307 = vsyncadd [#allocation3], %s3306
      %s3309 = sshll.u32 [#allocation2], 4
      %s3310 = int_to_ptr.vmem [resolvable:$true] %s3309
      %3312 = dma.vmem_to_hbm [thread:$0]  %s3310, 32, %s27, [#allocation3]
    $region113: #{vit_forward.1} parent=1 // pred_fallthru
      _
    // Predicated region
    $region114: #{vit_forward.1} parent=1 // pred_check
      _
    $region115: #{vit_forward.1} parent=1 // pred_check_branch
      %3314 = sbr.rel (0) target = $region117
    $region116: #{vit_forward.1} parent=1 // pred_region
      %3315 = dma.done [#allocation3], 32
    $region117: #{vit_forward.1} parent=1 // pred_fallthru
      _
    %3316 = vsyncpa [#allocation3], 1

</llo_original>
